<compile_context>
chip_gen: v7x
topology: tpu7x:2x2x1
jax: 0.10.0
libtpu: 0.0.40
codegen_flags: <defaults>
</compile_context>

<pallas_src>
import jax
import jax.numpy as jnp
from jax.experimental import pallas as pl
from jax.experimental.pallas import tpu as pltpu


def _round_up(a, b):
    return ((a + b - 1) // b) * b


def _moe_kernel(x_ref, gates_ref, w13_ref, w2_ref, o_ref):
    """Grid = (token_tiles,).  Expert loop statically unrolled; weights VMEM-resident.

    x_ref     : (tn, dim)     bf16
    gates_ref : (tn, E)       f32
    w13_ref   : (E, dim, 2H)  bf16
    w2_ref    : (E, H, dim)   bf16
    o_ref     : (tn, dim)     f32
    """
    num_experts = w13_ref.shape[0]
    hidden = w2_ref.shape[1]

    x = x_ref[...]                      # (tn, dim) bf16
    gates = gates_ref[...]              # (tn, E)   f32

    acc = jnp.zeros(o_ref.shape, jnp.float32)
    for e in range(num_experts):        # static unroll; no pl.when -> LLO can interleave experts
        h13 = jnp.dot(x, w13_ref[e], preferred_element_type=jnp.float32)   # (tn, 2H) f32
        h1 = h13[:, :hidden]                                               # static, lane-aligned
        h3 = h13[:, hidden:]
        h = (h1 * jax.nn.sigmoid(h1)) * h3                                 # SiLU(w1 x) * (w3 x)
        y = jnp.dot(h.astype(x.dtype), w2_ref[e],
                    preferred_element_type=jnp.float32)                    # (tn, dim) f32
        acc = acc + y * gates[:, e:e + 1]
    o_ref[...] = acc.astype(o_ref.dtype)                                   # single store per tile


def _vmem_limit_bytes():
    """~85% of physical VMEM per core, capped at 100 MiB (v5e/v6e have 128 MiB, v7x 64 MiB)."""
    try:
        cap = pltpu.get_tpu_info().vmem_capacity_bytes
        return min(int(cap * 0.85), 100 << 20)
    except Exception:
        return None


def sparse_moe_experts_pallas(x_flat, gates, w13_bf, w2_bf, *, tn=512):
    """x_flat: (N, dim), gates: (N, E) f32, w13_bf: (E, dim, 2H) bf16, w2_bf: (E, H, dim) bf16."""
    N, dim = x_flat.shape
    E, _, H2 = w13_bf.shape
    H = H2 // 2
    out_dtype = x_flat.dtype

    # Token tile: large (default 512) but never larger than the (row-padded) input.
    tn = min(tn, _round_up(N, 8))
    n_padded = _round_up(N, tn)
    pad = n_padded - N

    # Fused cast + pad at the boundary; padded rows have zero gates -> contribute exactly 0.
    x_bf = x_flat.astype(jnp.bfloat16)
    gates_f32 = gates.astype(jnp.float32)
    if pad:
        x_bf = jnp.pad(x_bf, ((0, pad), (0, 0)))
        gates_f32 = jnp.pad(gates_f32, ((0, pad), (0, 0)))
    n_tiles = n_padded // tn

    cost = pl.CostEstimate(
        flops=6 * n_padded * dim * H * E,             # x@w13 (4NdHE) + h@w2 (2NdHE)
        transcendentals=n_padded * H * E,             # sigmoid
        bytes_accessed=(x_bf.size * 2 + gates_f32.size * 4
                        + w13_bf.size * 2 + w2_bf.size * 2 + n_padded * dim * 4),
    )

    cp_kwargs = dict(dimension_semantics=("parallel",))
    vmem_limit = _vmem_limit_bytes()
    if vmem_limit is not None:
        cp_kwargs["vmem_limit_bytes"] = vmem_limit

    def make_call(buffered_weights):
        # Weights have a constant index_map -> fetched once; single-buffer them to halve
        # their VMEM footprint when the build supports pipeline_mode=pl.Buffered(1).
        wkw = {"pipeline_mode": pl.Buffered(1)} if buffered_weights else {}
        return pl.pallas_call(
            _moe_kernel,
            out_shape=jax.ShapeDtypeStruct((n_padded, dim), jnp.float32),
            grid_spec=pltpu.PrefetchScalarGridSpec(
                num_scalar_prefetch=0,
                grid=(n_tiles,),
                in_specs=[
                    pl.BlockSpec((tn, dim), lambda i: (i, 0)),                 # x tile
                    pl.BlockSpec((tn, E), lambda i: (i, 0)),                   # gate tile
                    pl.BlockSpec((E, dim, 2 * H), lambda i: (0, 0, 0), **wkw),  # w13 (resident)
                    pl.BlockSpec((E, H, dim), lambda i: (0, 0, 0), **wkw),      # w2  (resident)
                ],
                out_specs=pl.BlockSpec((tn, dim), lambda i: (i, 0)),
            ),
            compiler_params=pltpu.CompilerParams(**cp_kwargs),
            cost_estimate=cost,
        )

    try:
        out = make_call(True)(x_bf, gates_f32, w13_bf, w2_bf)
    except Exception:
        # pipeline_mode=pl.Buffered(1) not accepted by this JAX build -> default buffering.
        out = make_call(False)(x_bf, gates_f32, w13_bf, w2_bf)

    return out[:N].astype(out_dtype)


def noisy_topk_router(x_flat, wr, br, wn, bn, top_k, noise_key):
    """Glue JAX: tiny (N, dim) @ (dim, E) matmuls + noisy top-k sparse softmax."""
    logits = x_flat @ wr + br                        # (N, E)
    noise_logits = x_flat @ wn + bn                  # (N, E)
    noise = jax.random.normal(noise_key, logits.shape, logits.dtype) \
        * jax.nn.softplus(noise_logits)
    noisy = logits + noise
    top_vals, top_idx = jax.lax.top_k(noisy, top_k)              # (N, k)
    E = logits.shape[-1]
    sel = jnp.any(top_idx[..., None] == jnp.arange(E), axis=-2)  # (N, E) bool
    sparse_logits = jnp.where(sel, noisy, -jnp.inf)
    gates = jax.nn.softmax(sparse_logits, axis=-1)               # exact zeros outside top-k
    return gates, top_idx


def prepare_expert_params(w1, w3, w2):
    """One-time prep: fuse w1/w3 along the output dim and store bf16 at rest."""
    w13_bf = jnp.concatenate([w1, w3], axis=-1).astype(jnp.bfloat16)   # (E, dim, 2H)
    w2_bf = w2.astype(jnp.bfloat16)                                    # (E, H, dim)
    return w13_bf, w2_bf


def sparse_moe_forward(x, params, top_k, noise_key):
    B, S, D = x.shape
    x_flat = x.reshape(B * S, D)
    gates, _ = noisy_topk_router(
        x_flat, params["wr"], params["br"], params["wn"], params["bn"],
        top_k, noise_key)
    out_flat = sparse_moe_experts_pallas(
        x_flat, gates, params["w13_bf"], params["w2_bf"])
    return out_flat.reshape(B, S, D)


def sparse_moe_reference(x, params, top_k, noise_key):
    """Pure-JAX f32 reference (dense gate-weighted sum over experts)."""
    B, S, D = x.shape
    x_flat = x.reshape(B * S, D)
    gates, _ = noisy_topk_router(
        x_flat, params["wr"], params["br"], params["wn"], params["bn"],
        top_k, noise_key)
    out = jnp.zeros_like(x_flat)
    E = gates.shape[-1]
    for e in range(E):
        h = jax.nn.silu(x_flat @ params["w1"][e]) * (x_flat @ params["w3"][e])
        y = h @ params["w2"][e]
        out = out + y * gates[:, e:e + 1]
    return out.reshape(B, S, D)


if __name__ == "__main__":
    # small config consistent with the module
    batch, seq = 2, 8
    dim, hidden_dim = 128, 256
    num_experts, num_experts_per_tok = 4, 2

    key = jax.random.PRNGKey(0)
    kx, kr, kbr, kn, kbn, k1, k2, k3, knoise = jax.random.split(key, 9)

    x = jax.random.normal(kx, (batch, seq, dim), jnp.float32)

    scale_d = 1.0 / jnp.sqrt(dim)
    scale_h = 1.0 / jnp.sqrt(hidden_dim)
    params = {
        # router linears (stored as (dim, E) for x @ w)
        "wr": jax.random.normal(kr, (dim, num_experts), jnp.float32) * scale_d,
        "br": jax.random.normal(kbr, (num_experts,), jnp.float32) * 0.01,
        "wn": jax.random.normal(kn, (dim, num_experts), jnp.float32) * scale_d,
        "bn": jax.random.normal(kbn, (num_experts,), jnp.float32) * 0.01,
        # expert weights, pre-transposed for x @ w (f32 copies kept for the reference)
        "w1": jax.random.normal(k1, (num_experts, dim, hidden_dim), jnp.float32) * scale_d,
        "w3": jax.random.normal(k3, (num_experts, dim, hidden_dim), jnp.float32) * scale_d,
        "w2": jax.random.normal(k2, (num_experts, hidden_dim, dim), jnp.float32) * scale_h,
    }
    # One-time bf16 fusion of expert weights (hoisted out of the forward path).
    params["w13_bf"], params["w2_bf"] = prepare_expert_params(
        params["w1"], params["w3"], params["w2"])

    out = sparse_moe_forward(x, params, num_experts_per_tok, knoise)
    out = jax.block_until_ready(out)

    ref = sparse_moe_reference(x, params, num_experts_per_tok, knoise)
    assert out.shape == x.shape
    # Tolerance loosened vs the pure-f32 reference: kernel uses bf16 inputs/weights with f32
    # MXU accumulation (deliberate precision/perf trade).
    assert jnp.allclose(out, ref, atol=1e-1, rtol=1e-1), (
        "mismatch vs reference; max abs diff = %s" % float(jnp.max(jnp.abs(out - ref))))

    print("KERNEL_OK")
</pallas_src>

<mosaic_0001>
module attributes {stable_mosaic.version = 11 : i64} {
  func.func @_moe_kernel(%arg0: i32, %arg1: memref<16x128xbf16, #tpu.memory_space<vmem>>, %arg2: memref<16x4xf32, #tpu.memory_space<vmem>>, %arg3: memref<4x128x512xbf16, #tpu.memory_space<vmem>>, %arg4: memref<4x256x128xbf16, #tpu.memory_space<vmem>>, %arg5: memref<16x128xf32, #tpu.memory_space<vmem>>) attributes {dimension_semantics = [#tpu.dimension_semantics<parallel>], iteration_bounds = array<i64: 1>, scalar_prefetch = 0 : i64, scratch_operands = 0 : i64, tpu.core_type = #tpu.core_type<tc>, window_params = [{transform_indices = @transform_0, window_bounds = array<i64: 16, 128>}, {transform_indices = @transform_1, window_bounds = array<i64: 16, 4>}, {pipeline_mode = #tpu.pipeline_mode<synchronous>, transform_indices = @transform_2, window_bounds = array<i64: 4, 128, 512>}, {pipeline_mode = #tpu.pipeline_mode<synchronous>, transform_indices = @transform_3, window_bounds = array<i64: 4, 256, 128>}, {transform_indices = @transform_4, window_bounds = array<i64: 16, 128>}]} {
    %c0 = arith.constant 0 : index
    %c0_0 = arith.constant 0 : index
    %0 = vector.load %arg1[%c0, %c0_0] : memref<16x128xbf16, #tpu.memory_space<vmem>>, vector<16x128xbf16>
    %c0_1 = arith.constant 0 : index
    %c0_2 = arith.constant 0 : index
    %1 = vector.load %arg2[%c0_1, %c0_2] : memref<16x4xf32, #tpu.memory_space<vmem>>, vector<16x4xf32>
    %cst = arith.constant 0.000000e+00 : f32
    %2 = vector.broadcast %cst : f32 to vector<16x128xf32>
    %c0_3 = arith.constant 0 : index
    %c0_4 = arith.constant 0 : index
    %c0_5 = arith.constant 0 : index
    %3 = vector.load %arg3[%c0_3, %c0_4, %c0_5] : memref<4x128x512xbf16, #tpu.memory_space<vmem>>, vector<1x128x512xbf16>
    %4 = vector.shape_cast %3 : vector<1x128x512xbf16> to vector<128x512xbf16>
    %cst_6 = arith.constant dense<0.000000e+00> : vector<16x512xf32>
    %5 = tpu.matmul %0, %4, %cst_6 {dimension_numbers = #tpu.dot_dimension_numbers<[1], [0], [0], [1], [0, 0, 1, 1], [], []>} : vector<16x128xbf16>, vector<128x512xbf16>, vector<16x512xf32> -> vector<16x512xf32>
    %6 = vector.extract_strided_slice %5 {offsets = [0, 0], sizes = [16, 256], strides = [1, 1]} : vector<16x512xf32> to vector<16x256xf32>
    %7 = vector.extract_strided_slice %5 {offsets = [0, 256], sizes = [16, 256], strides = [1, 1]} : vector<16x512xf32> to vector<16x256xf32>
    %8 = arith.negf %6 : vector<16x256xf32>
    %9 = math.exp %8 : vector<16x256xf32>
    %cst_7 = arith.constant 1.000000e+00 : f32
    %10 = vector.broadcast %cst_7 : f32 to vector<16x256xf32>
    %11 = arith.addf %10, %9 : vector<16x256xf32>
    %12 = arith.divf %10, %11 : vector<16x256xf32>
    %13 = arith.mulf %6, %12 : vector<16x256xf32>
    %14 = arith.mulf %13, %7 : vector<16x256xf32>
    %15 = arith.truncf %14 : vector<16x256xf32> to vector<16x256xbf16>
    %c0_8 = arith.constant 0 : index
    %c0_9 = arith.constant 0 : index
    %c0_10 = arith.constant 0 : index
    %16 = vector.load %arg4[%c0_8, %c0_9, %c0_10] : memref<4x256x128xbf16, #tpu.memory_space<vmem>>, vector<1x256x128xbf16>
    %17 = vector.shape_cast %16 : vector<1x256x128xbf16> to vector<256x128xbf16>
    %cst_11 = arith.constant dense<0.000000e+00> : vector<16x128xf32>
    %18 = tpu.matmul %15, %17, %cst_11 {dimension_numbers = #tpu.dot_dimension_numbers<[1], [0], [0], [1], [0, 0, 1, 1], [], []>} : vector<16x256xbf16>, vector<256x128xbf16>, vector<16x128xf32> -> vector<16x128xf32>
    %19 = vector.extract_strided_slice %1 {offsets = [0, 0], sizes = [16, 1], strides = [1, 1]} : vector<16x4xf32> to vector<16x1xf32>
    %20 = vector.broadcast %19 : vector<16x1xf32> to vector<16x128xf32>
    %21 = arith.mulf %18, %20 : vector<16x128xf32>
    %22 = arith.addf %2, %21 : vector<16x128xf32>
    %c1 = arith.constant 1 : index
    %c0_12 = arith.constant 0 : index
    %c0_13 = arith.constant 0 : index
    %23 = vector.load %arg3[%c1, %c0_12, %c0_13] : memref<4x128x512xbf16, #tpu.memory_space<vmem>>, vector<1x128x512xbf16>
    %24 = vector.shape_cast %23 : vector<1x128x512xbf16> to vector<128x512xbf16>
    %cst_14 = arith.constant dense<0.000000e+00> : vector<16x512xf32>
    %25 = tpu.matmul %0, %24, %cst_14 {dimension_numbers = #tpu.dot_dimension_numbers<[1], [0], [0], [1], [0, 0, 1, 1], [], []>} : vector<16x128xbf16>, vector<128x512xbf16>, vector<16x512xf32> -> vector<16x512xf32>
    %26 = vector.extract_strided_slice %25 {offsets = [0, 0], sizes = [16, 256], strides = [1, 1]} : vector<16x512xf32> to vector<16x256xf32>
    %27 = vector.extract_strided_slice %25 {offsets = [0, 256], sizes = [16, 256], strides = [1, 1]} : vector<16x512xf32> to vector<16x256xf32>
    %28 = arith.negf %26 : vector<16x256xf32>
    %29 = math.exp %28 : vector<16x256xf32>
    %cst_15 = arith.constant 1.000000e+00 : f32
    %30 = vector.broadcast %cst_15 : f32 to vector<16x256xf32>
    %31 = arith.addf %30, %29 : vector<16x256xf32>
    %32 = arith.divf %30, %31 : vector<16x256xf32>
    %33 = arith.mulf %26, %32 : vector<16x256xf32>
    %34 = arith.mulf %33, %27 : vector<16x256xf32>
    %35 = arith.truncf %34 : vector<16x256xf32> to vector<16x256xbf16>
    %c1_16 = arith.constant 1 : index
    %c0_17 = arith.constant 0 : index
    %c0_18 = arith.constant 0 : index
    %36 = vector.load %arg4[%c1_16, %c0_17, %c0_18] : memref<4x256x128xbf16, #tpu.memory_space<vmem>>, vector<1x256x128xbf16>
    %37 = vector.shape_cast %36 : vector<1x256x128xbf16> to vector<256x128xbf16>
    %cst_19 = arith.constant dense<0.000000e+00> : vector<16x128xf32>
    %38 = tpu.matmul %35, %37, %cst_19 {dimension_numbers = #tpu.dot_dimension_numbers<[1], [0], [0], [1], [0, 0, 1, 1], [], []>} : vector<16x256xbf16>, vector<256x128xbf16>, vector<16x128xf32> -> vector<16x128xf32>
    %39 = vector.extract_strided_slice %1 {offsets = [0, 1], sizes = [16, 1], strides = [1, 1]} : vector<16x4xf32> to vector<16x1xf32>
    %40 = vector.broadcast %39 : vector<16x1xf32> to vector<16x128xf32>
    %41 = arith.mulf %38, %40 : vector<16x128xf32>
    %42 = arith.addf %22, %41 : vector<16x128xf32>
    %c2 = arith.constant 2 : index
    %c0_20 = arith.constant 0 : index
    %c0_21 = arith.constant 0 : index
    %43 = vector.load %arg3[%c2, %c0_20, %c0_21] : memref<4x128x512xbf16, #tpu.memory_space<vmem>>, vector<1x128x512xbf16>
    %44 = vector.shape_cast %43 : vector<1x128x512xbf16> to vector<128x512xbf16>
    %cst_22 = arith.constant dense<0.000000e+00> : vector<16x512xf32>
    %45 = tpu.matmul %0, %44, %cst_22 {dimension_numbers = #tpu.dot_dimension_numbers<[1], [0], [0], [1], [0, 0, 1, 1], [], []>} : vector<16x128xbf16>, vector<128x512xbf16>, vector<16x512xf32> -> vector<16x512xf32>
    %46 = vector.extract_strided_slice %45 {offsets = [0, 0], sizes = [16, 256], strides = [1, 1]} : vector<16x512xf32> to vector<16x256xf32>
    %47 = vector.extract_strided_slice %45 {offsets = [0, 256], sizes = [16, 256], strides = [1, 1]} : vector<16x512xf32> to vector<16x256xf32>
    %48 = arith.negf %46 : vector<16x256xf32>
    %49 = math.exp %48 : vector<16x256xf32>
    %cst_23 = arith.constant 1.000000e+00 : f32
    %50 = vector.broadcast %cst_23 : f32 to vector<16x256xf32>
    %51 = arith.addf %50, %49 : vector<16x256xf32>
    %52 = arith.divf %50, %51 : vector<16x256xf32>
    %53 = arith.mulf %46, %52 : vector<16x256xf32>
    %54 = arith.mulf %53, %47 : vector<16x256xf32>
    %55 = arith.truncf %54 : vector<16x256xf32> to vector<16x256xbf16>
    %c2_24 = arith.constant 2 : index
    %c0_25 = arith.constant 0 : index
    %c0_26 = arith.constant 0 : index
    %56 = vector.load %arg4[%c2_24, %c0_25, %c0_26] : memref<4x256x128xbf16, #tpu.memory_space<vmem>>, vector<1x256x128xbf16>
    %57 = vector.shape_cast %56 : vector<1x256x128xbf16> to vector<256x128xbf16>
    %cst_27 = arith.constant dense<0.000000e+00> : vector<16x128xf32>
    %58 = tpu.matmul %55, %57, %cst_27 {dimension_numbers = #tpu.dot_dimension_numbers<[1], [0], [0], [1], [0, 0, 1, 1], [], []>} : vector<16x256xbf16>, vector<256x128xbf16>, vector<16x128xf32> -> vector<16x128xf32>
    %59 = vector.extract_strided_slice %1 {offsets = [0, 2], sizes = [16, 1], strides = [1, 1]} : vector<16x4xf32> to vector<16x1xf32>
    %60 = vector.broadcast %59 : vector<16x1xf32> to vector<16x128xf32>
    %61 = arith.mulf %58, %60 : vector<16x128xf32>
    %62 = arith.addf %42, %61 : vector<16x128xf32>
    %c3 = arith.constant 3 : index
    %c0_28 = arith.constant 0 : index
    %c0_29 = arith.constant 0 : index
    %63 = vector.load %arg3[%c3, %c0_28, %c0_29] : memref<4x128x512xbf16, #tpu.memory_space<vmem>>, vector<1x128x512xbf16>
    %64 = vector.shape_cast %63 : vector<1x128x512xbf16> to vector<128x512xbf16>
    %cst_30 = arith.constant dense<0.000000e+00> : vector<16x512xf32>
    %65 = tpu.matmul %0, %64, %cst_30 {dimension_numbers = #tpu.dot_dimension_numbers<[1], [0], [0], [1], [0, 0, 1, 1], [], []>} : vector<16x128xbf16>, vector<128x512xbf16>, vector<16x512xf32> -> vector<16x512xf32>
    %66 = vector.extract_strided_slice %65 {offsets = [0, 0], sizes = [16, 256], strides = [1, 1]} : vector<16x512xf32> to vector<16x256xf32>
    %67 = vector.extract_strided_slice %65 {offsets = [0, 256], sizes = [16, 256], strides = [1, 1]} : vector<16x512xf32> to vector<16x256xf32>
    %68 = arith.negf %66 : vector<16x256xf32>
    %69 = math.exp %68 : vector<16x256xf32>
    %cst_31 = arith.constant 1.000000e+00 : f32
    %70 = vector.broadcast %cst_31 : f32 to vector<16x256xf32>
    %71 = arith.addf %70, %69 : vector<16x256xf32>
    %72 = arith.divf %70, %71 : vector<16x256xf32>
    %73 = arith.mulf %66, %72 : vector<16x256xf32>
    %74 = arith.mulf %73, %67 : vector<16x256xf32>
    %75 = arith.truncf %74 : vector<16x256xf32> to vector<16x256xbf16>
    %c3_32 = arith.constant 3 : index
    %c0_33 = arith.constant 0 : index
    %c0_34 = arith.constant 0 : index
    %76 = vector.load %arg4[%c3_32, %c0_33, %c0_34] : memref<4x256x128xbf16, #tpu.memory_space<vmem>>, vector<1x256x128xbf16>
    %77 = vector.shape_cast %76 : vector<1x256x128xbf16> to vector<256x128xbf16>
    %cst_35 = arith.constant dense<0.000000e+00> : vector<16x128xf32>
    %78 = tpu.matmul %75, %77, %cst_35 {dimension_numbers = #tpu.dot_dimension_numbers<[1], [0], [0], [1], [0, 0, 1, 1], [], []>} : vector<16x256xbf16>, vector<256x128xbf16>, vector<16x128xf32> -> vector<16x128xf32>
    %79 = vector.extract_strided_slice %1 {offsets = [0, 3], sizes = [16, 1], strides = [1, 1]} : vector<16x4xf32> to vector<16x1xf32>
    %80 = vector.broadcast %79 : vector<16x1xf32> to vector<16x128xf32>
    %81 = arith.mulf %78, %80 : vector<16x128xf32>
    %82 = arith.addf %62, %81 : vector<16x128xf32>
    %c0_36 = arith.constant 0 : index
    %c0_37 = arith.constant 0 : index
    %83 = vector.load %arg5[%c0_36, %c0_37] : memref<16x128xf32, #tpu.memory_space<vmem>>, vector<16x128xf32>
    tpu.vector_store %arg5[%c0_36, %c0_37], %82 {strides = array<i32>} : memref<16x128xf32, #tpu.memory_space<vmem>>, vector<16x128xf32>,
    return
  }
  func.func @transform_0(%arg0: i32) -> (i32, i32) {
    %c0_i32 = arith.constant 0 : i32
    %c0_i32_0 = arith.constant 0 : i32
    return %arg0, %c0_i32 : i32, i32
  }
  func.func @transform_1(%arg0: i32) -> (i32, i32) {
    %c0_i32 = arith.constant 0 : i32
    %c0_i32_0 = arith.constant 0 : i32
    return %arg0, %c0_i32 : i32, i32
  }
  func.func @transform_2(%arg0: i32) -> (i32, i32, i32) {
    %c0_i32 = arith.constant 0 : i32
    %c0_i32_0 = arith.constant 0 : i32
    %c0_i32_1 = arith.constant 0 : i32
    %c0_i32_2 = arith.constant 0 : i32
    return %c0_i32, %c0_i32_0, %c0_i32_1 : i32, i32, i32
  }
  func.func @transform_3(%arg0: i32) -> (i32, i32, i32) {
    %c0_i32 = arith.constant 0 : i32
    %c0_i32_0 = arith.constant 0 : i32
    %c0_i32_1 = arith.constant 0 : i32
    %c0_i32_2 = arith.constant 0 : i32
    return %c0_i32, %c0_i32_0, %c0_i32_1 : i32, i32, i32
  }
  func.func @transform_4(%arg0: i32) -> (i32, i32) {
    %c0_i32 = arith.constant 0 : i32
    %c0_i32_0 = arith.constant 0 : i32
    return %arg0, %c0_i32 : i32, i32
  }
}

module attributes {stable_mosaic.version = 11 : i64} {
  func.func @_moe_kernel(%arg0: i32, %arg1: memref<16x128xbf16, #tpu.memory_space<vmem>>, %arg2: memref<16x4xf32, #tpu.memory_space<vmem>>, %arg3: memref<4x128x512xbf16, #tpu.memory_space<vmem>>, %arg4: memref<4x256x128xbf16, #tpu.memory_space<vmem>>, %arg5: memref<16x128xf32, #tpu.memory_space<vmem>>) attributes {dimension_semantics = [#tpu.dimension_semantics<parallel>], iteration_bounds = array<i64: 1>, scalar_prefetch = 0 : i64, scratch_operands = 0 : i64, tpu.core_type = #tpu.core_type<tc>, window_params = [{transform_indices = @transform_0, window_bounds = array<i64: 16, 128>}, {transform_indices = @transform_1, window_bounds = array<i64: 16, 4>}, {pipeline_mode = #tpu.pipeline_mode<synchronous>, transform_indices = @transform_2, window_bounds = array<i64: 4, 128, 512>}, {pipeline_mode = #tpu.pipeline_mode<synchronous>, transform_indices = @transform_3, window_bounds = array<i64: 4, 256, 128>}, {transform_indices = @transform_4, window_bounds = array<i64: 16, 128>}]} {
    %c0 = arith.constant 0 : index
    %c0_0 = arith.constant 0 : index
    %0 = vector.load %arg1[%c0, %c0_0] : memref<16x128xbf16, #tpu.memory_space<vmem>>, vector<16x128xbf16>
    %c0_1 = arith.constant 0 : index
    %c0_2 = arith.constant 0 : index
    %1 = vector.load %arg2[%c0_1, %c0_2] : memref<16x4xf32, #tpu.memory_space<vmem>>, vector<16x4xf32>
    %cst = arith.constant 0.000000e+00 : f32
    %2 = vector.broadcast %cst : f32 to vector<16x128xf32>
    %c0_3 = arith.constant 0 : index
    %c0_4 = arith.constant 0 : index
    %c0_5 = arith.constant 0 : index
    %3 = vector.load %arg3[%c0_3, %c0_4, %c0_5] : memref<4x128x512xbf16, #tpu.memory_space<vmem>>, vector<1x128x512xbf16>
    %4 = vector.shape_cast %3 : vector<1x128x512xbf16> to vector<128x512xbf16>
    %cst_6 = arith.constant dense<0.000000e+00> : vector<16x512xf32>
    %5 = tpu.matmul %0, %4, %cst_6 {dimension_numbers = #tpu.dot_dimension_numbers<[1], [0], [0], [1], [0, 0, 1, 1], [], []>} : vector<16x128xbf16>, vector<128x512xbf16>, vector<16x512xf32> -> vector<16x512xf32>
    %6 = vector.extract_strided_slice %5 {offsets = [0, 0], sizes = [16, 256], strides = [1, 1]} : vector<16x512xf32> to vector<16x256xf32>
    %7 = vector.extract_strided_slice %5 {offsets = [0, 256], sizes = [16, 256], strides = [1, 1]} : vector<16x512xf32> to vector<16x256xf32>
    %8 = arith.negf %6 : vector<16x256xf32>
    %9 = math.exp %8 : vector<16x256xf32>
    %cst_7 = arith.constant 1.000000e+00 : f32
    %10 = vector.broadcast %cst_7 : f32 to vector<16x256xf32>
    %11 = arith.addf %10, %9 : vector<16x256xf32>
    %12 = arith.divf %10, %11 : vector<16x256xf32>
    %13 = arith.mulf %6, %12 : vector<16x256xf32>
    %14 = arith.mulf %13, %7 : vector<16x256xf32>
    %15 = arith.truncf %14 : vector<16x256xf32> to vector<16x256xbf16>
    %c0_8 = arith.constant 0 : index
    %c0_9 = arith.constant 0 : index
    %c0_10 = arith.constant 0 : index
    %16 = vector.load %arg4[%c0_8, %c0_9, %c0_10] : memref<4x256x128xbf16, #tpu.memory_space<vmem>>, vector<1x256x128xbf16>
    %17 = vector.shape_cast %16 : vector<1x256x128xbf16> to vector<256x128xbf16>
    %cst_11 = arith.constant dense<0.000000e+00> : vector<16x128xf32>
    %18 = tpu.matmul %15, %17, %cst_11 {dimension_numbers = #tpu.dot_dimension_numbers<[1], [0], [0], [1], [0, 0, 1, 1], [], []>} : vector<16x256xbf16>, vector<256x128xbf16>, vector<16x128xf32> -> vector<16x128xf32>
    %19 = vector.extract_strided_slice %1 {offsets = [0, 0], sizes = [16, 1], strides = [1, 1]} : vector<16x4xf32> to vector<16x1xf32>
    %20 = vector.broadcast %19 : vector<16x1xf32> to vector<16x128xf32>
    %21 = arith.mulf %18, %20 : vector<16x128xf32>
    %22 = arith.addf %2, %21 : vector<16x128xf32>
    %c1 = arith.constant 1 : index
    %c0_12 = arith.constant 0 : index
    %c0_13 = arith.constant 0 : index
    %23 = vector.load %arg3[%c1, %c0_12, %c0_13] : memref<4x128x512xbf16, #tpu.memory_space<vmem>>, vector<1x128x512xbf16>
    %24 = vector.shape_cast %23 : vector<1x128x512xbf16> to vector<128x512xbf16>
    %cst_14 = arith.constant dense<0.000000e+00> : vector<16x512xf32>
    %25 = tpu.matmul %0, %24, %cst_14 {dimension_numbers = #tpu.dot_dimension_numbers<[1], [0], [0], [1], [0, 0, 1, 1], [], []>} : vector<16x128xbf16>, vector<128x512xbf16>, vector<16x512xf32> -> vector<16x512xf32>
    %26 = vector.extract_strided_slice %25 {offsets = [0, 0], sizes = [16, 256], strides = [1, 1]} : vector<16x512xf32> to vector<16x256xf32>
    %27 = vector.extract_strided_slice %25 {offsets = [0, 256], sizes = [16, 256], strides = [1, 1]} : vector<16x512xf32> to vector<16x256xf32>
    %28 = arith.negf %26 : vector<16x256xf32>
    %29 = math.exp %28 : vector<16x256xf32>
    %cst_15 = arith.constant 1.000000e+00 : f32
    %30 = vector.broadcast %cst_15 : f32 to vector<16x256xf32>
    %31 = arith.addf %30, %29 : vector<16x256xf32>
    %32 = arith.divf %30, %31 : vector<16x256xf32>
    %33 = arith.mulf %26, %32 : vector<16x256xf32>
    %34 = arith.mulf %33, %27 : vector<16x256xf32>
    %35 = arith.truncf %34 : vector<16x256xf32> to vector<16x256xbf16>
    %c1_16 = arith.constant 1 : index
    %c0_17 = arith.constant 0 : index
    %c0_18 = arith.constant 0 : index
    %36 = vector.load %arg4[%c1_16, %c0_17, %c0_18] : memref<4x256x128xbf16, #tpu.memory_space<vmem>>, vector<1x256x128xbf16>
    %37 = vector.shape_cast %36 : vector<1x256x128xbf16> to vector<256x128xbf16>
    %cst_19 = arith.constant dense<0.000000e+00> : vector<16x128xf32>
    %38 = tpu.matmul %35, %37, %cst_19 {dimension_numbers = #tpu.dot_dimension_numbers<[1], [0], [0], [1], [0, 0, 1, 1], [], []>} : vector<16x256xbf16>, vector<256x128xbf16>, vector<16x128xf32> -> vector<16x128xf32>
    %39 = vector.extract_strided_slice %1 {offsets = [0, 1], sizes = [16, 1], strides = [1, 1]} : vector<16x4xf32> to vector<16x1xf32>
    %40 = vector.broadcast %39 : vector<16x1xf32> to vector<16x128xf32>
    %41 = arith.mulf %38, %40 : vector<16x128xf32>
    %42 = arith.addf %22, %41 : vector<16x128xf32>
    %c2 = arith.constant 2 : index
    %c0_20 = arith.constant 0 : index
    %c0_21 = arith.constant 0 : index
    %43 = vector.load %arg3[%c2, %c0_20, %c0_21] : memref<4x128x512xbf16, #tpu.memory_space<vmem>>, vector<1x128x512xbf16>
    %44 = vector.shape_cast %43 : vector<1x128x512xbf16> to vector<128x512xbf16>
    %cst_22 = arith.constant dense<0.000000e+00> : vector<16x512xf32>
    %45 = tpu.matmul %0, %44, %cst_22 {dimension_numbers = #tpu.dot_dimension_numbers<[1], [0], [0], [1], [0, 0, 1, 1], [], []>} : vector<16x128xbf16>, vector<128x512xbf16>, vector<16x512xf32> -> vector<16x512xf32>
    %46 = vector.extract_strided_slice %45 {offsets = [0, 0], sizes = [16, 256], strides = [1, 1]} : vector<16x512xf32> to vector<16x256xf32>
    %47 = vector.extract_strided_slice %45 {offsets = [0, 256], sizes = [16, 256], strides = [1, 1]} : vector<16x512xf32> to vector<16x256xf32>
    %48 = arith.negf %46 : vector<16x256xf32>
    %49 = math.exp %48 : vector<16x256xf32>
    %cst_23 = arith.constant 1.000000e+00 : f32
    %50 = vector.broadcast %cst_23 : f32 to vector<16x256xf32>
    %51 = arith.addf %50, %49 : vector<16x256xf32>
    %52 = arith.divf %50, %51 : vector<16x256xf32>
    %53 = arith.mulf %46, %52 : vector<16x256xf32>
    %54 = arith.mulf %53, %47 : vector<16x256xf32>
    %55 = arith.truncf %54 : vector<16x256xf32> to vector<16x256xbf16>
    %c2_24 = arith.constant 2 : index
    %c0_25 = arith.constant 0 : index
    %c0_26 = arith.constant 0 : index
    %56 = vector.load %arg4[%c2_24, %c0_25, %c0_26] : memref<4x256x128xbf16, #tpu.memory_space<vmem>>, vector<1x256x128xbf16>
    %57 = vector.shape_cast %56 : vector<1x256x128xbf16> to vector<256x128xbf16>
    %cst_27 = arith.constant dense<0.000000e+00> : vector<16x128xf32>
    %58 = tpu.matmul %55, %57, %cst_27 {dimension_numbers = #tpu.dot_dimension_numbers<[1], [0], [0], [1], [0, 0, 1, 1], [], []>} : vector<16x256xbf16>, vector<256x128xbf16>, vector<16x128xf32> -> vector<16x128xf32>
    %59 = vector.extract_strided_slice %1 {offsets = [0, 2], sizes = [16, 1], strides = [1, 1]} : vector<16x4xf32> to vector<16x1xf32>
    %60 = vector.broadcast %59 : vector<16x1xf32> to vector<16x128xf32>
    %61 = arith.mulf %58, %60 : vector<16x128xf32>
    %62 = arith.addf %42, %61 : vector<16x128xf32>
    %c3 = arith.constant 3 : index
    %c0_28 = arith.constant 0 : index
    %c0_29 = arith.constant 0 : index
    %63 = vector.load %arg3[%c3, %c0_28, %c0_29] : memref<4x128x512xbf16, #tpu.memory_space<vmem>>, vector<1x128x512xbf16>
    %64 = vector.shape_cast %63 : vector<1x128x512xbf16> to vector<128x512xbf16>
    %cst_30 = arith.constant dense<0.000000e+00> : vector<16x512xf32>
    %65 = tpu.matmul %0, %64, %cst_30 {dimension_numbers = #tpu.dot_dimension_numbers<[1], [0], [0], [1], [0, 0, 1, 1], [], []>} : vector<16x128xbf16>, vector<128x512xbf16>, vector<16x512xf32> -> vector<16x512xf32>
    %66 = vector.extract_strided_slice %65 {offsets = [0, 0], sizes = [16, 256], strides = [1, 1]} : vector<16x512xf32> to vector<16x256xf32>
    %67 = vector.extract_strided_slice %65 {offsets = [0, 256], sizes = [16, 256], strides = [1, 1]} : vector<16x512xf32> to vector<16x256xf32>
    %68 = arith.negf %66 : vector<16x256xf32>
    %69 = math.exp %68 : vector<16x256xf32>
    %cst_31 = arith.constant 1.000000e+00 : f32
    %70 = vector.broadcast %cst_31 : f32 to vector<16x256xf32>
    %71 = arith.addf %70, %69 : vector<16x256xf32>
    %72 = arith.divf %70, %71 : vector<16x256xf32>
    %73 = arith.mulf %66, %72 : vector<16x256xf32>
    %74 = arith.mulf %73, %67 : vector<16x256xf32>
    %75 = arith.truncf %74 : vector<16x256xf32> to vector<16x256xbf16>
    %c3_32 = arith.constant 3 : index
    %c0_33 = arith.constant 0 : index
    %c0_34 = arith.constant 0 : index
    %76 = vector.load %arg4[%c3_32, %c0_33, %c0_34] : memref<4x256x128xbf16, #tpu.memory_space<vmem>>, vector<1x256x128xbf16>
    %77 = vector.shape_cast %76 : vector<1x256x128xbf16> to vector<256x128xbf16>
    %cst_35 = arith.constant dense<0.000000e+00> : vector<16x128xf32>
    %78 = tpu.matmul %75, %77, %cst_35 {dimension_numbers = #tpu.dot_dimension_numbers<[1], [0], [0], [1], [0, 0, 1, 1], [], []>} : vector<16x256xbf16>, vector<256x128xbf16>, vector<16x128xf32> -> vector<16x128xf32>
    %79 = vector.extract_strided_slice %1 {offsets = [0, 3], sizes = [16, 1], strides = [1, 1]} : vector<16x4xf32> to vector<16x1xf32>
    %80 = vector.broadcast %79 : vector<16x1xf32> to vector<16x128xf32>
    %81 = arith.mulf %78, %80 : vector<16x128xf32>
    %82 = arith.addf %62, %81 : vector<16x128xf32>
    %c0_36 = arith.constant 0 : index
    %c0_37 = arith.constant 0 : index
    %83 = vector.load %arg5[%c0_36, %c0_37] : memref<16x128xf32, #tpu.memory_space<vmem>>, vector<16x128xf32>
    tpu.vector_store %arg5[%c0_36, %c0_37], %82 {strides = array<i32>} : memref<16x128xf32, #tpu.memory_space<vmem>>, vector<16x128xf32>,
    return
  }
  func.func @transform_0(%arg0: i32) -> (i32, i32) {
    %c0_i32 = arith.constant 0 : i32
    %c0_i32_0 = arith.constant 0 : i32
    return %arg0, %c0_i32 : i32, i32
  }
  func.func @transform_1(%arg0: i32) -> (i32, i32) {
    %c0_i32 = arith.constant 0 : i32
    %c0_i32_0 = arith.constant 0 : i32
    return %arg0, %c0_i32 : i32, i32
  }
  func.func @transform_2(%arg0: i32) -> (i32, i32, i32) {
    %c0_i32 = arith.constant 0 : i32
    %c0_i32_0 = arith.constant 0 : i32
    %c0_i32_1 = arith.constant 0 : i32
    %c0_i32_2 = arith.constant 0 : i32
    return %c0_i32, %c0_i32_0, %c0_i32_1 : i32, i32, i32
  }
  func.func @transform_3(%arg0: i32) -> (i32, i32, i32) {
    %c0_i32 = arith.constant 0 : i32
    %c0_i32_0 = arith.constant 0 : i32
    %c0_i32_1 = arith.constant 0 : i32
    %c0_i32_2 = arith.constant 0 : i32
    return %c0_i32, %c0_i32_0, %c0_i32_1 : i32, i32, i32
  }
  func.func @transform_4(%arg0: i32) -> (i32, i32) {
    %c0_i32 = arith.constant 0 : i32
    %c0_i32_0 = arith.constant 0 : i32
    return %arg0, %c0_i32 : i32, i32
  }
}

</mosaic_0001>

<llo_original>
// kernel: tpu_custom_call.1
$region0: #{tpu_custom_call.1}
  #allocation0 [shape = 'u32[]', space=smem, size = 0x4, offset = 0x4, fixed_abs, tag = 'smem constant byte address 0x4 - core index']
  #allocation1 [shape = 'u32[144,128]{1,0:T(1,128)}', space=vmem, size = 0x12000, scoped, tag = 'internal scratch']
  %s0 = inlined_call_operand.vmem [shape: bf16[16,128], index: 0, kind: input, shape index: {}]
  %s1 = inlined_call_operand.vmem [shape: f32[16,4], index: 1, kind: input, shape index: {}]
  %s2 = inlined_call_operand.hbm [shape: bf16[4,128,512], index: 2, kind: input, shape index: {}]
  %s3 = inlined_call_operand.hbm [shape: bf16[4,256,128], index: 3, kind: input, shape index: {}]
  %s4 = inlined_call_operand.hbm [shape: f32[16,128], index: 4, kind: output, shape index: {}]
  %s5 = sld [smem:[#allocation0]]
  $region34: #{tpu_custom_call.1} parent=0
    _
  %s7 = ssub.s32 1, %s5
  %s8 = scalar_select 0, %s7, %s5
  $region1: #{tpu_custom_call.1} parent=0
    #allocation2 [shape = 'u8[524288]{0}', space=vmem, size = 0x80000, scoped, tag = 'input window, operand 2, single buffered']
    #allocation3 [shape = 's32[1]{0}', space=sflag, size = 0x4, scoped, tag = 'scoped memory for tpu_custom_call.1']
    #allocation4 [shape = 's32[1]{0}', space=sflag, size = 0x4, scoped, tag = 'scoped memory for tpu_custom_call.1']
    #allocation5 [shape = 'u8[262144]{0}', space=vmem, size = 0x40000, scoped, tag = 'input window, operand 3, single buffered']
    #allocation6 [shape = 's32[1]{0}', space=sflag, size = 0x4, scoped, tag = 'scoped memory for tpu_custom_call.1']
    #allocation7 [shape = 'u8[8192]{0}', space=vmem, size = 0x2000, scoped, tag = 'output window, operand 0, single buffered']
    %9 = vsyncpa [#allocation3], 0
    %10 = vsyncpa [#allocation6], 0
    %11 = vsyncpa [#allocation4], 0
    // Predicated region
    $region2: #{tpu_custom_call.1} parent=1 // pred_check
      _
    $region3: #{tpu_custom_call.1} parent=1 // pred_check_branch
      %13 = sbr.rel (0) target = $region5
    $region4: #{tpu_custom_call.1} parent=1 // pred_region
      _
    $region5: #{tpu_custom_call.1} parent=1 // pred_fallthru
      _
    // Predicated region
    $region6: #{tpu_custom_call.1} parent=1 // pred_check
      _
    $region7: #{tpu_custom_call.1} parent=1 // pred_check_branch
      %15 = sbr.rel (0) target = $region9
    $region8: #{tpu_custom_call.1} parent=1 // pred_region
      _
    $region9: #{tpu_custom_call.1} parent=1 // pred_fallthru
      _
    // Predicated region
    $region10: #{tpu_custom_call.1} parent=1 // pred_check
      _
    $region11: #{tpu_custom_call.1} parent=1 // pred_check_branch
      %17 = sbr.rel (0) target = $region13
    $region12: #{tpu_custom_call.1} parent=1 // pred_region
      %s19 = ssub.s32 16384, 16384
      %20 = vsyncadd [#allocation3], %s19
      %s21 = sshll.u32 [#allocation2], 4
      %s22 = int_to_ptr.vmem [resolvable:$true] %s21
      %27 = dma.hbm_to_vmem [thread:$0]  %s2, 16384, %s22, [#allocation3], 256, 256, 16
    $region13: #{tpu_custom_call.1} parent=1 // pred_fallthru
      _
    // Predicated region
    $region14: #{tpu_custom_call.1} parent=1 // pred_check
      _
    $region15: #{tpu_custom_call.1} parent=1 // pred_check_branch
      %29 = sbr.rel (0) target = $region17
    $region16: #{tpu_custom_call.1} parent=1 // pred_region
      %s31 = ssub.s32 8192, 8192
      %32 = vsyncadd [#allocation6], %s31
      %s33 = sshll.u32 [#allocation5], 4
      %s34 = int_to_ptr.vmem [resolvable:$true] %s33
      %39 = dma.hbm_to_vmem [thread:$0]  %s3, 8192, %s34, [#allocation6], 64, 64, 4
    $region17: #{tpu_custom_call.1} parent=1 // pred_fallthru
      _
    // Predicated region
    $region18: #{tpu_custom_call.1} parent=1 // pred_check
      _
    $region19: #{tpu_custom_call.1} parent=1 // pred_check_branch
      %41 = sbr.rel (0) target = $region21
    $region20: #{tpu_custom_call.1} parent=1 // pred_region
      %42 = dma.done [#allocation3], 16384
    $region21: #{tpu_custom_call.1} parent=1 // pred_fallthru
      _
    // Predicated region
    $region22: #{tpu_custom_call.1} parent=1 // pred_check
      _
    $region23: #{tpu_custom_call.1} parent=1 // pred_check_branch
      %44 = sbr.rel (0) target = $region25
    $region24: #{tpu_custom_call.1} parent=1 // pred_region
      %45 = dma.done [#allocation6], 8192
    $region25: #{tpu_custom_call.1} parent=1 // pred_fallthru
      _
    %v47 = vld [vmem:[%s0] sm:$0xf]
    %v48 = vld [vmem:[%s0 + $0x4] sm:$0xf]
    %v49 = vld [vmem:[%s1] sm:$0xff]
    %v50 = vld [vmem:[%s1 + $0x8] sm:$0xff]
    %v51 = vld [vmem:[#allocation2] sm:$0xff]
    %v52 = vld [vmem:[#allocation2 + $0x8] sm:$0xff]
    %v53 = vld [vmem:[#allocation2 + $0x10] sm:$0xff]
    %v54 = vld [vmem:[#allocation2 + $0x18] sm:$0xff]
    %v55 = vld [vmem:[#allocation2 + $0x20] sm:$0xff]
    %v56 = vld [vmem:[#allocation2 + $0x28] sm:$0xff]
    %v57 = vld [vmem:[#allocation2 + $0x30] sm:$0xff]
    %v58 = vld [vmem:[#allocation2 + $0x38] sm:$0xff]
    %v59 = vld [vmem:[#allocation2 + $0x40] sm:$0xff]
    %v60 = vld [vmem:[#allocation2 + $0x48] sm:$0xff]
    %v61 = vld [vmem:[#allocation2 + $0x50] sm:$0xff]
    %v62 = vld [vmem:[#allocation2 + $0x58] sm:$0xff]
    %v63 = vld [vmem:[#allocation2 + $0x60] sm:$0xff]
    %v64 = vld [vmem:[#allocation2 + $0x68] sm:$0xff]
    %v65 = vld [vmem:[#allocation2 + $0x70] sm:$0xff]
    %v66 = vld [vmem:[#allocation2 + $0x78] sm:$0xff]
    %v67 = vld [vmem:[#allocation2 + $0x80] sm:$0xff]
    %v68 = vld [vmem:[#allocation2 + $0x88] sm:$0xff]
    %v69 = vld [vmem:[#allocation2 + $0x90] sm:$0xff]
    %v70 = vld [vmem:[#allocation2 + $0x98] sm:$0xff]
    %v71 = vld [vmem:[#allocation2 + $0xa0] sm:$0xff]
    %v72 = vld [vmem:[#allocation2 + $0xa8] sm:$0xff]
    %v73 = vld [vmem:[#allocation2 + $0xb0] sm:$0xff]
    %v74 = vld [vmem:[#allocation2 + $0xb8] sm:$0xff]
    %v75 = vld [vmem:[#allocation2 + $0xc0] sm:$0xff]
    %v76 = vld [vmem:[#allocation2 + $0xc8] sm:$0xff]
    %v77 = vld [vmem:[#allocation2 + $0xd0] sm:$0xff]
    %v78 = vld [vmem:[#allocation2 + $0xd8] sm:$0xff]
    %v79 = vld [vmem:[#allocation2 + $0xe0] sm:$0xff]
    %v80 = vld [vmem:[#allocation2 + $0xe8] sm:$0xff]
    %v81 = vld [vmem:[#allocation2 + $0xf0] sm:$0xff]
    %v82 = vld [vmem:[#allocation2 + $0xf8] sm:$0xff]
    %v85 = vunpack.c.l.b16 %v47
    %v86 = vunpack.c.l.b16 %v48
    %v87 = vpack.c.b16 %v86, %v85
    %v121 = vunpack.c.l.b16 %v51
    %v122 = vunpack.c.h.b16 %v51
    %v123 = vunpack.c.l.b16 %v52
    %v124 = vunpack.c.h.b16 %v52
    %v125 = vunpack.c.l.b16 %v53
    %v126 = vunpack.c.h.b16 %v53
    %v127 = vunpack.c.l.b16 %v54
    %v128 = vunpack.c.h.b16 %v54
    %v129 = vunpack.c.l.b16 %v55
    %v130 = vunpack.c.h.b16 %v55
    %v131 = vunpack.c.l.b16 %v56
    %v132 = vunpack.c.h.b16 %v56
    %v133 = vunpack.c.l.b16 %v57
    %v134 = vunpack.c.h.b16 %v57
    %v135 = vunpack.c.l.b16 %v58
    %v136 = vunpack.c.h.b16 %v58
    %v137 = vunpack.c.l.b16 %v59
    %v138 = vunpack.c.h.b16 %v59
    %v139 = vunpack.c.l.b16 %v60
    %v140 = vunpack.c.h.b16 %v60
    %v141 = vunpack.c.l.b16 %v61
    %v142 = vunpack.c.h.b16 %v61
    %v143 = vunpack.c.l.b16 %v62
    %v144 = vunpack.c.h.b16 %v62
    %v145 = vunpack.c.l.b16 %v63
    %v146 = vunpack.c.h.b16 %v63
    %v147 = vunpack.c.l.b16 %v64
    %v148 = vunpack.c.h.b16 %v64
    %v149 = vunpack.c.l.b16 %v65
    %v150 = vunpack.c.h.b16 %v65
    %v151 = vunpack.c.l.b16 %v66
    %v152 = vunpack.c.h.b16 %v66
    %v153 = vunpack.c.l.b16 %v67
    %v154 = vunpack.c.h.b16 %v67
    %v155 = vunpack.c.l.b16 %v68
    %v156 = vunpack.c.h.b16 %v68
    %v157 = vunpack.c.l.b16 %v69
    %v158 = vunpack.c.h.b16 %v69
    %v159 = vunpack.c.l.b16 %v70
    %v160 = vunpack.c.h.b16 %v70
    %v161 = vunpack.c.l.b16 %v71
    %v162 = vunpack.c.h.b16 %v71
    %v163 = vunpack.c.l.b16 %v72
    %v164 = vunpack.c.h.b16 %v72
    %v165 = vunpack.c.l.b16 %v73
    %v166 = vunpack.c.h.b16 %v73
    %v167 = vunpack.c.l.b16 %v74
    %v168 = vunpack.c.h.b16 %v74
    %v169 = vunpack.c.l.b16 %v75
    %v170 = vunpack.c.h.b16 %v75
    %v171 = vunpack.c.l.b16 %v76
    %v172 = vunpack.c.h.b16 %v76
    %v173 = vunpack.c.l.b16 %v77
    %v174 = vunpack.c.h.b16 %v77
    %v175 = vunpack.c.l.b16 %v78
    %v176 = vunpack.c.h.b16 %v78
    %v177 = vunpack.c.l.b16 %v79
    %v178 = vunpack.c.h.b16 %v79
    %v179 = vunpack.c.l.b16 %v80
    %v180 = vunpack.c.h.b16 %v80
    %v181 = vunpack.c.l.b16 %v81
    %v182 = vunpack.c.h.b16 %v81
    %v183 = vunpack.c.l.b16 %v82
    %v184 = vunpack.c.h.b16 %v82
    %v185 = vpack.c.b16 %v125, %v121
    %v186 = vpack.c.b16 %v126, %v122
    %v187 = vpack.c.b16 %v127, %v123
    %v188 = vpack.c.b16 %v128, %v124
    %v189 = vpack.c.b16 %v133, %v129
    %v190 = vpack.c.b16 %v134, %v130
    %v191 = vpack.c.b16 %v135, %v131
    %v192 = vpack.c.b16 %v136, %v132
    %v193 = vpack.c.b16 %v141, %v137
    %v194 = vpack.c.b16 %v142, %v138
    %v195 = vpack.c.b16 %v143, %v139
    %v196 = vpack.c.b16 %v144, %v140
    %v197 = vpack.c.b16 %v149, %v145
    %v198 = vpack.c.b16 %v150, %v146
    %v199 = vpack.c.b16 %v151, %v147
    %v200 = vpack.c.b16 %v152, %v148
    %v201 = vpack.c.b16 %v157, %v153
    %v202 = vpack.c.b16 %v158, %v154
    %v203 = vpack.c.b16 %v159, %v155
    %v204 = vpack.c.b16 %v160, %v156
    %v205 = vpack.c.b16 %v165, %v161
    %v206 = vpack.c.b16 %v166, %v162
    %v207 = vpack.c.b16 %v167, %v163
    %v208 = vpack.c.b16 %v168, %v164
    %v209 = vpack.c.b16 %v173, %v169
    %v210 = vpack.c.b16 %v174, %v170
    %v211 = vpack.c.b16 %v175, %v171
    %v212 = vpack.c.b16 %v176, %v172
    %v213 = vpack.c.b16 %v181, %v177
    %v214 = vpack.c.b16 %v182, %v178
    %v215 = vpack.c.b16 %v183, %v179
    %v216 = vpack.c.b16 %v184, %v180
    %249 = vmatprep.subr.bf16.mxu0 %v186
    %250 = vmatpush1.bf16.msra.mxu0 %v185
    %251 = vmatprep.subr.bf16.mxu0 %v190
    %252 = vmatpush1.bf16.msra.mxu0 %v189
    %253 = vmatprep.subr.bf16.mxu0 %v194
    %254 = vmatpush1.bf16.msra.mxu0 %v193
    %255 = vmatprep.subr.bf16.mxu0 %v198
    %256 = vmatpush1.bf16.msra.mxu0 %v197
    %257 = vmatprep.subr.bf16.mxu0 %v202
    %258 = vmatpush1.bf16.msra.mxu0 %v201
    %259 = vmatprep.subr.bf16.mxu0 %v206
    %260 = vmatpush1.bf16.msra.mxu0 %v205
    %261 = vmatprep.subr.bf16.mxu0 %v210
    %262 = vmatpush1.bf16.msra.mxu0 %v209
    %263 = vmatprep.subr.bf16.mxu0 %v214
    %264 = vmatpush1.bf16.msra.mxu0 %v213
    %265 = vmatprep.subr.bf16.mxu0 0
    %266 = vmatpush1.bf16.msra.mxu0 0
    %267 = vmatprep.subr.bf16.mxu0 0
    %268 = vmatpush1.bf16.msra.mxu0 0
    %269 = vmatprep.subr.bf16.mxu0 0
    %270 = vmatpush1.bf16.msra.mxu0 0
    %271 = vmatprep.subr.bf16.mxu0 0
    %272 = vmatpush1.bf16.msra.mxu0 0
    %273 = vmatprep.subr.bf16.mxu0 0
    %274 = vmatpush1.bf16.msra.mxu0 0
    %275 = vmatprep.subr.bf16.mxu0 0
    %276 = vmatpush1.bf16.msra.mxu0 0
    %277 = vmatprep.subr.bf16.mxu0 0
    %278 = vmatpush1.bf16.msra.mxu0 0
    %279 = vmatprep.subr.bf16.mxu0 0
    %280 = vmatpush1.bf16.msra.mxu0 0
    %281 = vmatprep.mubr.bf16.mxu0 0
    %282 = vmatmul.mubr.bf16.gmra.mrb[0].mxu0 %v87
    %v283 = vpop.f32.mrb[0].mxu0
    %v284 = vadd.f32 0.0, %v283
    %v285 = vpop.f32.mrb[0].mxu0
    %v286 = vadd.f32 0.0, %v285
    %v287 = vpop.f32.mrb[0].mxu0
    %v288 = vadd.f32 0.0, %v287
    %v289 = vpop.f32.mrb[0].mxu0
    %v290 = vadd.f32 0.0, %v289
    %291 = vdwg.mxu0
    %292 = vmatprep.subr.bf16.mxu0 %v188
    %293 = vmatpush1.bf16.msra.mxu0 %v187
    %294 = vmatprep.subr.bf16.mxu0 %v192
    %295 = vmatpush1.bf16.msra.mxu0 %v191
    %296 = vmatprep.subr.bf16.mxu0 %v196
    %297 = vmatpush1.bf16.msra.mxu0 %v195
    %298 = vmatprep.subr.bf16.mxu0 %v200
    %299 = vmatpush1.bf16.msra.mxu0 %v199
    %300 = vmatprep.subr.bf16.mxu0 %v204
    %301 = vmatpush1.bf16.msra.mxu0 %v203
    %302 = vmatprep.subr.bf16.mxu0 %v208
    %303 = vmatpush1.bf16.msra.mxu0 %v207
    %304 = vmatprep.subr.bf16.mxu0 %v212
    %305 = vmatpush1.bf16.msra.mxu0 %v211
    %306 = vmatprep.subr.bf16.mxu0 %v216
    %307 = vmatpush1.bf16.msra.mxu0 %v215
    %308 = vmatprep.subr.bf16.mxu0 0
    %309 = vmatpush1.bf16.msra.mxu0 0
    %310 = vmatprep.subr.bf16.mxu0 0
    %311 = vmatpush1.bf16.msra.mxu0 0
    %312 = vmatprep.subr.bf16.mxu0 0
    %313 = vmatpush1.bf16.msra.mxu0 0
    %314 = vmatprep.subr.bf16.mxu0 0
    %315 = vmatpush1.bf16.msra.mxu0 0
    %316 = vmatprep.subr.bf16.mxu0 0
    %317 = vmatpush1.bf16.msra.mxu0 0
    %318 = vmatprep.subr.bf16.mxu0 0
    %319 = vmatpush1.bf16.msra.mxu0 0
    %320 = vmatprep.subr.bf16.mxu0 0
    %321 = vmatpush1.bf16.msra.mxu0 0
    %322 = vmatprep.subr.bf16.mxu0 0
    %323 = vmatpush1.bf16.msra.mxu0 0
    %324 = vmatprep.mubr.bf16.mxu0 0
    %325 = vmatmul.mubr.bf16.gmra.mrb[0].mxu0 %v87
    %v326 = vpop.f32.mrb[0].mxu0
    %v327 = vadd.f32 0.0, %v326
    %v328 = vpop.f32.mrb[0].mxu0
    %v329 = vadd.f32 0.0, %v328
    %v330 = vpop.f32.mrb[0].mxu0
    %v331 = vadd.f32 0.0, %v330
    %v332 = vpop.f32.mrb[0].mxu0
    %v333 = vadd.f32 0.0, %v332
    %334 = vdwg.mxu0
    %v335 = vxor.u32 %v284, 2147483648
    %v336 = vxor.u32 %v286, 2147483648
    %v337 = vxor.u32 %v288, 2147483648
    %v338 = vxor.u32 %v290, 2147483648
    %v339 = vmul.f32 %v335, 1.442695
    %v340 = vpow.pop %v339
    %v341 = vmul.f32 %v336, 1.442695
    %v342 = vpow.pop %v341
    %v343 = vmul.f32 %v337, 1.442695
    %v344 = vpow.pop %v343
    %v345 = vmul.f32 %v338, 1.442695
    %v346 = vpow.pop %v345
    %v347 = vadd.f32 %v340, 1.0
    %v348 = vadd.f32 %v342, 1.0
    %v349 = vadd.f32 %v344, 1.0
    %v350 = vadd.f32 %v346, 1.0
    %v351 = vrcp.pop %v347
    %v352 = vmul.f32 1.0, %v351
    %v353 = vrcp.pop %v348
    %v354 = vmul.f32 1.0, %v353
    %v355 = vrcp.pop %v349
    %v356 = vmul.f32 1.0, %v355
    %v357 = vrcp.pop %v350
    %v358 = vmul.f32 1.0, %v357
    %v359 = vmul.f32 %v284, %v352
    %v360 = vmul.f32 %v286, %v354
    %v361 = vmul.f32 %v288, %v356
    %v362 = vmul.f32 %v290, %v358
    %v363 = vmul.f32 %v359, %v327
    %v364 = vmul.f32 %v360, %v329
    %v365 = vmul.f32 %v361, %v331
    %v366 = vmul.f32 %v362, %v333
    %v367 = vpack.c.bf16 %v365, %v363
    %v368 = vpack.c.bf16 %v366, %v364
    %v369 = vld [vmem:[#allocation5] sm:$0xf]
    %v370 = vld [vmem:[#allocation5 + $0x4] sm:$0xf]
    %v371 = vld [vmem:[#allocation5 + $0x8] sm:$0xf]
    %v372 = vld [vmem:[#allocation5 + $0xc] sm:$0xf]
    %v373 = vld [vmem:[#allocation5 + $0x10] sm:$0xf]
    %v374 = vld [vmem:[#allocation5 + $0x14] sm:$0xf]
    %v375 = vld [vmem:[#allocation5 + $0x18] sm:$0xf]
    %v376 = vld [vmem:[#allocation5 + $0x1c] sm:$0xf]
    %v377 = vld [vmem:[#allocation5 + $0x20] sm:$0xf]
    %v378 = vld [vmem:[#allocation5 + $0x24] sm:$0xf]
    %v379 = vld [vmem:[#allocation5 + $0x28] sm:$0xf]
    %v380 = vld [vmem:[#allocation5 + $0x2c] sm:$0xf]
    %v381 = vld [vmem:[#allocation5 + $0x30] sm:$0xf]
    %v382 = vld [vmem:[#allocation5 + $0x34] sm:$0xf]
    %v383 = vld [vmem:[#allocation5 + $0x38] sm:$0xf]
    %v384 = vld [vmem:[#allocation5 + $0x3c] sm:$0xf]
    %v385 = vld [vmem:[#allocation5 + $0x40] sm:$0xf]
    %v386 = vld [vmem:[#allocation5 + $0x44] sm:$0xf]
    %v387 = vld [vmem:[#allocation5 + $0x48] sm:$0xf]
    %v388 = vld [vmem:[#allocation5 + $0x4c] sm:$0xf]
    %v389 = vld [vmem:[#allocation5 + $0x50] sm:$0xf]
    %v390 = vld [vmem:[#allocation5 + $0x54] sm:$0xf]
    %v391 = vld [vmem:[#allocation5 + $0x58] sm:$0xf]
    %v392 = vld [vmem:[#allocation5 + $0x5c] sm:$0xf]
    %v393 = vld [vmem:[#allocation5 + $0x60] sm:$0xf]
    %v394 = vld [vmem:[#allocation5 + $0x64] sm:$0xf]
    %v395 = vld [vmem:[#allocation5 + $0x68] sm:$0xf]
    %v396 = vld [vmem:[#allocation5 + $0x6c] sm:$0xf]
    %v397 = vld [vmem:[#allocation5 + $0x70] sm:$0xf]
    %v398 = vld [vmem:[#allocation5 + $0x74] sm:$0xf]
    %v399 = vld [vmem:[#allocation5 + $0x78] sm:$0xf]
    %v400 = vld [vmem:[#allocation5 + $0x7c] sm:$0xf]
    %v433 = vunpack.c.l.b16 %v369
    %v434 = vunpack.c.l.b16 %v370
    %v435 = vunpack.c.l.b16 %v371
    %v436 = vunpack.c.l.b16 %v372
    %v437 = vunpack.c.l.b16 %v373
    %v438 = vunpack.c.l.b16 %v374
    %v439 = vunpack.c.l.b16 %v375
    %v440 = vunpack.c.l.b16 %v376
    %v441 = vunpack.c.l.b16 %v377
    %v442 = vunpack.c.l.b16 %v378
    %v443 = vunpack.c.l.b16 %v379
    %v444 = vunpack.c.l.b16 %v380
    %v445 = vunpack.c.l.b16 %v381
    %v446 = vunpack.c.l.b16 %v382
    %v447 = vunpack.c.l.b16 %v383
    %v448 = vunpack.c.l.b16 %v384
    %v449 = vunpack.c.l.b16 %v385
    %v450 = vunpack.c.l.b16 %v386
    %v451 = vunpack.c.l.b16 %v387
    %v452 = vunpack.c.l.b16 %v388
    %v453 = vunpack.c.l.b16 %v389
    %v454 = vunpack.c.l.b16 %v390
    %v455 = vunpack.c.l.b16 %v391
    %v456 = vunpack.c.l.b16 %v392
    %v457 = vunpack.c.l.b16 %v393
    %v458 = vunpack.c.l.b16 %v394
    %v459 = vunpack.c.l.b16 %v395
    %v460 = vunpack.c.l.b16 %v396
    %v461 = vunpack.c.l.b16 %v397
    %v462 = vunpack.c.l.b16 %v398
    %v463 = vunpack.c.l.b16 %v399
    %v464 = vunpack.c.l.b16 %v400
    %v465 = vpack.c.b16 %v434, %v433
    %v466 = vpack.c.b16 %v436, %v435
    %v467 = vpack.c.b16 %v438, %v437
    %v468 = vpack.c.b16 %v440, %v439
    %v469 = vpack.c.b16 %v442, %v441
    %v470 = vpack.c.b16 %v444, %v443
    %v471 = vpack.c.b16 %v446, %v445
    %v472 = vpack.c.b16 %v448, %v447
    %v473 = vpack.c.b16 %v450, %v449
    %v474 = vpack.c.b16 %v452, %v451
    %v475 = vpack.c.b16 %v454, %v453
    %v476 = vpack.c.b16 %v456, %v455
    %v477 = vpack.c.b16 %v458, %v457
    %v478 = vpack.c.b16 %v460, %v459
    %v479 = vpack.c.b16 %v462, %v461
    %v480 = vpack.c.b16 %v464, %v463
    %497 = vmatprep.subr.bf16.mxu0 0
    %498 = vmatpush1.bf16.msra.mxu0 %v465
    %499 = vmatprep.subr.bf16.mxu0 0
    %500 = vmatpush1.bf16.msra.mxu0 %v466
    %501 = vmatprep.subr.bf16.mxu0 0
    %502 = vmatpush1.bf16.msra.mxu0 %v467
    %503 = vmatprep.subr.bf16.mxu0 0
    %504 = vmatpush1.bf16.msra.mxu0 %v468
    %505 = vmatprep.subr.bf16.mxu0 0
    %506 = vmatpush1.bf16.msra.mxu0 %v469
    %507 = vmatprep.subr.bf16.mxu0 0
    %508 = vmatpush1.bf16.msra.mxu0 %v470
    %509 = vmatprep.subr.bf16.mxu0 0
    %510 = vmatpush1.bf16.msra.mxu0 %v471
    %511 = vmatprep.subr.bf16.mxu0 0
    %512 = vmatpush1.bf16.msra.mxu0 %v472
    %513 = vmatprep.subr.bf16.mxu0 0
    %514 = vmatpush1.bf16.msra.mxu0 %v473
    %515 = vmatprep.subr.bf16.mxu0 0
    %516 = vmatpush1.bf16.msra.mxu0 %v474
    %517 = vmatprep.subr.bf16.mxu0 0
    %518 = vmatpush1.bf16.msra.mxu0 %v475
    %519 = vmatprep.subr.bf16.mxu0 0
    %520 = vmatpush1.bf16.msra.mxu0 %v476
    %521 = vmatprep.subr.bf16.mxu0 0
    %522 = vmatpush1.bf16.msra.mxu0 %v477
    %523 = vmatprep.subr.bf16.mxu0 0
    %524 = vmatpush1.bf16.msra.mxu0 %v478
    %525 = vmatprep.subr.bf16.mxu0 0
    %526 = vmatpush1.bf16.msra.mxu0 %v479
    %527 = vmatprep.subr.bf16.mxu0 0
    %528 = vmatpush1.bf16.msra.mxu0 %v480
    %529 = vmatprep.mubr.bf16.mxu0 %v368
    %530 = vmatmul.mubr.bf16.gmra.mrb[0].mxu0 %v367
    %v531 = vpop.f32.mrb[0].mxu0
    %v532 = vadd.f32 0.0, %v531
    %v533 = vpop.f32.mrb[0].mxu0
    %v534 = vpop.f32.mrb[0].mxu0
    %v535 = vadd.f32 0.0, %v534
    %v536 = vpop.f32.mrb[0].mxu0
    %537 = vdwg.mxu0
    %539 = vset.pattern.permute.xlu0 0
    %540 = vperm.xlu0 %539, %v49
    %v541 = vpop.permute.xlu0 %540
    %544 = vset.pattern.permute.xlu0 0
    %545 = vperm.xlu0 %544, %v50
    %v546 = vpop.permute.xlu0 %545
    %v548 = vmul.f32 %v532, %v541
    %v549 = vmul.f32 %v535, %v546
    %v550 = vadd.f32 %v548, 0.0
    %v551 = vadd.f32 %v549, 0.0
    %s552 = scalar_lea.vmem [#allocation2], 256
    %v553 = vld [vmem:[%s552] sm:$0xff]
    %v554 = vld [vmem:[%s552 + $0x8] sm:$0xff]
    %v555 = vld [vmem:[%s552 + $0x10] sm:$0xff]
    %v556 = vld [vmem:[%s552 + $0x18] sm:$0xff]
    %v557 = vld [vmem:[%s552 + $0x20] sm:$0xff]
    %v558 = vld [vmem:[%s552 + $0x28] sm:$0xff]
    %v559 = vld [vmem:[%s552 + $0x30] sm:$0xff]
    %v560 = vld [vmem:[%s552 + $0x38] sm:$0xff]
    %v561 = vld [vmem:[%s552 + $0x40] sm:$0xff]
    %v562 = vld [vmem:[%s552 + $0x48] sm:$0xff]
    %v563 = vld [vmem:[%s552 + $0x50] sm:$0xff]
    %v564 = vld [vmem:[%s552 + $0x58] sm:$0xff]
    %v565 = vld [vmem:[%s552 + $0x60] sm:$0xff]
    %v566 = vld [vmem:[%s552 + $0x68] sm:$0xff]
    %v567 = vld [vmem:[%s552 + $0x70] sm:$0xff]
    %v568 = vld [vmem:[%s552 + $0x78] sm:$0xff]
    %v569 = vld [vmem:[%s552 + $0x80] sm:$0xff]
    %v570 = vld [vmem:[%s552 + $0x88] sm:$0xff]
    %v571 = vld [vmem:[%s552 + $0x90] sm:$0xff]
    %v572 = vld [vmem:[%s552 + $0x98] sm:$0xff]
    %v573 = vld [vmem:[%s552 + $0xa0] sm:$0xff]
    %v574 = vld [vmem:[%s552 + $0xa8] sm:$0xff]
    %v575 = vld [vmem:[%s552 + $0xb0] sm:$0xff]
    %v576 = vld [vmem:[%s552 + $0xb8] sm:$0xff]
    %v577 = vld [vmem:[%s552 + $0xc0] sm:$0xff]
    %v578 = vld [vmem:[%s552 + $0xc8] sm:$0xff]
    %v579 = vld [vmem:[%s552 + $0xd0] sm:$0xff]
    %v580 = vld [vmem:[%s552 + $0xd8] sm:$0xff]
    %v581 = vld [vmem:[%s552 + $0xe0] sm:$0xff]
    %v582 = vld [vmem:[%s552 + $0xe8] sm:$0xff]
    %v583 = vld [vmem:[%s552 + $0xf0] sm:$0xff]
    %v584 = vld [vmem:[%s552 + $0xf8] sm:$0xff]
    %v617 = vunpack.c.l.b16 %v553
    %v618 = vunpack.c.h.b16 %v553
    %v619 = vunpack.c.l.b16 %v554
    %v620 = vunpack.c.h.b16 %v554
    %v621 = vunpack.c.l.b16 %v555
    %v622 = vunpack.c.h.b16 %v555
    %v623 = vunpack.c.l.b16 %v556
    %v624 = vunpack.c.h.b16 %v556
    %v625 = vunpack.c.l.b16 %v557
    %v626 = vunpack.c.h.b16 %v557
    %v627 = vunpack.c.l.b16 %v558
    %v628 = vunpack.c.h.b16 %v558
    %v629 = vunpack.c.l.b16 %v559
    %v630 = vunpack.c.h.b16 %v559
    %v631 = vunpack.c.l.b16 %v560
    %v632 = vunpack.c.h.b16 %v560
    %v633 = vunpack.c.l.b16 %v561
    %v634 = vunpack.c.h.b16 %v561
    %v635 = vunpack.c.l.b16 %v562
    %v636 = vunpack.c.h.b16 %v562
    %v637 = vunpack.c.l.b16 %v563
    %v638 = vunpack.c.h.b16 %v563
    %v639 = vunpack.c.l.b16 %v564
    %v640 = vunpack.c.h.b16 %v564
    %v641 = vunpack.c.l.b16 %v565
    %v642 = vunpack.c.h.b16 %v565
    %v643 = vunpack.c.l.b16 %v566
    %v644 = vunpack.c.h.b16 %v566
    %v645 = vunpack.c.l.b16 %v567
    %v646 = vunpack.c.h.b16 %v567
    %v647 = vunpack.c.l.b16 %v568
    %v648 = vunpack.c.h.b16 %v568
    %v649 = vunpack.c.l.b16 %v569
    %v650 = vunpack.c.h.b16 %v569
    %v651 = vunpack.c.l.b16 %v570
    %v652 = vunpack.c.h.b16 %v570
    %v653 = vunpack.c.l.b16 %v571
    %v654 = vunpack.c.h.b16 %v571
    %v655 = vunpack.c.l.b16 %v572
    %v656 = vunpack.c.h.b16 %v572
    %v657 = vunpack.c.l.b16 %v573
    %v658 = vunpack.c.h.b16 %v573
    %v659 = vunpack.c.l.b16 %v574
    %v660 = vunpack.c.h.b16 %v574
    %v661 = vunpack.c.l.b16 %v575
    %v662 = vunpack.c.h.b16 %v575
    %v663 = vunpack.c.l.b16 %v576
    %v664 = vunpack.c.h.b16 %v576
    %v665 = vunpack.c.l.b16 %v577
    %v666 = vunpack.c.h.b16 %v577
    %v667 = vunpack.c.l.b16 %v578
    %v668 = vunpack.c.h.b16 %v578
    %v669 = vunpack.c.l.b16 %v579
    %v670 = vunpack.c.h.b16 %v579
    %v671 = vunpack.c.l.b16 %v580
    %v672 = vunpack.c.h.b16 %v580
    %v673 = vunpack.c.l.b16 %v581
    %v674 = vunpack.c.h.b16 %v581
    %v675 = vunpack.c.l.b16 %v582
    %v676 = vunpack.c.h.b16 %v582
    %v677 = vunpack.c.l.b16 %v583
    %v678 = vunpack.c.h.b16 %v583
    %v679 = vunpack.c.l.b16 %v584
    %v680 = vunpack.c.h.b16 %v584
    %v681 = vpack.c.b16 %v621, %v617
    %v682 = vpack.c.b16 %v622, %v618
    %v683 = vpack.c.b16 %v623, %v619
    %v684 = vpack.c.b16 %v624, %v620
    %v685 = vpack.c.b16 %v629, %v625
    %v686 = vpack.c.b16 %v630, %v626
    %v687 = vpack.c.b16 %v631, %v627
    %v688 = vpack.c.b16 %v632, %v628
    %v689 = vpack.c.b16 %v637, %v633
    %v690 = vpack.c.b16 %v638, %v634
    %v691 = vpack.c.b16 %v639, %v635
    %v692 = vpack.c.b16 %v640, %v636
    %v693 = vpack.c.b16 %v645, %v641
    %v694 = vpack.c.b16 %v646, %v642
    %v695 = vpack.c.b16 %v647, %v643
    %v696 = vpack.c.b16 %v648, %v644
    %v697 = vpack.c.b16 %v653, %v649
    %v698 = vpack.c.b16 %v654, %v650
    %v699 = vpack.c.b16 %v655, %v651
    %v700 = vpack.c.b16 %v656, %v652
    %v701 = vpack.c.b16 %v661, %v657
    %v702 = vpack.c.b16 %v662, %v658
    %v703 = vpack.c.b16 %v663, %v659
    %v704 = vpack.c.b16 %v664, %v660
    %v705 = vpack.c.b16 %v669, %v665
    %v706 = vpack.c.b16 %v670, %v666
    %v707 = vpack.c.b16 %v671, %v667
    %v708 = vpack.c.b16 %v672, %v668
    %v709 = vpack.c.b16 %v677, %v673
    %v710 = vpack.c.b16 %v678, %v674
    %v711 = vpack.c.b16 %v679, %v675
    %v712 = vpack.c.b16 %v680, %v676
    %745 = vmatprep.subr.bf16.mxu0 %v682
    %746 = vmatpush1.bf16.msra.mxu0 %v681
    %747 = vmatprep.subr.bf16.mxu0 %v686
    %748 = vmatpush1.bf16.msra.mxu0 %v685
    %749 = vmatprep.subr.bf16.mxu0 %v690
    %750 = vmatpush1.bf16.msra.mxu0 %v689
    %751 = vmatprep.subr.bf16.mxu0 %v694
    %752 = vmatpush1.bf16.msra.mxu0 %v693
    %753 = vmatprep.subr.bf16.mxu0 %v698
    %754 = vmatpush1.bf16.msra.mxu0 %v697
    %755 = vmatprep.subr.bf16.mxu0 %v702
    %756 = vmatpush1.bf16.msra.mxu0 %v701
    %757 = vmatprep.subr.bf16.mxu0 %v706
    %758 = vmatpush1.bf16.msra.mxu0 %v705
    %759 = vmatprep.subr.bf16.mxu0 %v710
    %760 = vmatpush1.bf16.msra.mxu0 %v709
    %761 = vmatprep.subr.bf16.mxu0 0
    %762 = vmatpush1.bf16.msra.mxu0 0
    %763 = vmatprep.subr.bf16.mxu0 0
    %764 = vmatpush1.bf16.msra.mxu0 0
    %765 = vmatprep.subr.bf16.mxu0 0
    %766 = vmatpush1.bf16.msra.mxu0 0
    %767 = vmatprep.subr.bf16.mxu0 0
    %768 = vmatpush1.bf16.msra.mxu0 0
    %769 = vmatprep.subr.bf16.mxu0 0
    %770 = vmatpush1.bf16.msra.mxu0 0
    %771 = vmatprep.subr.bf16.mxu0 0
    %772 = vmatpush1.bf16.msra.mxu0 0
    %773 = vmatprep.subr.bf16.mxu0 0
    %774 = vmatpush1.bf16.msra.mxu0 0
    %775 = vmatprep.subr.bf16.mxu0 0
    %776 = vmatpush1.bf16.msra.mxu0 0
    %777 = vmatprep.mubr.bf16.mxu0 0
    %778 = vmatmul.mubr.bf16.gmra.mrb[0].mxu0 %v87
    %v779 = vpop.f32.mrb[0].mxu0
    %v780 = vadd.f32 0.0, %v779
    %v781 = vpop.f32.mrb[0].mxu0
    %v782 = vadd.f32 0.0, %v781
    %v783 = vpop.f32.mrb[0].mxu0
    %v784 = vadd.f32 0.0, %v783
    %v785 = vpop.f32.mrb[0].mxu0
    %v786 = vadd.f32 0.0, %v785
    %787 = vdwg.mxu0
    %788 = vmatprep.subr.bf16.mxu0 %v684
    %789 = vmatpush1.bf16.msra.mxu0 %v683
    %790 = vmatprep.subr.bf16.mxu0 %v688
    %791 = vmatpush1.bf16.msra.mxu0 %v687
    %792 = vmatprep.subr.bf16.mxu0 %v692
    %793 = vmatpush1.bf16.msra.mxu0 %v691
    %794 = vmatprep.subr.bf16.mxu0 %v696
    %795 = vmatpush1.bf16.msra.mxu0 %v695
    %796 = vmatprep.subr.bf16.mxu0 %v700
    %797 = vmatpush1.bf16.msra.mxu0 %v699
    %798 = vmatprep.subr.bf16.mxu0 %v704
    %799 = vmatpush1.bf16.msra.mxu0 %v703
    %800 = vmatprep.subr.bf16.mxu0 %v708
    %801 = vmatpush1.bf16.msra.mxu0 %v707
    %802 = vmatprep.subr.bf16.mxu0 %v712
    %803 = vmatpush1.bf16.msra.mxu0 %v711
    %804 = vmatprep.subr.bf16.mxu0 0
    %805 = vmatpush1.bf16.msra.mxu0 0
    %806 = vmatprep.subr.bf16.mxu0 0
    %807 = vmatpush1.bf16.msra.mxu0 0
    %808 = vmatprep.subr.bf16.mxu0 0
    %809 = vmatpush1.bf16.msra.mxu0 0
    %810 = vmatprep.subr.bf16.mxu0 0
    %811 = vmatpush1.bf16.msra.mxu0 0
    %812 = vmatprep.subr.bf16.mxu0 0
    %813 = vmatpush1.bf16.msra.mxu0 0
    %814 = vmatprep.subr.bf16.mxu0 0
    %815 = vmatpush1.bf16.msra.mxu0 0
    %816 = vmatprep.subr.bf16.mxu0 0
    %817 = vmatpush1.bf16.msra.mxu0 0
    %818 = vmatprep.subr.bf16.mxu0 0
    %819 = vmatpush1.bf16.msra.mxu0 0
    %820 = vmatprep.mubr.bf16.mxu0 0
    %821 = vmatmul.mubr.bf16.gmra.mrb[0].mxu0 %v87
    %v822 = vpop.f32.mrb[0].mxu0
    %v823 = vadd.f32 0.0, %v822
    %v824 = vpop.f32.mrb[0].mxu0
    %v825 = vadd.f32 0.0, %v824
    %v826 = vpop.f32.mrb[0].mxu0
    %v827 = vadd.f32 0.0, %v826
    %v828 = vpop.f32.mrb[0].mxu0
    %v829 = vadd.f32 0.0, %v828
    %830 = vdwg.mxu0
    %v831 = vxor.u32 %v780, 2147483648
    %v832 = vxor.u32 %v782, 2147483648
    %v833 = vxor.u32 %v784, 2147483648
    %v834 = vxor.u32 %v786, 2147483648
    %v835 = vmul.f32 %v831, 1.442695
    %v836 = vpow.pop %v835
    %v837 = vmul.f32 %v832, 1.442695
    %v838 = vpow.pop %v837
    %v839 = vmul.f32 %v833, 1.442695
    %v840 = vpow.pop %v839
    %v841 = vmul.f32 %v834, 1.442695
    %v842 = vpow.pop %v841
    %v843 = vadd.f32 %v836, 1.0
    %v844 = vadd.f32 %v838, 1.0
    %v845 = vadd.f32 %v840, 1.0
    %v846 = vadd.f32 %v842, 1.0
    %v847 = vrcp.pop %v843
    %v848 = vmul.f32 1.0, %v847
    %v849 = vrcp.pop %v844
    %v850 = vmul.f32 1.0, %v849
    %v851 = vrcp.pop %v845
    %v852 = vmul.f32 1.0, %v851
    %v853 = vrcp.pop %v846
    %v854 = vmul.f32 1.0, %v853
    %v855 = vmul.f32 %v780, %v848
    %v856 = vmul.f32 %v782, %v850
    %v857 = vmul.f32 %v784, %v852
    %v858 = vmul.f32 %v786, %v854
    %v859 = vmul.f32 %v855, %v823
    %v860 = vmul.f32 %v856, %v825
    %v861 = vmul.f32 %v857, %v827
    %v862 = vmul.f32 %v858, %v829
    %v863 = vpack.c.bf16 %v861, %v859
    %v864 = vpack.c.bf16 %v862, %v860
    %s865 = scalar_lea.vmem [#allocation5], 128
    %v866 = vld [vmem:[%s865] sm:$0xf]
    %v867 = vld [vmem:[%s865 + $0x4] sm:$0xf]
    %v868 = vld [vmem:[%s865 + $0x8] sm:$0xf]
    %v869 = vld [vmem:[%s865 + $0xc] sm:$0xf]
    %v870 = vld [vmem:[%s865 + $0x10] sm:$0xf]
    %v871 = vld [vmem:[%s865 + $0x14] sm:$0xf]
    %v872 = vld [vmem:[%s865 + $0x18] sm:$0xf]
    %v873 = vld [vmem:[%s865 + $0x1c] sm:$0xf]
    %v874 = vld [vmem:[%s865 + $0x20] sm:$0xf]
    %v875 = vld [vmem:[%s865 + $0x24] sm:$0xf]
    %v876 = vld [vmem:[%s865 + $0x28] sm:$0xf]
    %v877 = vld [vmem:[%s865 + $0x2c] sm:$0xf]
    %v878 = vld [vmem:[%s865 + $0x30] sm:$0xf]
    %v879 = vld [vmem:[%s865 + $0x34] sm:$0xf]
    %v880 = vld [vmem:[%s865 + $0x38] sm:$0xf]
    %v881 = vld [vmem:[%s865 + $0x3c] sm:$0xf]
    %v882 = vld [vmem:[%s865 + $0x40] sm:$0xf]
    %v883 = vld [vmem:[%s865 + $0x44] sm:$0xf]
    %v884 = vld [vmem:[%s865 + $0x48] sm:$0xf]
    %v885 = vld [vmem:[%s865 + $0x4c] sm:$0xf]
    %v886 = vld [vmem:[%s865 + $0x50] sm:$0xf]
    %v887 = vld [vmem:[%s865 + $0x54] sm:$0xf]
    %v888 = vld [vmem:[%s865 + $0x58] sm:$0xf]
    %v889 = vld [vmem:[%s865 + $0x5c] sm:$0xf]
    %v890 = vld [vmem:[%s865 + $0x60] sm:$0xf]
    %v891 = vld [vmem:[%s865 + $0x64] sm:$0xf]
    %v892 = vld [vmem:[%s865 + $0x68] sm:$0xf]
    %v893 = vld [vmem:[%s865 + $0x6c] sm:$0xf]
    %v894 = vld [vmem:[%s865 + $0x70] sm:$0xf]
    %v895 = vld [vmem:[%s865 + $0x74] sm:$0xf]
    %v896 = vld [vmem:[%s865 + $0x78] sm:$0xf]
    %v897 = vld [vmem:[%s865 + $0x7c] sm:$0xf]
    %v930 = vunpack.c.l.b16 %v866
    %v931 = vunpack.c.l.b16 %v867
    %v932 = vunpack.c.l.b16 %v868
    %v933 = vunpack.c.l.b16 %v869
    %v934 = vunpack.c.l.b16 %v870
    %v935 = vunpack.c.l.b16 %v871
    %v936 = vunpack.c.l.b16 %v872
    %v937 = vunpack.c.l.b16 %v873
    %v938 = vunpack.c.l.b16 %v874
    %v939 = vunpack.c.l.b16 %v875
    %v940 = vunpack.c.l.b16 %v876
    %v941 = vunpack.c.l.b16 %v877
    %v942 = vunpack.c.l.b16 %v878
    %v943 = vunpack.c.l.b16 %v879
    %v944 = vunpack.c.l.b16 %v880
    %v945 = vunpack.c.l.b16 %v881
    %v946 = vunpack.c.l.b16 %v882
    %v947 = vunpack.c.l.b16 %v883
    %v948 = vunpack.c.l.b16 %v884
    %v949 = vunpack.c.l.b16 %v885
    %v950 = vunpack.c.l.b16 %v886
    %v951 = vunpack.c.l.b16 %v887
    %v952 = vunpack.c.l.b16 %v888
    %v953 = vunpack.c.l.b16 %v889
    %v954 = vunpack.c.l.b16 %v890
    %v955 = vunpack.c.l.b16 %v891
    %v956 = vunpack.c.l.b16 %v892
    %v957 = vunpack.c.l.b16 %v893
    %v958 = vunpack.c.l.b16 %v894
    %v959 = vunpack.c.l.b16 %v895
    %v960 = vunpack.c.l.b16 %v896
    %v961 = vunpack.c.l.b16 %v897
    %v962 = vpack.c.b16 %v931, %v930
    %v963 = vpack.c.b16 %v933, %v932
    %v964 = vpack.c.b16 %v935, %v934
    %v965 = vpack.c.b16 %v937, %v936
    %v966 = vpack.c.b16 %v939, %v938
    %v967 = vpack.c.b16 %v941, %v940
    %v968 = vpack.c.b16 %v943, %v942
    %v969 = vpack.c.b16 %v945, %v944
    %v970 = vpack.c.b16 %v947, %v946
    %v971 = vpack.c.b16 %v949, %v948
    %v972 = vpack.c.b16 %v951, %v950
    %v973 = vpack.c.b16 %v953, %v952
    %v974 = vpack.c.b16 %v955, %v954
    %v975 = vpack.c.b16 %v957, %v956
    %v976 = vpack.c.b16 %v959, %v958
    %v977 = vpack.c.b16 %v961, %v960
    %994 = vmatprep.subr.bf16.mxu0 0
    %995 = vmatpush1.bf16.msra.mxu0 %v962
    %996 = vmatprep.subr.bf16.mxu0 0
    %997 = vmatpush1.bf16.msra.mxu0 %v963
    %998 = vmatprep.subr.bf16.mxu0 0
    %999 = vmatpush1.bf16.msra.mxu0 %v964
    %1000 = vmatprep.subr.bf16.mxu0 0
    %1001 = vmatpush1.bf16.msra.mxu0 %v965
    %1002 = vmatprep.subr.bf16.mxu0 0
    %1003 = vmatpush1.bf16.msra.mxu0 %v966
    %1004 = vmatprep.subr.bf16.mxu0 0
    %1005 = vmatpush1.bf16.msra.mxu0 %v967
    %1006 = vmatprep.subr.bf16.mxu0 0
    %1007 = vmatpush1.bf16.msra.mxu0 %v968
    %1008 = vmatprep.subr.bf16.mxu0 0
    %1009 = vmatpush1.bf16.msra.mxu0 %v969
    %1010 = vmatprep.subr.bf16.mxu0 0
    %1011 = vmatpush1.bf16.msra.mxu0 %v970
    %1012 = vmatprep.subr.bf16.mxu0 0
    %1013 = vmatpush1.bf16.msra.mxu0 %v971
    %1014 = vmatprep.subr.bf16.mxu0 0
    %1015 = vmatpush1.bf16.msra.mxu0 %v972
    %1016 = vmatprep.subr.bf16.mxu0 0
    %1017 = vmatpush1.bf16.msra.mxu0 %v973
    %1018 = vmatprep.subr.bf16.mxu0 0
    %1019 = vmatpush1.bf16.msra.mxu0 %v974
    %1020 = vmatprep.subr.bf16.mxu0 0
    %1021 = vmatpush1.bf16.msra.mxu0 %v975
    %1022 = vmatprep.subr.bf16.mxu0 0
    %1023 = vmatpush1.bf16.msra.mxu0 %v976
    %1024 = vmatprep.subr.bf16.mxu0 0
    %1025 = vmatpush1.bf16.msra.mxu0 %v977
    %1026 = vmatprep.mubr.bf16.mxu0 %v864
    %1027 = vmatmul.mubr.bf16.gmra.mrb[0].mxu0 %v863
    %v1028 = vpop.f32.mrb[0].mxu0
    %v1029 = vadd.f32 0.0, %v1028
    %v1030 = vpop.f32.mrb[0].mxu0
    %v1031 = vpop.f32.mrb[0].mxu0
    %v1032 = vadd.f32 0.0, %v1031
    %v1033 = vpop.f32.mrb[0].mxu0
    %1034 = vdwg.mxu0
    %1035 = vset.pattern.permute.xlu0 1
    %1036 = vperm.xlu0 %1035, %v49
    %v1037 = vpop.permute.xlu0 %1036
    %1039 = vset.pattern.permute.xlu0 1
    %1040 = vperm.xlu0 %1039, %v50
    %v1041 = vpop.permute.xlu0 %1040
    %v1043 = vmul.f32 %v1029, %v1037
    %v1044 = vmul.f32 %v1032, %v1041
    %v1045 = vadd.f32 %v550, %v1043
    %v1046 = vadd.f32 %v551, %v1044
    %s1047 = scalar_lea.vmem [#allocation2], 512
    %v1048 = vld [vmem:[%s1047] sm:$0xff]
    %v1049 = vld [vmem:[%s1047 + $0x8] sm:$0xff]
    %v1050 = vld [vmem:[%s1047 + $0x10] sm:$0xff]
    %v1051 = vld [vmem:[%s1047 + $0x18] sm:$0xff]
    %v1052 = vld [vmem:[%s1047 + $0x20] sm:$0xff]
    %v1053 = vld [vmem:[%s1047 + $0x28] sm:$0xff]
    %v1054 = vld [vmem:[%s1047 + $0x30] sm:$0xff]
    %v1055 = vld [vmem:[%s1047 + $0x38] sm:$0xff]
    %v1056 = vld [vmem:[%s1047 + $0x40] sm:$0xff]
    %v1057 = vld [vmem:[%s1047 + $0x48] sm:$0xff]
    %v1058 = vld [vmem:[%s1047 + $0x50] sm:$0xff]
    %v1059 = vld [vmem:[%s1047 + $0x58] sm:$0xff]
    %v1060 = vld [vmem:[%s1047 + $0x60] sm:$0xff]
    %v1061 = vld [vmem:[%s1047 + $0x68] sm:$0xff]
    %v1062 = vld [vmem:[%s1047 + $0x70] sm:$0xff]
    %v1063 = vld [vmem:[%s1047 + $0x78] sm:$0xff]
    %v1064 = vld [vmem:[%s1047 + $0x80] sm:$0xff]
    %v1065 = vld [vmem:[%s1047 + $0x88] sm:$0xff]
    %v1066 = vld [vmem:[%s1047 + $0x90] sm:$0xff]
    %v1067 = vld [vmem:[%s1047 + $0x98] sm:$0xff]
    %v1068 = vld [vmem:[%s1047 + $0xa0] sm:$0xff]
    %v1069 = vld [vmem:[%s1047 + $0xa8] sm:$0xff]
    %v1070 = vld [vmem:[%s1047 + $0xb0] sm:$0xff]
    %v1071 = vld [vmem:[%s1047 + $0xb8] sm:$0xff]
    %v1072 = vld [vmem:[%s1047 + $0xc0] sm:$0xff]
    %v1073 = vld [vmem:[%s1047 + $0xc8] sm:$0xff]
    %v1074 = vld [vmem:[%s1047 + $0xd0] sm:$0xff]
    %v1075 = vld [vmem:[%s1047 + $0xd8] sm:$0xff]
    %v1076 = vld [vmem:[%s1047 + $0xe0] sm:$0xff]
    %v1077 = vld [vmem:[%s1047 + $0xe8] sm:$0xff]
    %v1078 = vld [vmem:[%s1047 + $0xf0] sm:$0xff]
    %v1079 = vld [vmem:[%s1047 + $0xf8] sm:$0xff]
    %v1112 = vunpack.c.l.b16 %v1048
    %v1113 = vunpack.c.h.b16 %v1048
    %v1114 = vunpack.c.l.b16 %v1049
    %v1115 = vunpack.c.h.b16 %v1049
    %v1116 = vunpack.c.l.b16 %v1050
    %v1117 = vunpack.c.h.b16 %v1050
    %v1118 = vunpack.c.l.b16 %v1051
    %v1119 = vunpack.c.h.b16 %v1051
    %v1120 = vunpack.c.l.b16 %v1052
    %v1121 = vunpack.c.h.b16 %v1052
    %v1122 = vunpack.c.l.b16 %v1053
    %v1123 = vunpack.c.h.b16 %v1053
    %v1124 = vunpack.c.l.b16 %v1054
    %v1125 = vunpack.c.h.b16 %v1054
    %v1126 = vunpack.c.l.b16 %v1055
    %v1127 = vunpack.c.h.b16 %v1055
    %v1128 = vunpack.c.l.b16 %v1056
    %v1129 = vunpack.c.h.b16 %v1056
    %v1130 = vunpack.c.l.b16 %v1057
    %v1131 = vunpack.c.h.b16 %v1057
    %v1132 = vunpack.c.l.b16 %v1058
    %v1133 = vunpack.c.h.b16 %v1058
    %v1134 = vunpack.c.l.b16 %v1059
    %v1135 = vunpack.c.h.b16 %v1059
    %v1136 = vunpack.c.l.b16 %v1060
    %v1137 = vunpack.c.h.b16 %v1060
    %v1138 = vunpack.c.l.b16 %v1061
    %v1139 = vunpack.c.h.b16 %v1061
    %v1140 = vunpack.c.l.b16 %v1062
    %v1141 = vunpack.c.h.b16 %v1062
    %v1142 = vunpack.c.l.b16 %v1063
    %v1143 = vunpack.c.h.b16 %v1063
    %v1144 = vunpack.c.l.b16 %v1064
    %v1145 = vunpack.c.h.b16 %v1064
    %v1146 = vunpack.c.l.b16 %v1065
    %v1147 = vunpack.c.h.b16 %v1065
    %v1148 = vunpack.c.l.b16 %v1066
    %v1149 = vunpack.c.h.b16 %v1066
    %v1150 = vunpack.c.l.b16 %v1067
    %v1151 = vunpack.c.h.b16 %v1067
    %v1152 = vunpack.c.l.b16 %v1068
    %v1153 = vunpack.c.h.b16 %v1068
    %v1154 = vunpack.c.l.b16 %v1069
    %v1155 = vunpack.c.h.b16 %v1069
    %v1156 = vunpack.c.l.b16 %v1070
    %v1157 = vunpack.c.h.b16 %v1070
    %v1158 = vunpack.c.l.b16 %v1071
    %v1159 = vunpack.c.h.b16 %v1071
    %v1160 = vunpack.c.l.b16 %v1072
    %v1161 = vunpack.c.h.b16 %v1072
    %v1162 = vunpack.c.l.b16 %v1073
    %v1163 = vunpack.c.h.b16 %v1073
    %v1164 = vunpack.c.l.b16 %v1074
    %v1165 = vunpack.c.h.b16 %v1074
    %v1166 = vunpack.c.l.b16 %v1075
    %v1167 = vunpack.c.h.b16 %v1075
    %v1168 = vunpack.c.l.b16 %v1076
    %v1169 = vunpack.c.h.b16 %v1076
    %v1170 = vunpack.c.l.b16 %v1077
    %v1171 = vunpack.c.h.b16 %v1077
    %v1172 = vunpack.c.l.b16 %v1078
    %v1173 = vunpack.c.h.b16 %v1078
    %v1174 = vunpack.c.l.b16 %v1079
    %v1175 = vunpack.c.h.b16 %v1079
    %v1176 = vpack.c.b16 %v1116, %v1112
    %v1177 = vpack.c.b16 %v1117, %v1113
    %v1178 = vpack.c.b16 %v1118, %v1114
    %v1179 = vpack.c.b16 %v1119, %v1115
    %v1180 = vpack.c.b16 %v1124, %v1120
    %v1181 = vpack.c.b16 %v1125, %v1121
    %v1182 = vpack.c.b16 %v1126, %v1122
    %v1183 = vpack.c.b16 %v1127, %v1123
    %v1184 = vpack.c.b16 %v1132, %v1128
    %v1185 = vpack.c.b16 %v1133, %v1129
    %v1186 = vpack.c.b16 %v1134, %v1130
    %v1187 = vpack.c.b16 %v1135, %v1131
    %v1188 = vpack.c.b16 %v1140, %v1136
    %v1189 = vpack.c.b16 %v1141, %v1137
    %v1190 = vpack.c.b16 %v1142, %v1138
    %v1191 = vpack.c.b16 %v1143, %v1139
    %v1192 = vpack.c.b16 %v1148, %v1144
    %v1193 = vpack.c.b16 %v1149, %v1145
    %v1194 = vpack.c.b16 %v1150, %v1146
    %v1195 = vpack.c.b16 %v1151, %v1147
    %v1196 = vpack.c.b16 %v1156, %v1152
    %v1197 = vpack.c.b16 %v1157, %v1153
    %v1198 = vpack.c.b16 %v1158, %v1154
    %v1199 = vpack.c.b16 %v1159, %v1155
    %v1200 = vpack.c.b16 %v1164, %v1160
    %v1201 = vpack.c.b16 %v1165, %v1161
    %v1202 = vpack.c.b16 %v1166, %v1162
    %v1203 = vpack.c.b16 %v1167, %v1163
    %v1204 = vpack.c.b16 %v1172, %v1168
    %v1205 = vpack.c.b16 %v1173, %v1169
    %v1206 = vpack.c.b16 %v1174, %v1170
    %v1207 = vpack.c.b16 %v1175, %v1171
    %1240 = vmatprep.subr.bf16.mxu0 %v1177
    %1241 = vmatpush1.bf16.msra.mxu0 %v1176
    %1242 = vmatprep.subr.bf16.mxu0 %v1181
    %1243 = vmatpush1.bf16.msra.mxu0 %v1180
    %1244 = vmatprep.subr.bf16.mxu0 %v1185
    %1245 = vmatpush1.bf16.msra.mxu0 %v1184
    %1246 = vmatprep.subr.bf16.mxu0 %v1189
    %1247 = vmatpush1.bf16.msra.mxu0 %v1188
    %1248 = vmatprep.subr.bf16.mxu0 %v1193
    %1249 = vmatpush1.bf16.msra.mxu0 %v1192
    %1250 = vmatprep.subr.bf16.mxu0 %v1197
    %1251 = vmatpush1.bf16.msra.mxu0 %v1196
    %1252 = vmatprep.subr.bf16.mxu0 %v1201
    %1253 = vmatpush1.bf16.msra.mxu0 %v1200
    %1254 = vmatprep.subr.bf16.mxu0 %v1205
    %1255 = vmatpush1.bf16.msra.mxu0 %v1204
    %1256 = vmatprep.subr.bf16.mxu0 0
    %1257 = vmatpush1.bf16.msra.mxu0 0
    %1258 = vmatprep.subr.bf16.mxu0 0
    %1259 = vmatpush1.bf16.msra.mxu0 0
    %1260 = vmatprep.subr.bf16.mxu0 0
    %1261 = vmatpush1.bf16.msra.mxu0 0
    %1262 = vmatprep.subr.bf16.mxu0 0
    %1263 = vmatpush1.bf16.msra.mxu0 0
    %1264 = vmatprep.subr.bf16.mxu0 0
    %1265 = vmatpush1.bf16.msra.mxu0 0
    %1266 = vmatprep.subr.bf16.mxu0 0
    %1267 = vmatpush1.bf16.msra.mxu0 0
    %1268 = vmatprep.subr.bf16.mxu0 0
    %1269 = vmatpush1.bf16.msra.mxu0 0
    %1270 = vmatprep.subr.bf16.mxu0 0
    %1271 = vmatpush1.bf16.msra.mxu0 0
    %1272 = vmatprep.mubr.bf16.mxu0 0
    %1273 = vmatmul.mubr.bf16.gmra.mrb[0].mxu0 %v87
    %v1274 = vpop.f32.mrb[0].mxu0
    %v1275 = vadd.f32 0.0, %v1274
    %v1276 = vpop.f32.mrb[0].mxu0
    %v1277 = vadd.f32 0.0, %v1276
    %v1278 = vpop.f32.mrb[0].mxu0
    %v1279 = vadd.f32 0.0, %v1278
    %v1280 = vpop.f32.mrb[0].mxu0
    %v1281 = vadd.f32 0.0, %v1280
    %1282 = vdwg.mxu0
    %1283 = vmatprep.subr.bf16.mxu0 %v1179
    %1284 = vmatpush1.bf16.msra.mxu0 %v1178
    %1285 = vmatprep.subr.bf16.mxu0 %v1183
    %1286 = vmatpush1.bf16.msra.mxu0 %v1182
    %1287 = vmatprep.subr.bf16.mxu0 %v1187
    %1288 = vmatpush1.bf16.msra.mxu0 %v1186
    %1289 = vmatprep.subr.bf16.mxu0 %v1191
    %1290 = vmatpush1.bf16.msra.mxu0 %v1190
    %1291 = vmatprep.subr.bf16.mxu0 %v1195
    %1292 = vmatpush1.bf16.msra.mxu0 %v1194
    %1293 = vmatprep.subr.bf16.mxu0 %v1199
    %1294 = vmatpush1.bf16.msra.mxu0 %v1198
    %1295 = vmatprep.subr.bf16.mxu0 %v1203
    %1296 = vmatpush1.bf16.msra.mxu0 %v1202
    %1297 = vmatprep.subr.bf16.mxu0 %v1207
    %1298 = vmatpush1.bf16.msra.mxu0 %v1206
    %1299 = vmatprep.subr.bf16.mxu0 0
    %1300 = vmatpush1.bf16.msra.mxu0 0
    %1301 = vmatprep.subr.bf16.mxu0 0
    %1302 = vmatpush1.bf16.msra.mxu0 0
    %1303 = vmatprep.subr.bf16.mxu0 0
    %1304 = vmatpush1.bf16.msra.mxu0 0
    %1305 = vmatprep.subr.bf16.mxu0 0
    %1306 = vmatpush1.bf16.msra.mxu0 0
    %1307 = vmatprep.subr.bf16.mxu0 0
    %1308 = vmatpush1.bf16.msra.mxu0 0
    %1309 = vmatprep.subr.bf16.mxu0 0
    %1310 = vmatpush1.bf16.msra.mxu0 0
    %1311 = vmatprep.subr.bf16.mxu0 0
    %1312 = vmatpush1.bf16.msra.mxu0 0
    %1313 = vmatprep.subr.bf16.mxu0 0
    %1314 = vmatpush1.bf16.msra.mxu0 0
    %1315 = vmatprep.mubr.bf16.mxu0 0
    %1316 = vmatmul.mubr.bf16.gmra.mrb[0].mxu0 %v87
    %v1317 = vpop.f32.mrb[0].mxu0
    %v1318 = vadd.f32 0.0, %v1317
    %v1319 = vpop.f32.mrb[0].mxu0
    %v1320 = vadd.f32 0.0, %v1319
    %v1321 = vpop.f32.mrb[0].mxu0
    %v1322 = vadd.f32 0.0, %v1321
    %v1323 = vpop.f32.mrb[0].mxu0
    %v1324 = vadd.f32 0.0, %v1323
    %1325 = vdwg.mxu0
    %v1326 = vxor.u32 %v1275, 2147483648
    %v1327 = vxor.u32 %v1277, 2147483648
    %v1328 = vxor.u32 %v1279, 2147483648
    %v1329 = vxor.u32 %v1281, 2147483648
    %v1330 = vmul.f32 %v1326, 1.442695
    %v1331 = vpow.pop %v1330
    %v1332 = vmul.f32 %v1327, 1.442695
    %v1333 = vpow.pop %v1332
    %v1334 = vmul.f32 %v1328, 1.442695
    %v1335 = vpow.pop %v1334
    %v1336 = vmul.f32 %v1329, 1.442695
    %v1337 = vpow.pop %v1336
    %v1338 = vadd.f32 %v1331, 1.0
    %v1339 = vadd.f32 %v1333, 1.0
    %v1340 = vadd.f32 %v1335, 1.0
    %v1341 = vadd.f32 %v1337, 1.0
    %v1342 = vrcp.pop %v1338
    %v1343 = vmul.f32 1.0, %v1342
    %v1344 = vrcp.pop %v1339
    %v1345 = vmul.f32 1.0, %v1344
    %v1346 = vrcp.pop %v1340
    %v1347 = vmul.f32 1.0, %v1346
    %v1348 = vrcp.pop %v1341
    %v1349 = vmul.f32 1.0, %v1348
    %v1350 = vmul.f32 %v1275, %v1343
    %v1351 = vmul.f32 %v1277, %v1345
    %v1352 = vmul.f32 %v1279, %v1347
    %v1353 = vmul.f32 %v1281, %v1349
    %v1354 = vmul.f32 %v1350, %v1318
    %v1355 = vmul.f32 %v1351, %v1320
    %v1356 = vmul.f32 %v1352, %v1322
    %v1357 = vmul.f32 %v1353, %v1324
    %v1358 = vpack.c.bf16 %v1356, %v1354
    %v1359 = vpack.c.bf16 %v1357, %v1355
    %s1360 = scalar_lea.vmem [#allocation5], 256
    %v1361 = vld [vmem:[%s1360] sm:$0xf]
    %v1362 = vld [vmem:[%s1360 + $0x4] sm:$0xf]
    %v1363 = vld [vmem:[%s1360 + $0x8] sm:$0xf]
    %v1364 = vld [vmem:[%s1360 + $0xc] sm:$0xf]
    %v1365 = vld [vmem:[%s1360 + $0x10] sm:$0xf]
    %v1366 = vld [vmem:[%s1360 + $0x14] sm:$0xf]
    %v1367 = vld [vmem:[%s1360 + $0x18] sm:$0xf]
    %v1368 = vld [vmem:[%s1360 + $0x1c] sm:$0xf]
    %v1369 = vld [vmem:[%s1360 + $0x20] sm:$0xf]
    %v1370 = vld [vmem:[%s1360 + $0x24] sm:$0xf]
    %v1371 = vld [vmem:[%s1360 + $0x28] sm:$0xf]
    %v1372 = vld [vmem:[%s1360 + $0x2c] sm:$0xf]
    %v1373 = vld [vmem:[%s1360 + $0x30] sm:$0xf]
    %v1374 = vld [vmem:[%s1360 + $0x34] sm:$0xf]
    %v1375 = vld [vmem:[%s1360 + $0x38] sm:$0xf]
    %v1376 = vld [vmem:[%s1360 + $0x3c] sm:$0xf]
    %v1377 = vld [vmem:[%s1360 + $0x40] sm:$0xf]
    %v1378 = vld [vmem:[%s1360 + $0x44] sm:$0xf]
    %v1379 = vld [vmem:[%s1360 + $0x48] sm:$0xf]
    %v1380 = vld [vmem:[%s1360 + $0x4c] sm:$0xf]
    %v1381 = vld [vmem:[%s1360 + $0x50] sm:$0xf]
    %v1382 = vld [vmem:[%s1360 + $0x54] sm:$0xf]
    %v1383 = vld [vmem:[%s1360 + $0x58] sm:$0xf]
    %v1384 = vld [vmem:[%s1360 + $0x5c] sm:$0xf]
    %v1385 = vld [vmem:[%s1360 + $0x60] sm:$0xf]
    %v1386 = vld [vmem:[%s1360 + $0x64] sm:$0xf]
    %v1387 = vld [vmem:[%s1360 + $0x68] sm:$0xf]
    %v1388 = vld [vmem:[%s1360 + $0x6c] sm:$0xf]
    %v1389 = vld [vmem:[%s1360 + $0x70] sm:$0xf]
    %v1390 = vld [vmem:[%s1360 + $0x74] sm:$0xf]
    %v1391 = vld [vmem:[%s1360 + $0x78] sm:$0xf]
    %v1392 = vld [vmem:[%s1360 + $0x7c] sm:$0xf]
    %v1425 = vunpack.c.l.b16 %v1361
    %v1426 = vunpack.c.l.b16 %v1362
    %v1427 = vunpack.c.l.b16 %v1363
    %v1428 = vunpack.c.l.b16 %v1364
    %v1429 = vunpack.c.l.b16 %v1365
    %v1430 = vunpack.c.l.b16 %v1366
    %v1431 = vunpack.c.l.b16 %v1367
    %v1432 = vunpack.c.l.b16 %v1368
    %v1433 = vunpack.c.l.b16 %v1369
    %v1434 = vunpack.c.l.b16 %v1370
    %v1435 = vunpack.c.l.b16 %v1371
    %v1436 = vunpack.c.l.b16 %v1372
    %v1437 = vunpack.c.l.b16 %v1373
    %v1438 = vunpack.c.l.b16 %v1374
    %v1439 = vunpack.c.l.b16 %v1375
    %v1440 = vunpack.c.l.b16 %v1376
    %v1441 = vunpack.c.l.b16 %v1377
    %v1442 = vunpack.c.l.b16 %v1378
    %v1443 = vunpack.c.l.b16 %v1379
    %v1444 = vunpack.c.l.b16 %v1380
    %v1445 = vunpack.c.l.b16 %v1381
    %v1446 = vunpack.c.l.b16 %v1382
    %v1447 = vunpack.c.l.b16 %v1383
    %v1448 = vunpack.c.l.b16 %v1384
    %v1449 = vunpack.c.l.b16 %v1385
    %v1450 = vunpack.c.l.b16 %v1386
    %v1451 = vunpack.c.l.b16 %v1387
    %v1452 = vunpack.c.l.b16 %v1388
    %v1453 = vunpack.c.l.b16 %v1389
    %v1454 = vunpack.c.l.b16 %v1390
    %v1455 = vunpack.c.l.b16 %v1391
    %v1456 = vunpack.c.l.b16 %v1392
    %v1457 = vpack.c.b16 %v1426, %v1425
    %v1458 = vpack.c.b16 %v1428, %v1427
    %v1459 = vpack.c.b16 %v1430, %v1429
    %v1460 = vpack.c.b16 %v1432, %v1431
    %v1461 = vpack.c.b16 %v1434, %v1433
    %v1462 = vpack.c.b16 %v1436, %v1435
    %v1463 = vpack.c.b16 %v1438, %v1437
    %v1464 = vpack.c.b16 %v1440, %v1439
    %v1465 = vpack.c.b16 %v1442, %v1441
    %v1466 = vpack.c.b16 %v1444, %v1443
    %v1467 = vpack.c.b16 %v1446, %v1445
    %v1468 = vpack.c.b16 %v1448, %v1447
    %v1469 = vpack.c.b16 %v1450, %v1449
    %v1470 = vpack.c.b16 %v1452, %v1451
    %v1471 = vpack.c.b16 %v1454, %v1453
    %v1472 = vpack.c.b16 %v1456, %v1455
    %1489 = vmatprep.subr.bf16.mxu0 0
    %1490 = vmatpush1.bf16.msra.mxu0 %v1457
    %1491 = vmatprep.subr.bf16.mxu0 0
    %1492 = vmatpush1.bf16.msra.mxu0 %v1458
    %1493 = vmatprep.subr.bf16.mxu0 0
    %1494 = vmatpush1.bf16.msra.mxu0 %v1459
    %1495 = vmatprep.subr.bf16.mxu0 0
    %1496 = vmatpush1.bf16.msra.mxu0 %v1460
    %1497 = vmatprep.subr.bf16.mxu0 0
    %1498 = vmatpush1.bf16.msra.mxu0 %v1461
    %1499 = vmatprep.subr.bf16.mxu0 0
    %1500 = vmatpush1.bf16.msra.mxu0 %v1462
    %1501 = vmatprep.subr.bf16.mxu0 0
    %1502 = vmatpush1.bf16.msra.mxu0 %v1463
    %1503 = vmatprep.subr.bf16.mxu0 0
    %1504 = vmatpush1.bf16.msra.mxu0 %v1464
    %1505 = vmatprep.subr.bf16.mxu0 0
    %1506 = vmatpush1.bf16.msra.mxu0 %v1465
    %1507 = vmatprep.subr.bf16.mxu0 0
    %1508 = vmatpush1.bf16.msra.mxu0 %v1466
    %1509 = vmatprep.subr.bf16.mxu0 0
    %1510 = vmatpush1.bf16.msra.mxu0 %v1467
    %1511 = vmatprep.subr.bf16.mxu0 0
    %1512 = vmatpush1.bf16.msra.mxu0 %v1468
    %1513 = vmatprep.subr.bf16.mxu0 0
    %1514 = vmatpush1.bf16.msra.mxu0 %v1469
    %1515 = vmatprep.subr.bf16.mxu0 0
    %1516 = vmatpush1.bf16.msra.mxu0 %v1470
    %1517 = vmatprep.subr.bf16.mxu0 0
    %1518 = vmatpush1.bf16.msra.mxu0 %v1471
    %1519 = vmatprep.subr.bf16.mxu0 0
    %1520 = vmatpush1.bf16.msra.mxu0 %v1472
    %1521 = vmatprep.mubr.bf16.mxu0 %v1359
    %1522 = vmatmul.mubr.bf16.gmra.mrb[0].mxu0 %v1358
    %v1523 = vpop.f32.mrb[0].mxu0
    %v1524 = vadd.f32 0.0, %v1523
    %v1525 = vpop.f32.mrb[0].mxu0
    %v1526 = vpop.f32.mrb[0].mxu0
    %v1527 = vadd.f32 0.0, %v1526
    %v1528 = vpop.f32.mrb[0].mxu0
    %1529 = vdwg.mxu0
    %1530 = vset.pattern.permute.xlu0 2
    %1531 = vperm.xlu0 %1530, %v49
    %v1532 = vpop.permute.xlu0 %1531
    %1534 = vset.pattern.permute.xlu0 2
    %1535 = vperm.xlu0 %1534, %v50
    %v1536 = vpop.permute.xlu0 %1535
    %v1538 = vmul.f32 %v1524, %v1532
    %v1539 = vmul.f32 %v1527, %v1536
    %v1540 = vadd.f32 %v1045, %v1538
    %v1541 = vadd.f32 %v1046, %v1539
    %s1542 = scalar_lea.vmem [#allocation2], 768
    %v1543 = vld [vmem:[%s1542] sm:$0xff]
    %v1544 = vld [vmem:[%s1542 + $0x8] sm:$0xff]
    %v1545 = vld [vmem:[%s1542 + $0x10] sm:$0xff]
    %v1546 = vld [vmem:[%s1542 + $0x18] sm:$0xff]
    %v1547 = vld [vmem:[%s1542 + $0x20] sm:$0xff]
    %v1548 = vld [vmem:[%s1542 + $0x28] sm:$0xff]
    %v1549 = vld [vmem:[%s1542 + $0x30] sm:$0xff]
    %v1550 = vld [vmem:[%s1542 + $0x38] sm:$0xff]
    %v1551 = vld [vmem:[%s1542 + $0x40] sm:$0xff]
    %v1552 = vld [vmem:[%s1542 + $0x48] sm:$0xff]
    %v1553 = vld [vmem:[%s1542 + $0x50] sm:$0xff]
    %v1554 = vld [vmem:[%s1542 + $0x58] sm:$0xff]
    %v1555 = vld [vmem:[%s1542 + $0x60] sm:$0xff]
    %v1556 = vld [vmem:[%s1542 + $0x68] sm:$0xff]
    %v1557 = vld [vmem:[%s1542 + $0x70] sm:$0xff]
    %v1558 = vld [vmem:[%s1542 + $0x78] sm:$0xff]
    %v1559 = vld [vmem:[%s1542 + $0x80] sm:$0xff]
    %v1560 = vld [vmem:[%s1542 + $0x88] sm:$0xff]
    %v1561 = vld [vmem:[%s1542 + $0x90] sm:$0xff]
    %v1562 = vld [vmem:[%s1542 + $0x98] sm:$0xff]
    %v1563 = vld [vmem:[%s1542 + $0xa0] sm:$0xff]
    %v1564 = vld [vmem:[%s1542 + $0xa8] sm:$0xff]
    %v1565 = vld [vmem:[%s1542 + $0xb0] sm:$0xff]
    %v1566 = vld [vmem:[%s1542 + $0xb8] sm:$0xff]
    %v1567 = vld [vmem:[%s1542 + $0xc0] sm:$0xff]
    %v1568 = vld [vmem:[%s1542 + $0xc8] sm:$0xff]
    %v1569 = vld [vmem:[%s1542 + $0xd0] sm:$0xff]
    %v1570 = vld [vmem:[%s1542 + $0xd8] sm:$0xff]
    %v1571 = vld [vmem:[%s1542 + $0xe0] sm:$0xff]
    %v1572 = vld [vmem:[%s1542 + $0xe8] sm:$0xff]
    %v1573 = vld [vmem:[%s1542 + $0xf0] sm:$0xff]
    %v1574 = vld [vmem:[%s1542 + $0xf8] sm:$0xff]
    %v1607 = vunpack.c.l.b16 %v1543
    %v1608 = vunpack.c.h.b16 %v1543
    %v1609 = vunpack.c.l.b16 %v1544
    %v1610 = vunpack.c.h.b16 %v1544
    %v1611 = vunpack.c.l.b16 %v1545
    %v1612 = vunpack.c.h.b16 %v1545
    %v1613 = vunpack.c.l.b16 %v1546
    %v1614 = vunpack.c.h.b16 %v1546
    %v1615 = vunpack.c.l.b16 %v1547
    %v1616 = vunpack.c.h.b16 %v1547
    %v1617 = vunpack.c.l.b16 %v1548
    %v1618 = vunpack.c.h.b16 %v1548
    %v1619 = vunpack.c.l.b16 %v1549
    %v1620 = vunpack.c.h.b16 %v1549
    %v1621 = vunpack.c.l.b16 %v1550
    %v1622 = vunpack.c.h.b16 %v1550
    %v1623 = vunpack.c.l.b16 %v1551
    %v1624 = vunpack.c.h.b16 %v1551
    %v1625 = vunpack.c.l.b16 %v1552
    %v1626 = vunpack.c.h.b16 %v1552
    %v1627 = vunpack.c.l.b16 %v1553
    %v1628 = vunpack.c.h.b16 %v1553
    %v1629 = vunpack.c.l.b16 %v1554
    %v1630 = vunpack.c.h.b16 %v1554
    %v1631 = vunpack.c.l.b16 %v1555
    %v1632 = vunpack.c.h.b16 %v1555
    %v1633 = vunpack.c.l.b16 %v1556
    %v1634 = vunpack.c.h.b16 %v1556
    %v1635 = vunpack.c.l.b16 %v1557
    %v1636 = vunpack.c.h.b16 %v1557
    %v1637 = vunpack.c.l.b16 %v1558
    %v1638 = vunpack.c.h.b16 %v1558
    %v1639 = vunpack.c.l.b16 %v1559
    %v1640 = vunpack.c.h.b16 %v1559
    %v1641 = vunpack.c.l.b16 %v1560
    %v1642 = vunpack.c.h.b16 %v1560
    %v1643 = vunpack.c.l.b16 %v1561
    %v1644 = vunpack.c.h.b16 %v1561
    %v1645 = vunpack.c.l.b16 %v1562
    %v1646 = vunpack.c.h.b16 %v1562
    %v1647 = vunpack.c.l.b16 %v1563
    %v1648 = vunpack.c.h.b16 %v1563
    %v1649 = vunpack.c.l.b16 %v1564
    %v1650 = vunpack.c.h.b16 %v1564
    %v1651 = vunpack.c.l.b16 %v1565
    %v1652 = vunpack.c.h.b16 %v1565
    %v1653 = vunpack.c.l.b16 %v1566
    %v1654 = vunpack.c.h.b16 %v1566
    %v1655 = vunpack.c.l.b16 %v1567
    %v1656 = vunpack.c.h.b16 %v1567
    %v1657 = vunpack.c.l.b16 %v1568
    %v1658 = vunpack.c.h.b16 %v1568
    %v1659 = vunpack.c.l.b16 %v1569
    %v1660 = vunpack.c.h.b16 %v1569
    %v1661 = vunpack.c.l.b16 %v1570
    %v1662 = vunpack.c.h.b16 %v1570
    %v1663 = vunpack.c.l.b16 %v1571
    %v1664 = vunpack.c.h.b16 %v1571
    %v1665 = vunpack.c.l.b16 %v1572
    %v1666 = vunpack.c.h.b16 %v1572
    %v1667 = vunpack.c.l.b16 %v1573
    %v1668 = vunpack.c.h.b16 %v1573
    %v1669 = vunpack.c.l.b16 %v1574
    %v1670 = vunpack.c.h.b16 %v1574
    %v1671 = vpack.c.b16 %v1611, %v1607
    %v1672 = vpack.c.b16 %v1612, %v1608
    %v1673 = vpack.c.b16 %v1613, %v1609
    %v1674 = vpack.c.b16 %v1614, %v1610
    %v1675 = vpack.c.b16 %v1619, %v1615
    %v1676 = vpack.c.b16 %v1620, %v1616
    %v1677 = vpack.c.b16 %v1621, %v1617
    %v1678 = vpack.c.b16 %v1622, %v1618
    %v1679 = vpack.c.b16 %v1627, %v1623
    %v1680 = vpack.c.b16 %v1628, %v1624
    %v1681 = vpack.c.b16 %v1629, %v1625
    %v1682 = vpack.c.b16 %v1630, %v1626
    %v1683 = vpack.c.b16 %v1635, %v1631
    %v1684 = vpack.c.b16 %v1636, %v1632
    %v1685 = vpack.c.b16 %v1637, %v1633
    %v1686 = vpack.c.b16 %v1638, %v1634
    %v1687 = vpack.c.b16 %v1643, %v1639
    %v1688 = vpack.c.b16 %v1644, %v1640
    %v1689 = vpack.c.b16 %v1645, %v1641
    %v1690 = vpack.c.b16 %v1646, %v1642
    %v1691 = vpack.c.b16 %v1651, %v1647
    %v1692 = vpack.c.b16 %v1652, %v1648
    %v1693 = vpack.c.b16 %v1653, %v1649
    %v1694 = vpack.c.b16 %v1654, %v1650
    %v1695 = vpack.c.b16 %v1659, %v1655
    %v1696 = vpack.c.b16 %v1660, %v1656
    %v1697 = vpack.c.b16 %v1661, %v1657
    %v1698 = vpack.c.b16 %v1662, %v1658
    %v1699 = vpack.c.b16 %v1667, %v1663
    %v1700 = vpack.c.b16 %v1668, %v1664
    %v1701 = vpack.c.b16 %v1669, %v1665
    %v1702 = vpack.c.b16 %v1670, %v1666
    %1735 = vmatprep.subr.bf16.mxu0 %v1672
    %1736 = vmatpush1.bf16.msra.mxu0 %v1671
    %1737 = vmatprep.subr.bf16.mxu0 %v1676
    %1738 = vmatpush1.bf16.msra.mxu0 %v1675
    %1739 = vmatprep.subr.bf16.mxu0 %v1680
    %1740 = vmatpush1.bf16.msra.mxu0 %v1679
    %1741 = vmatprep.subr.bf16.mxu0 %v1684
    %1742 = vmatpush1.bf16.msra.mxu0 %v1683
    %1743 = vmatprep.subr.bf16.mxu0 %v1688
    %1744 = vmatpush1.bf16.msra.mxu0 %v1687
    %1745 = vmatprep.subr.bf16.mxu0 %v1692
    %1746 = vmatpush1.bf16.msra.mxu0 %v1691
    %1747 = vmatprep.subr.bf16.mxu0 %v1696
    %1748 = vmatpush1.bf16.msra.mxu0 %v1695
    %1749 = vmatprep.subr.bf16.mxu0 %v1700
    %1750 = vmatpush1.bf16.msra.mxu0 %v1699
    %1751 = vmatprep.subr.bf16.mxu0 0
    %1752 = vmatpush1.bf16.msra.mxu0 0
    %1753 = vmatprep.subr.bf16.mxu0 0
    %1754 = vmatpush1.bf16.msra.mxu0 0
    %1755 = vmatprep.subr.bf16.mxu0 0
    %1756 = vmatpush1.bf16.msra.mxu0 0
    %1757 = vmatprep.subr.bf16.mxu0 0
    %1758 = vmatpush1.bf16.msra.mxu0 0
    %1759 = vmatprep.subr.bf16.mxu0 0
    %1760 = vmatpush1.bf16.msra.mxu0 0
    %1761 = vmatprep.subr.bf16.mxu0 0
    %1762 = vmatpush1.bf16.msra.mxu0 0
    %1763 = vmatprep.subr.bf16.mxu0 0
    %1764 = vmatpush1.bf16.msra.mxu0 0
    %1765 = vmatprep.subr.bf16.mxu0 0
    %1766 = vmatpush1.bf16.msra.mxu0 0
    %1767 = vmatprep.mubr.bf16.mxu0 0
    %1768 = vmatmul.mubr.bf16.gmra.mrb[0].mxu0 %v87
    %v1769 = vpop.f32.mrb[0].mxu0
    %v1770 = vadd.f32 0.0, %v1769
    %v1771 = vpop.f32.mrb[0].mxu0
    %v1772 = vadd.f32 0.0, %v1771
    %v1773 = vpop.f32.mrb[0].mxu0
    %v1774 = vadd.f32 0.0, %v1773
    %v1775 = vpop.f32.mrb[0].mxu0
    %v1776 = vadd.f32 0.0, %v1775
    %1777 = vdwg.mxu0
    %1778 = vmatprep.subr.bf16.mxu0 %v1674
    %1779 = vmatpush1.bf16.msra.mxu0 %v1673
    %1780 = vmatprep.subr.bf16.mxu0 %v1678
    %1781 = vmatpush1.bf16.msra.mxu0 %v1677
    %1782 = vmatprep.subr.bf16.mxu0 %v1682
    %1783 = vmatpush1.bf16.msra.mxu0 %v1681
    %1784 = vmatprep.subr.bf16.mxu0 %v1686
    %1785 = vmatpush1.bf16.msra.mxu0 %v1685
    %1786 = vmatprep.subr.bf16.mxu0 %v1690
    %1787 = vmatpush1.bf16.msra.mxu0 %v1689
    %1788 = vmatprep.subr.bf16.mxu0 %v1694
    %1789 = vmatpush1.bf16.msra.mxu0 %v1693
    %1790 = vmatprep.subr.bf16.mxu0 %v1698
    %1791 = vmatpush1.bf16.msra.mxu0 %v1697
    %1792 = vmatprep.subr.bf16.mxu0 %v1702
    %1793 = vmatpush1.bf16.msra.mxu0 %v1701
    %1794 = vmatprep.subr.bf16.mxu0 0
    %1795 = vmatpush1.bf16.msra.mxu0 0
    %1796 = vmatprep.subr.bf16.mxu0 0
    %1797 = vmatpush1.bf16.msra.mxu0 0
    %1798 = vmatprep.subr.bf16.mxu0 0
    %1799 = vmatpush1.bf16.msra.mxu0 0
    %1800 = vmatprep.subr.bf16.mxu0 0
    %1801 = vmatpush1.bf16.msra.mxu0 0
    %1802 = vmatprep.subr.bf16.mxu0 0
    %1803 = vmatpush1.bf16.msra.mxu0 0
    %1804 = vmatprep.subr.bf16.mxu0 0
    %1805 = vmatpush1.bf16.msra.mxu0 0
    %1806 = vmatprep.subr.bf16.mxu0 0
    %1807 = vmatpush1.bf16.msra.mxu0 0
    %1808 = vmatprep.subr.bf16.mxu0 0
    %1809 = vmatpush1.bf16.msra.mxu0 0
    %1810 = vmatprep.mubr.bf16.mxu0 0
    %1811 = vmatmul.mubr.bf16.gmra.mrb[0].mxu0 %v87
    %v1812 = vpop.f32.mrb[0].mxu0
    %v1813 = vadd.f32 0.0, %v1812
    %v1814 = vpop.f32.mrb[0].mxu0
    %v1815 = vadd.f32 0.0, %v1814
    %v1816 = vpop.f32.mrb[0].mxu0
    %v1817 = vadd.f32 0.0, %v1816
    %v1818 = vpop.f32.mrb[0].mxu0
    %v1819 = vadd.f32 0.0, %v1818
    %1820 = vdwg.mxu0
    %v1821 = vxor.u32 %v1770, 2147483648
    %v1822 = vxor.u32 %v1772, 2147483648
    %v1823 = vxor.u32 %v1774, 2147483648
    %v1824 = vxor.u32 %v1776, 2147483648
    %v1825 = vmul.f32 %v1821, 1.442695
    %v1826 = vpow.pop %v1825
    %v1827 = vmul.f32 %v1822, 1.442695
    %v1828 = vpow.pop %v1827
    %v1829 = vmul.f32 %v1823, 1.442695
    %v1830 = vpow.pop %v1829
    %v1831 = vmul.f32 %v1824, 1.442695
    %v1832 = vpow.pop %v1831
    %v1833 = vadd.f32 %v1826, 1.0
    %v1834 = vadd.f32 %v1828, 1.0
    %v1835 = vadd.f32 %v1830, 1.0
    %v1836 = vadd.f32 %v1832, 1.0
    %v1837 = vrcp.pop %v1833
    %v1838 = vmul.f32 1.0, %v1837
    %v1839 = vrcp.pop %v1834
    %v1840 = vmul.f32 1.0, %v1839
    %v1841 = vrcp.pop %v1835
    %v1842 = vmul.f32 1.0, %v1841
    %v1843 = vrcp.pop %v1836
    %v1844 = vmul.f32 1.0, %v1843
    %v1845 = vmul.f32 %v1770, %v1838
    %v1846 = vmul.f32 %v1772, %v1840
    %v1847 = vmul.f32 %v1774, %v1842
    %v1848 = vmul.f32 %v1776, %v1844
    %v1849 = vmul.f32 %v1845, %v1813
    %v1850 = vmul.f32 %v1846, %v1815
    %v1851 = vmul.f32 %v1847, %v1817
    %v1852 = vmul.f32 %v1848, %v1819
    %v1853 = vpack.c.bf16 %v1851, %v1849
    %v1854 = vpack.c.bf16 %v1852, %v1850
    %s1855 = scalar_lea.vmem [#allocation5], 384
    %v1856 = vld [vmem:[%s1855] sm:$0xf]
    %v1857 = vld [vmem:[%s1855 + $0x4] sm:$0xf]
    %v1858 = vld [vmem:[%s1855 + $0x8] sm:$0xf]
    %v1859 = vld [vmem:[%s1855 + $0xc] sm:$0xf]
    %v1860 = vld [vmem:[%s1855 + $0x10] sm:$0xf]
    %v1861 = vld [vmem:[%s1855 + $0x14] sm:$0xf]
    %v1862 = vld [vmem:[%s1855 + $0x18] sm:$0xf]
    %v1863 = vld [vmem:[%s1855 + $0x1c] sm:$0xf]
    %v1864 = vld [vmem:[%s1855 + $0x20] sm:$0xf]
    %v1865 = vld [vmem:[%s1855 + $0x24] sm:$0xf]
    %v1866 = vld [vmem:[%s1855 + $0x28] sm:$0xf]
    %v1867 = vld [vmem:[%s1855 + $0x2c] sm:$0xf]
    %v1868 = vld [vmem:[%s1855 + $0x30] sm:$0xf]
    %v1869 = vld [vmem:[%s1855 + $0x34] sm:$0xf]
    %v1870 = vld [vmem:[%s1855 + $0x38] sm:$0xf]
    %v1871 = vld [vmem:[%s1855 + $0x3c] sm:$0xf]
    %v1872 = vld [vmem:[%s1855 + $0x40] sm:$0xf]
    %v1873 = vld [vmem:[%s1855 + $0x44] sm:$0xf]
    %v1874 = vld [vmem:[%s1855 + $0x48] sm:$0xf]
    %v1875 = vld [vmem:[%s1855 + $0x4c] sm:$0xf]
    %v1876 = vld [vmem:[%s1855 + $0x50] sm:$0xf]
    %v1877 = vld [vmem:[%s1855 + $0x54] sm:$0xf]
    %v1878 = vld [vmem:[%s1855 + $0x58] sm:$0xf]
    %v1879 = vld [vmem:[%s1855 + $0x5c] sm:$0xf]
    %v1880 = vld [vmem:[%s1855 + $0x60] sm:$0xf]
    %v1881 = vld [vmem:[%s1855 + $0x64] sm:$0xf]
    %v1882 = vld [vmem:[%s1855 + $0x68] sm:$0xf]
    %v1883 = vld [vmem:[%s1855 + $0x6c] sm:$0xf]
    %v1884 = vld [vmem:[%s1855 + $0x70] sm:$0xf]
    %v1885 = vld [vmem:[%s1855 + $0x74] sm:$0xf]
    %v1886 = vld [vmem:[%s1855 + $0x78] sm:$0xf]
    %v1887 = vld [vmem:[%s1855 + $0x7c] sm:$0xf]
    %v1920 = vunpack.c.l.b16 %v1856
    %v1921 = vunpack.c.l.b16 %v1857
    %v1922 = vunpack.c.l.b16 %v1858
    %v1923 = vunpack.c.l.b16 %v1859
    %v1924 = vunpack.c.l.b16 %v1860
    %v1925 = vunpack.c.l.b16 %v1861
    %v1926 = vunpack.c.l.b16 %v1862
    %v1927 = vunpack.c.l.b16 %v1863
    %v1928 = vunpack.c.l.b16 %v1864
    %v1929 = vunpack.c.l.b16 %v1865
    %v1930 = vunpack.c.l.b16 %v1866
    %v1931 = vunpack.c.l.b16 %v1867
    %v1932 = vunpack.c.l.b16 %v1868
    %v1933 = vunpack.c.l.b16 %v1869
    %v1934 = vunpack.c.l.b16 %v1870
    %v1935 = vunpack.c.l.b16 %v1871
    %v1936 = vunpack.c.l.b16 %v1872
    %v1937 = vunpack.c.l.b16 %v1873
    %v1938 = vunpack.c.l.b16 %v1874
    %v1939 = vunpack.c.l.b16 %v1875
    %v1940 = vunpack.c.l.b16 %v1876
    %v1941 = vunpack.c.l.b16 %v1877
    %v1942 = vunpack.c.l.b16 %v1878
    %v1943 = vunpack.c.l.b16 %v1879
    %v1944 = vunpack.c.l.b16 %v1880
    %v1945 = vunpack.c.l.b16 %v1881
    %v1946 = vunpack.c.l.b16 %v1882
    %v1947 = vunpack.c.l.b16 %v1883
    %v1948 = vunpack.c.l.b16 %v1884
    %v1949 = vunpack.c.l.b16 %v1885
    %v1950 = vunpack.c.l.b16 %v1886
    %v1951 = vunpack.c.l.b16 %v1887
    %v1952 = vpack.c.b16 %v1921, %v1920
    %v1953 = vpack.c.b16 %v1923, %v1922
    %v1954 = vpack.c.b16 %v1925, %v1924
    %v1955 = vpack.c.b16 %v1927, %v1926
    %v1956 = vpack.c.b16 %v1929, %v1928
    %v1957 = vpack.c.b16 %v1931, %v1930
    %v1958 = vpack.c.b16 %v1933, %v1932
    %v1959 = vpack.c.b16 %v1935, %v1934
    %v1960 = vpack.c.b16 %v1937, %v1936
    %v1961 = vpack.c.b16 %v1939, %v1938
    %v1962 = vpack.c.b16 %v1941, %v1940
    %v1963 = vpack.c.b16 %v1943, %v1942
    %v1964 = vpack.c.b16 %v1945, %v1944
    %v1965 = vpack.c.b16 %v1947, %v1946
    %v1966 = vpack.c.b16 %v1949, %v1948
    %v1967 = vpack.c.b16 %v1951, %v1950
    %1984 = vmatprep.subr.bf16.mxu0 0
    %1985 = vmatpush1.bf16.msra.mxu0 %v1952
    %1986 = vmatprep.subr.bf16.mxu0 0
    %1987 = vmatpush1.bf16.msra.mxu0 %v1953
    %1988 = vmatprep.subr.bf16.mxu0 0
    %1989 = vmatpush1.bf16.msra.mxu0 %v1954
    %1990 = vmatprep.subr.bf16.mxu0 0
    %1991 = vmatpush1.bf16.msra.mxu0 %v1955
    %1992 = vmatprep.subr.bf16.mxu0 0
    %1993 = vmatpush1.bf16.msra.mxu0 %v1956
    %1994 = vmatprep.subr.bf16.mxu0 0
    %1995 = vmatpush1.bf16.msra.mxu0 %v1957
    %1996 = vmatprep.subr.bf16.mxu0 0
    %1997 = vmatpush1.bf16.msra.mxu0 %v1958
    %1998 = vmatprep.subr.bf16.mxu0 0
    %1999 = vmatpush1.bf16.msra.mxu0 %v1959
    %2000 = vmatprep.subr.bf16.mxu0 0
    %2001 = vmatpush1.bf16.msra.mxu0 %v1960
    %2002 = vmatprep.subr.bf16.mxu0 0
    %2003 = vmatpush1.bf16.msra.mxu0 %v1961
    %2004 = vmatprep.subr.bf16.mxu0 0
    %2005 = vmatpush1.bf16.msra.mxu0 %v1962
    %2006 = vmatprep.subr.bf16.mxu0 0
    %2007 = vmatpush1.bf16.msra.mxu0 %v1963
    %2008 = vmatprep.subr.bf16.mxu0 0
    %2009 = vmatpush1.bf16.msra.mxu0 %v1964
    %2010 = vmatprep.subr.bf16.mxu0 0
    %2011 = vmatpush1.bf16.msra.mxu0 %v1965
    %2012 = vmatprep.subr.bf16.mxu0 0
    %2013 = vmatpush1.bf16.msra.mxu0 %v1966
    %2014 = vmatprep.subr.bf16.mxu0 0
    %2015 = vmatpush1.bf16.msra.mxu0 %v1967
    %2016 = vmatprep.mubr.bf16.mxu0 %v1854
    %2017 = vmatmul.mubr.bf16.gmra.mrb[0].mxu0 %v1853
    %v2018 = vpop.f32.mrb[0].mxu0
    %v2019 = vadd.f32 0.0, %v2018
    %v2020 = vpop.f32.mrb[0].mxu0
    %v2021 = vpop.f32.mrb[0].mxu0
    %v2022 = vadd.f32 0.0, %v2021
    %v2023 = vpop.f32.mrb[0].mxu0
    %2024 = vdwg.mxu0
    %2025 = vset.pattern.permute.xlu0 3
    %2026 = vperm.xlu0 %2025, %v49
    %v2027 = vpop.permute.xlu0 %2026
    %2029 = vset.pattern.permute.xlu0 3
    %2030 = vperm.xlu0 %2029, %v50
    %v2031 = vpop.permute.xlu0 %2030
    %v2033 = vmul.f32 %v2019, %v2027
    %v2034 = vmul.f32 %v2022, %v2031
    %v2035 = vadd.f32 %v1540, %v2033
    %v2036 = vadd.f32 %v1541, %v2034
    %2037 = vst [vmem:[#allocation7] sm:$0xff] %v2035
    %2038 = vst [vmem:[#allocation7 + $0x8] sm:$0xff] %v2036
    // Predicated region
    $region26: #{tpu_custom_call.1} parent=1 // pred_check
      _
    $region27: #{tpu_custom_call.1} parent=1 // pred_check_branch
      %2040 = sbr.rel (0) target = $region29
    $region28: #{tpu_custom_call.1} parent=1 // pred_region
      %s2042 = ssub.s32 256, 256
      %2043 = vsyncadd [#allocation4], %s2042
      %s2044 = sshll.u32 [#allocation7], 4
      %s2045 = int_to_ptr.vmem [resolvable:$true] %s2044
      %2050 = dma.vmem_to_hbm [thread:$0]  %s2045, 256, %s4, [#allocation4], 128, 128, 8
    $region29: #{tpu_custom_call.1} parent=1 // pred_fallthru
      _
    // Predicated region
    $region30: #{tpu_custom_call.1} parent=1 // pred_check
      _
    $region31: #{tpu_custom_call.1} parent=1 // pred_check_branch
      %2052 = sbr.rel (0) target = $region33
    $region32: #{tpu_custom_call.1} parent=1 // pred_region
      %2053 = dma.done [#allocation4], 256
    $region33: #{tpu_custom_call.1} parent=1 // pred_fallthru
      _
    %2054 = vsyncpa [#allocation3], 1
    %2055 = vsyncpa [#allocation6], 1
    %2056 = vsyncpa [#allocation4], 1

// kernel: tpu_custom_call.1
$region0: #{tpu_custom_call.1}
  #allocation0 [shape = 'u32[]', space=smem, size = 0x4, offset = 0x4, fixed_abs, tag = 'smem constant byte address 0x4 - core index']
  #allocation1 [shape = 'u32[144,128]{1,0:T(1,128)}', space=vmem, size = 0x12000, scoped, tag = 'internal scratch']
  %s0 = inlined_call_operand.vmem [shape: bf16[16,128], index: 0, kind: input, shape index: {}]
  %s1 = inlined_call_operand.vmem [shape: f32[16,4], index: 1, kind: input, shape index: {}]
  %s2 = inlined_call_operand.hbm [shape: bf16[4,128,512], index: 2, kind: input, shape index: {}]
  %s3 = inlined_call_operand.hbm [shape: bf16[4,256,128], index: 3, kind: input, shape index: {}]
  %s4 = inlined_call_operand.hbm [shape: f32[16,128], index: 4, kind: output, shape index: {}]
  %s5 = sld [smem:[#allocation0]]
  $region34: #{tpu_custom_call.1} parent=0
    _
  %s7 = ssub.s32 1, %s5
  %s8 = scalar_select 0, %s7, %s5
  $region1: #{tpu_custom_call.1} parent=0
    #allocation2 [shape = 'u8[524288]{0}', space=vmem, size = 0x80000, scoped, tag = 'input window, operand 2, single buffered']
    #allocation3 [shape = 's32[1]{0}', space=sflag, size = 0x4, scoped, tag = 'scoped memory for tpu_custom_call.1']
    #allocation4 [shape = 's32[1]{0}', space=sflag, size = 0x4, scoped, tag = 'scoped memory for tpu_custom_call.1']
    #allocation5 [shape = 'u8[262144]{0}', space=vmem, size = 0x40000, scoped, tag = 'input window, operand 3, single buffered']
    #allocation6 [shape = 's32[1]{0}', space=sflag, size = 0x4, scoped, tag = 'scoped memory for tpu_custom_call.1']
    #allocation7 [shape = 'u8[8192]{0}', space=vmem, size = 0x2000, scoped, tag = 'output window, operand 0, single buffered']
    %9 = vsyncpa [#allocation3], 0
    %10 = vsyncpa [#allocation6], 0
    %11 = vsyncpa [#allocation4], 0
    // Predicated region
    $region2: #{tpu_custom_call.1} parent=1 // pred_check
      _
    $region3: #{tpu_custom_call.1} parent=1 // pred_check_branch
      %13 = sbr.rel (0) target = $region5
    $region4: #{tpu_custom_call.1} parent=1 // pred_region
      _
    $region5: #{tpu_custom_call.1} parent=1 // pred_fallthru
      _
    // Predicated region
    $region6: #{tpu_custom_call.1} parent=1 // pred_check
      _
    $region7: #{tpu_custom_call.1} parent=1 // pred_check_branch
      %15 = sbr.rel (0) target = $region9
    $region8: #{tpu_custom_call.1} parent=1 // pred_region
      _
    $region9: #{tpu_custom_call.1} parent=1 // pred_fallthru
      _
    // Predicated region
    $region10: #{tpu_custom_call.1} parent=1 // pred_check
      _
    $region11: #{tpu_custom_call.1} parent=1 // pred_check_branch
      %17 = sbr.rel (0) target = $region13
    $region12: #{tpu_custom_call.1} parent=1 // pred_region
      %s19 = ssub.s32 16384, 16384
      %20 = vsyncadd [#allocation3], %s19
      %s21 = sshll.u32 [#allocation2], 4
      %s22 = int_to_ptr.vmem [resolvable:$true] %s21
      %27 = dma.hbm_to_vmem [thread:$0]  %s2, 16384, %s22, [#allocation3], 256, 256, 16
    $region13: #{tpu_custom_call.1} parent=1 // pred_fallthru
      _
    // Predicated region
    $region14: #{tpu_custom_call.1} parent=1 // pred_check
      _
    $region15: #{tpu_custom_call.1} parent=1 // pred_check_branch
      %29 = sbr.rel (0) target = $region17
    $region16: #{tpu_custom_call.1} parent=1 // pred_region
      %s31 = ssub.s32 8192, 8192
      %32 = vsyncadd [#allocation6], %s31
      %s33 = sshll.u32 [#allocation5], 4
      %s34 = int_to_ptr.vmem [resolvable:$true] %s33
      %39 = dma.hbm_to_vmem [thread:$0]  %s3, 8192, %s34, [#allocation6], 64, 64, 4
    $region17: #{tpu_custom_call.1} parent=1 // pred_fallthru
      _
    // Predicated region
    $region18: #{tpu_custom_call.1} parent=1 // pred_check
      _
    $region19: #{tpu_custom_call.1} parent=1 // pred_check_branch
      %41 = sbr.rel (0) target = $region21
    $region20: #{tpu_custom_call.1} parent=1 // pred_region
      %42 = dma.done [#allocation3], 16384
    $region21: #{tpu_custom_call.1} parent=1 // pred_fallthru
      _
    // Predicated region
    $region22: #{tpu_custom_call.1} parent=1 // pred_check
      _
    $region23: #{tpu_custom_call.1} parent=1 // pred_check_branch
      %44 = sbr.rel (0) target = $region25
    $region24: #{tpu_custom_call.1} parent=1 // pred_region
      %45 = dma.done [#allocation6], 8192
    $region25: #{tpu_custom_call.1} parent=1 // pred_fallthru
      _
    %v47 = vld [vmem:[%s0] sm:$0xf]
    %v48 = vld [vmem:[%s0 + $0x4] sm:$0xf]
    %v49 = vld [vmem:[%s1] sm:$0xff]
    %v50 = vld [vmem:[%s1 + $0x8] sm:$0xff]
    %v51 = vld [vmem:[#allocation2] sm:$0xff]
    %v52 = vld [vmem:[#allocation2 + $0x8] sm:$0xff]
    %v53 = vld [vmem:[#allocation2 + $0x10] sm:$0xff]
    %v54 = vld [vmem:[#allocation2 + $0x18] sm:$0xff]
    %v55 = vld [vmem:[#allocation2 + $0x20] sm:$0xff]
    %v56 = vld [vmem:[#allocation2 + $0x28] sm:$0xff]
    %v57 = vld [vmem:[#allocation2 + $0x30] sm:$0xff]
    %v58 = vld [vmem:[#allocation2 + $0x38] sm:$0xff]
    %v59 = vld [vmem:[#allocation2 + $0x40] sm:$0xff]
    %v60 = vld [vmem:[#allocation2 + $0x48] sm:$0xff]
    %v61 = vld [vmem:[#allocation2 + $0x50] sm:$0xff]
    %v62 = vld [vmem:[#allocation2 + $0x58] sm:$0xff]
    %v63 = vld [vmem:[#allocation2 + $0x60] sm:$0xff]
    %v64 = vld [vmem:[#allocation2 + $0x68] sm:$0xff]
    %v65 = vld [vmem:[#allocation2 + $0x70] sm:$0xff]
    %v66 = vld [vmem:[#allocation2 + $0x78] sm:$0xff]
    %v67 = vld [vmem:[#allocation2 + $0x80] sm:$0xff]
    %v68 = vld [vmem:[#allocation2 + $0x88] sm:$0xff]
    %v69 = vld [vmem:[#allocation2 + $0x90] sm:$0xff]
    %v70 = vld [vmem:[#allocation2 + $0x98] sm:$0xff]
    %v71 = vld [vmem:[#allocation2 + $0xa0] sm:$0xff]
    %v72 = vld [vmem:[#allocation2 + $0xa8] sm:$0xff]
    %v73 = vld [vmem:[#allocation2 + $0xb0] sm:$0xff]
    %v74 = vld [vmem:[#allocation2 + $0xb8] sm:$0xff]
    %v75 = vld [vmem:[#allocation2 + $0xc0] sm:$0xff]
    %v76 = vld [vmem:[#allocation2 + $0xc8] sm:$0xff]
    %v77 = vld [vmem:[#allocation2 + $0xd0] sm:$0xff]
    %v78 = vld [vmem:[#allocation2 + $0xd8] sm:$0xff]
    %v79 = vld [vmem:[#allocation2 + $0xe0] sm:$0xff]
    %v80 = vld [vmem:[#allocation2 + $0xe8] sm:$0xff]
    %v81 = vld [vmem:[#allocation2 + $0xf0] sm:$0xff]
    %v82 = vld [vmem:[#allocation2 + $0xf8] sm:$0xff]
    %v85 = vunpack.c.l.b16 %v47
    %v86 = vunpack.c.l.b16 %v48
    %v87 = vpack.c.b16 %v86, %v85
    %v121 = vunpack.c.l.b16 %v51
    %v122 = vunpack.c.h.b16 %v51
    %v123 = vunpack.c.l.b16 %v52
    %v124 = vunpack.c.h.b16 %v52
    %v125 = vunpack.c.l.b16 %v53
    %v126 = vunpack.c.h.b16 %v53
    %v127 = vunpack.c.l.b16 %v54
    %v128 = vunpack.c.h.b16 %v54
    %v129 = vunpack.c.l.b16 %v55
    %v130 = vunpack.c.h.b16 %v55
    %v131 = vunpack.c.l.b16 %v56
    %v132 = vunpack.c.h.b16 %v56
    %v133 = vunpack.c.l.b16 %v57
    %v134 = vunpack.c.h.b16 %v57
    %v135 = vunpack.c.l.b16 %v58
    %v136 = vunpack.c.h.b16 %v58
    %v137 = vunpack.c.l.b16 %v59
    %v138 = vunpack.c.h.b16 %v59
    %v139 = vunpack.c.l.b16 %v60
    %v140 = vunpack.c.h.b16 %v60
    %v141 = vunpack.c.l.b16 %v61
    %v142 = vunpack.c.h.b16 %v61
    %v143 = vunpack.c.l.b16 %v62
    %v144 = vunpack.c.h.b16 %v62
    %v145 = vunpack.c.l.b16 %v63
    %v146 = vunpack.c.h.b16 %v63
    %v147 = vunpack.c.l.b16 %v64
    %v148 = vunpack.c.h.b16 %v64
    %v149 = vunpack.c.l.b16 %v65
    %v150 = vunpack.c.h.b16 %v65
    %v151 = vunpack.c.l.b16 %v66
    %v152 = vunpack.c.h.b16 %v66
    %v153 = vunpack.c.l.b16 %v67
    %v154 = vunpack.c.h.b16 %v67
    %v155 = vunpack.c.l.b16 %v68
    %v156 = vunpack.c.h.b16 %v68
    %v157 = vunpack.c.l.b16 %v69
    %v158 = vunpack.c.h.b16 %v69
    %v159 = vunpack.c.l.b16 %v70
    %v160 = vunpack.c.h.b16 %v70
    %v161 = vunpack.c.l.b16 %v71
    %v162 = vunpack.c.h.b16 %v71
    %v163 = vunpack.c.l.b16 %v72
    %v164 = vunpack.c.h.b16 %v72
    %v165 = vunpack.c.l.b16 %v73
    %v166 = vunpack.c.h.b16 %v73
    %v167 = vunpack.c.l.b16 %v74
    %v168 = vunpack.c.h.b16 %v74
    %v169 = vunpack.c.l.b16 %v75
    %v170 = vunpack.c.h.b16 %v75
    %v171 = vunpack.c.l.b16 %v76
    %v172 = vunpack.c.h.b16 %v76
    %v173 = vunpack.c.l.b16 %v77
    %v174 = vunpack.c.h.b16 %v77
    %v175 = vunpack.c.l.b16 %v78
    %v176 = vunpack.c.h.b16 %v78
    %v177 = vunpack.c.l.b16 %v79
    %v178 = vunpack.c.h.b16 %v79
    %v179 = vunpack.c.l.b16 %v80
    %v180 = vunpack.c.h.b16 %v80
    %v181 = vunpack.c.l.b16 %v81
    %v182 = vunpack.c.h.b16 %v81
    %v183 = vunpack.c.l.b16 %v82
    %v184 = vunpack.c.h.b16 %v82
    %v185 = vpack.c.b16 %v125, %v121
    %v186 = vpack.c.b16 %v126, %v122
    %v187 = vpack.c.b16 %v127, %v123
    %v188 = vpack.c.b16 %v128, %v124
    %v189 = vpack.c.b16 %v133, %v129
    %v190 = vpack.c.b16 %v134, %v130
    %v191 = vpack.c.b16 %v135, %v131
    %v192 = vpack.c.b16 %v136, %v132
    %v193 = vpack.c.b16 %v141, %v137
    %v194 = vpack.c.b16 %v142, %v138
    %v195 = vpack.c.b16 %v143, %v139
    %v196 = vpack.c.b16 %v144, %v140
    %v197 = vpack.c.b16 %v149, %v145
    %v198 = vpack.c.b16 %v150, %v146
    %v199 = vpack.c.b16 %v151, %v147
    %v200 = vpack.c.b16 %v152, %v148
    %v201 = vpack.c.b16 %v157, %v153
    %v202 = vpack.c.b16 %v158, %v154
    %v203 = vpack.c.b16 %v159, %v155
    %v204 = vpack.c.b16 %v160, %v156
    %v205 = vpack.c.b16 %v165, %v161
    %v206 = vpack.c.b16 %v166, %v162
    %v207 = vpack.c.b16 %v167, %v163
    %v208 = vpack.c.b16 %v168, %v164
    %v209 = vpack.c.b16 %v173, %v169
    %v210 = vpack.c.b16 %v174, %v170
    %v211 = vpack.c.b16 %v175, %v171
    %v212 = vpack.c.b16 %v176, %v172
    %v213 = vpack.c.b16 %v181, %v177
    %v214 = vpack.c.b16 %v182, %v178
    %v215 = vpack.c.b16 %v183, %v179
    %v216 = vpack.c.b16 %v184, %v180
    %249 = vmatprep.subr.bf16.mxu0 %v186
    %250 = vmatpush1.bf16.msra.mxu0 %v185
    %251 = vmatprep.subr.bf16.mxu0 %v190
    %252 = vmatpush1.bf16.msra.mxu0 %v189
    %253 = vmatprep.subr.bf16.mxu0 %v194
    %254 = vmatpush1.bf16.msra.mxu0 %v193
    %255 = vmatprep.subr.bf16.mxu0 %v198
    %256 = vmatpush1.bf16.msra.mxu0 %v197
    %257 = vmatprep.subr.bf16.mxu0 %v202
    %258 = vmatpush1.bf16.msra.mxu0 %v201
    %259 = vmatprep.subr.bf16.mxu0 %v206
    %260 = vmatpush1.bf16.msra.mxu0 %v205
    %261 = vmatprep.subr.bf16.mxu0 %v210
    %262 = vmatpush1.bf16.msra.mxu0 %v209
    %263 = vmatprep.subr.bf16.mxu0 %v214
    %264 = vmatpush1.bf16.msra.mxu0 %v213
    %265 = vmatprep.subr.bf16.mxu0 0
    %266 = vmatpush1.bf16.msra.mxu0 0
    %267 = vmatprep.subr.bf16.mxu0 0
    %268 = vmatpush1.bf16.msra.mxu0 0
    %269 = vmatprep.subr.bf16.mxu0 0
    %270 = vmatpush1.bf16.msra.mxu0 0
    %271 = vmatprep.subr.bf16.mxu0 0
    %272 = vmatpush1.bf16.msra.mxu0 0
    %273 = vmatprep.subr.bf16.mxu0 0
    %274 = vmatpush1.bf16.msra.mxu0 0
    %275 = vmatprep.subr.bf16.mxu0 0
    %276 = vmatpush1.bf16.msra.mxu0 0
    %277 = vmatprep.subr.bf16.mxu0 0
    %278 = vmatpush1.bf16.msra.mxu0 0
    %279 = vmatprep.subr.bf16.mxu0 0
    %280 = vmatpush1.bf16.msra.mxu0 0
    %281 = vmatprep.mubr.bf16.mxu0 0
    %282 = vmatmul.mubr.bf16.gmra.mrb[0].mxu0 %v87
    %v283 = vpop.f32.mrb[0].mxu0
    %v284 = vadd.f32 0.0, %v283
    %v285 = vpop.f32.mrb[0].mxu0
    %v286 = vadd.f32 0.0, %v285
    %v287 = vpop.f32.mrb[0].mxu0
    %v288 = vadd.f32 0.0, %v287
    %v289 = vpop.f32.mrb[0].mxu0
    %v290 = vadd.f32 0.0, %v289
    %291 = vdwg.mxu0
    %292 = vmatprep.subr.bf16.mxu0 %v188
    %293 = vmatpush1.bf16.msra.mxu0 %v187
    %294 = vmatprep.subr.bf16.mxu0 %v192
    %295 = vmatpush1.bf16.msra.mxu0 %v191
    %296 = vmatprep.subr.bf16.mxu0 %v196
    %297 = vmatpush1.bf16.msra.mxu0 %v195
    %298 = vmatprep.subr.bf16.mxu0 %v200
    %299 = vmatpush1.bf16.msra.mxu0 %v199
    %300 = vmatprep.subr.bf16.mxu0 %v204
    %301 = vmatpush1.bf16.msra.mxu0 %v203
    %302 = vmatprep.subr.bf16.mxu0 %v208
    %303 = vmatpush1.bf16.msra.mxu0 %v207
    %304 = vmatprep.subr.bf16.mxu0 %v212
    %305 = vmatpush1.bf16.msra.mxu0 %v211
    %306 = vmatprep.subr.bf16.mxu0 %v216
    %307 = vmatpush1.bf16.msra.mxu0 %v215
    %308 = vmatprep.subr.bf16.mxu0 0
    %309 = vmatpush1.bf16.msra.mxu0 0
    %310 = vmatprep.subr.bf16.mxu0 0
    %311 = vmatpush1.bf16.msra.mxu0 0
    %312 = vmatprep.subr.bf16.mxu0 0
    %313 = vmatpush1.bf16.msra.mxu0 0
    %314 = vmatprep.subr.bf16.mxu0 0
    %315 = vmatpush1.bf16.msra.mxu0 0
    %316 = vmatprep.subr.bf16.mxu0 0
    %317 = vmatpush1.bf16.msra.mxu0 0
    %318 = vmatprep.subr.bf16.mxu0 0
    %319 = vmatpush1.bf16.msra.mxu0 0
    %320 = vmatprep.subr.bf16.mxu0 0
    %321 = vmatpush1.bf16.msra.mxu0 0
    %322 = vmatprep.subr.bf16.mxu0 0
    %323 = vmatpush1.bf16.msra.mxu0 0
    %324 = vmatprep.mubr.bf16.mxu0 0
    %325 = vmatmul.mubr.bf16.gmra.mrb[0].mxu0 %v87
    %v326 = vpop.f32.mrb[0].mxu0
    %v327 = vadd.f32 0.0, %v326
    %v328 = vpop.f32.mrb[0].mxu0
    %v329 = vadd.f32 0.0, %v328
    %v330 = vpop.f32.mrb[0].mxu0
    %v331 = vadd.f32 0.0, %v330
    %v332 = vpop.f32.mrb[0].mxu0
    %v333 = vadd.f32 0.0, %v332
    %334 = vdwg.mxu0
    %v335 = vxor.u32 %v284, 2147483648
    %v336 = vxor.u32 %v286, 2147483648
    %v337 = vxor.u32 %v288, 2147483648
    %v338 = vxor.u32 %v290, 2147483648
    %v339 = vmul.f32 %v335, 1.442695
    %v340 = vpow.pop %v339
    %v341 = vmul.f32 %v336, 1.442695
    %v342 = vpow.pop %v341
    %v343 = vmul.f32 %v337, 1.442695
    %v344 = vpow.pop %v343
    %v345 = vmul.f32 %v338, 1.442695
    %v346 = vpow.pop %v345
    %v347 = vadd.f32 %v340, 1.0
    %v348 = vadd.f32 %v342, 1.0
    %v349 = vadd.f32 %v344, 1.0
    %v350 = vadd.f32 %v346, 1.0
    %v351 = vrcp.pop %v347
    %v352 = vmul.f32 1.0, %v351
    %v353 = vrcp.pop %v348
    %v354 = vmul.f32 1.0, %v353
    %v355 = vrcp.pop %v349
    %v356 = vmul.f32 1.0, %v355
    %v357 = vrcp.pop %v350
    %v358 = vmul.f32 1.0, %v357
    %v359 = vmul.f32 %v284, %v352
    %v360 = vmul.f32 %v286, %v354
    %v361 = vmul.f32 %v288, %v356
    %v362 = vmul.f32 %v290, %v358
    %v363 = vmul.f32 %v359, %v327
    %v364 = vmul.f32 %v360, %v329
    %v365 = vmul.f32 %v361, %v331
    %v366 = vmul.f32 %v362, %v333
    %v367 = vpack.c.bf16 %v365, %v363
    %v368 = vpack.c.bf16 %v366, %v364
    %v369 = vld [vmem:[#allocation5] sm:$0xf]
    %v370 = vld [vmem:[#allocation5 + $0x4] sm:$0xf]
    %v371 = vld [vmem:[#allocation5 + $0x8] sm:$0xf]
    %v372 = vld [vmem:[#allocation5 + $0xc] sm:$0xf]
    %v373 = vld [vmem:[#allocation5 + $0x10] sm:$0xf]
    %v374 = vld [vmem:[#allocation5 + $0x14] sm:$0xf]
    %v375 = vld [vmem:[#allocation5 + $0x18] sm:$0xf]
    %v376 = vld [vmem:[#allocation5 + $0x1c] sm:$0xf]
    %v377 = vld [vmem:[#allocation5 + $0x20] sm:$0xf]
    %v378 = vld [vmem:[#allocation5 + $0x24] sm:$0xf]
    %v379 = vld [vmem:[#allocation5 + $0x28] sm:$0xf]
    %v380 = vld [vmem:[#allocation5 + $0x2c] sm:$0xf]
    %v381 = vld [vmem:[#allocation5 + $0x30] sm:$0xf]
    %v382 = vld [vmem:[#allocation5 + $0x34] sm:$0xf]
    %v383 = vld [vmem:[#allocation5 + $0x38] sm:$0xf]
    %v384 = vld [vmem:[#allocation5 + $0x3c] sm:$0xf]
    %v385 = vld [vmem:[#allocation5 + $0x40] sm:$0xf]
    %v386 = vld [vmem:[#allocation5 + $0x44] sm:$0xf]
    %v387 = vld [vmem:[#allocation5 + $0x48] sm:$0xf]
    %v388 = vld [vmem:[#allocation5 + $0x4c] sm:$0xf]
    %v389 = vld [vmem:[#allocation5 + $0x50] sm:$0xf]
    %v390 = vld [vmem:[#allocation5 + $0x54] sm:$0xf]
    %v391 = vld [vmem:[#allocation5 + $0x58] sm:$0xf]
    %v392 = vld [vmem:[#allocation5 + $0x5c] sm:$0xf]
    %v393 = vld [vmem:[#allocation5 + $0x60] sm:$0xf]
    %v394 = vld [vmem:[#allocation5 + $0x64] sm:$0xf]
    %v395 = vld [vmem:[#allocation5 + $0x68] sm:$0xf]
    %v396 = vld [vmem:[#allocation5 + $0x6c] sm:$0xf]
    %v397 = vld [vmem:[#allocation5 + $0x70] sm:$0xf]
    %v398 = vld [vmem:[#allocation5 + $0x74] sm:$0xf]
    %v399 = vld [vmem:[#allocation5 + $0x78] sm:$0xf]
    %v400 = vld [vmem:[#allocation5 + $0x7c] sm:$0xf]
    %v433 = vunpack.c.l.b16 %v369
    %v434 = vunpack.c.l.b16 %v370
    %v435 = vunpack.c.l.b16 %v371
    %v436 = vunpack.c.l.b16 %v372
    %v437 = vunpack.c.l.b16 %v373
    %v438 = vunpack.c.l.b16 %v374
    %v439 = vunpack.c.l.b16 %v375
    %v440 = vunpack.c.l.b16 %v376
    %v441 = vunpack.c.l.b16 %v377
    %v442 = vunpack.c.l.b16 %v378
    %v443 = vunpack.c.l.b16 %v379
    %v444 = vunpack.c.l.b16 %v380
    %v445 = vunpack.c.l.b16 %v381
    %v446 = vunpack.c.l.b16 %v382
    %v447 = vunpack.c.l.b16 %v383
    %v448 = vunpack.c.l.b16 %v384
    %v449 = vunpack.c.l.b16 %v385
    %v450 = vunpack.c.l.b16 %v386
    %v451 = vunpack.c.l.b16 %v387
    %v452 = vunpack.c.l.b16 %v388
    %v453 = vunpack.c.l.b16 %v389
    %v454 = vunpack.c.l.b16 %v390
    %v455 = vunpack.c.l.b16 %v391
    %v456 = vunpack.c.l.b16 %v392
    %v457 = vunpack.c.l.b16 %v393
    %v458 = vunpack.c.l.b16 %v394
    %v459 = vunpack.c.l.b16 %v395
    %v460 = vunpack.c.l.b16 %v396
    %v461 = vunpack.c.l.b16 %v397
    %v462 = vunpack.c.l.b16 %v398
    %v463 = vunpack.c.l.b16 %v399
    %v464 = vunpack.c.l.b16 %v400
    %v465 = vpack.c.b16 %v434, %v433
    %v466 = vpack.c.b16 %v436, %v435
    %v467 = vpack.c.b16 %v438, %v437
    %v468 = vpack.c.b16 %v440, %v439
    %v469 = vpack.c.b16 %v442, %v441
    %v470 = vpack.c.b16 %v444, %v443
    %v471 = vpack.c.b16 %v446, %v445
    %v472 = vpack.c.b16 %v448, %v447
    %v473 = vpack.c.b16 %v450, %v449
    %v474 = vpack.c.b16 %v452, %v451
    %v475 = vpack.c.b16 %v454, %v453
    %v476 = vpack.c.b16 %v456, %v455
    %v477 = vpack.c.b16 %v458, %v457
    %v478 = vpack.c.b16 %v460, %v459
    %v479 = vpack.c.b16 %v462, %v461
    %v480 = vpack.c.b16 %v464, %v463
    %497 = vmatprep.subr.bf16.mxu0 0
    %498 = vmatpush1.bf16.msra.mxu0 %v465
    %499 = vmatprep.subr.bf16.mxu0 0
    %500 = vmatpush1.bf16.msra.mxu0 %v466
    %501 = vmatprep.subr.bf16.mxu0 0
    %502 = vmatpush1.bf16.msra.mxu0 %v467
    %503 = vmatprep.subr.bf16.mxu0 0
    %504 = vmatpush1.bf16.msra.mxu0 %v468
    %505 = vmatprep.subr.bf16.mxu0 0
    %506 = vmatpush1.bf16.msra.mxu0 %v469
    %507 = vmatprep.subr.bf16.mxu0 0
    %508 = vmatpush1.bf16.msra.mxu0 %v470
    %509 = vmatprep.subr.bf16.mxu0 0
    %510 = vmatpush1.bf16.msra.mxu0 %v471
    %511 = vmatprep.subr.bf16.mxu0 0
    %512 = vmatpush1.bf16.msra.mxu0 %v472
    %513 = vmatprep.subr.bf16.mxu0 0
    %514 = vmatpush1.bf16.msra.mxu0 %v473
    %515 = vmatprep.subr.bf16.mxu0 0
    %516 = vmatpush1.bf16.msra.mxu0 %v474
    %517 = vmatprep.subr.bf16.mxu0 0
    %518 = vmatpush1.bf16.msra.mxu0 %v475
    %519 = vmatprep.subr.bf16.mxu0 0
    %520 = vmatpush1.bf16.msra.mxu0 %v476
    %521 = vmatprep.subr.bf16.mxu0 0
    %522 = vmatpush1.bf16.msra.mxu0 %v477
    %523 = vmatprep.subr.bf16.mxu0 0
    %524 = vmatpush1.bf16.msra.mxu0 %v478
    %525 = vmatprep.subr.bf16.mxu0 0
    %526 = vmatpush1.bf16.msra.mxu0 %v479
    %527 = vmatprep.subr.bf16.mxu0 0
    %528 = vmatpush1.bf16.msra.mxu0 %v480
    %529 = vmatprep.mubr.bf16.mxu0 %v368
    %530 = vmatmul.mubr.bf16.gmra.mrb[0].mxu0 %v367
    %v531 = vpop.f32.mrb[0].mxu0
    %v532 = vadd.f32 0.0, %v531
    %v533 = vpop.f32.mrb[0].mxu0
    %v534 = vpop.f32.mrb[0].mxu0
    %v535 = vadd.f32 0.0, %v534
    %v536 = vpop.f32.mrb[0].mxu0
    %537 = vdwg.mxu0
    %539 = vset.pattern.permute.xlu0 0
    %540 = vperm.xlu0 %539, %v49
    %v541 = vpop.permute.xlu0 %540
    %544 = vset.pattern.permute.xlu0 0
    %545 = vperm.xlu0 %544, %v50
    %v546 = vpop.permute.xlu0 %545
    %v548 = vmul.f32 %v532, %v541
    %v549 = vmul.f32 %v535, %v546
    %v550 = vadd.f32 %v548, 0.0
    %v551 = vadd.f32 %v549, 0.0
    %s552 = scalar_lea.vmem [#allocation2], 256
    %v553 = vld [vmem:[%s552] sm:$0xff]
    %v554 = vld [vmem:[%s552 + $0x8] sm:$0xff]
    %v555 = vld [vmem:[%s552 + $0x10] sm:$0xff]
    %v556 = vld [vmem:[%s552 + $0x18] sm:$0xff]
    %v557 = vld [vmem:[%s552 + $0x20] sm:$0xff]
    %v558 = vld [vmem:[%s552 + $0x28] sm:$0xff]
    %v559 = vld [vmem:[%s552 + $0x30] sm:$0xff]
    %v560 = vld [vmem:[%s552 + $0x38] sm:$0xff]
    %v561 = vld [vmem:[%s552 + $0x40] sm:$0xff]
    %v562 = vld [vmem:[%s552 + $0x48] sm:$0xff]
    %v563 = vld [vmem:[%s552 + $0x50] sm:$0xff]
    %v564 = vld [vmem:[%s552 + $0x58] sm:$0xff]
    %v565 = vld [vmem:[%s552 + $0x60] sm:$0xff]
    %v566 = vld [vmem:[%s552 + $0x68] sm:$0xff]
    %v567 = vld [vmem:[%s552 + $0x70] sm:$0xff]
    %v568 = vld [vmem:[%s552 + $0x78] sm:$0xff]
    %v569 = vld [vmem:[%s552 + $0x80] sm:$0xff]
    %v570 = vld [vmem:[%s552 + $0x88] sm:$0xff]
    %v571 = vld [vmem:[%s552 + $0x90] sm:$0xff]
    %v572 = vld [vmem:[%s552 + $0x98] sm:$0xff]
    %v573 = vld [vmem:[%s552 + $0xa0] sm:$0xff]
    %v574 = vld [vmem:[%s552 + $0xa8] sm:$0xff]
    %v575 = vld [vmem:[%s552 + $0xb0] sm:$0xff]
    %v576 = vld [vmem:[%s552 + $0xb8] sm:$0xff]
    %v577 = vld [vmem:[%s552 + $0xc0] sm:$0xff]
    %v578 = vld [vmem:[%s552 + $0xc8] sm:$0xff]
    %v579 = vld [vmem:[%s552 + $0xd0] sm:$0xff]
    %v580 = vld [vmem:[%s552 + $0xd8] sm:$0xff]
    %v581 = vld [vmem:[%s552 + $0xe0] sm:$0xff]
    %v582 = vld [vmem:[%s552 + $0xe8] sm:$0xff]
    %v583 = vld [vmem:[%s552 + $0xf0] sm:$0xff]
    %v584 = vld [vmem:[%s552 + $0xf8] sm:$0xff]
    %v617 = vunpack.c.l.b16 %v553
    %v618 = vunpack.c.h.b16 %v553
    %v619 = vunpack.c.l.b16 %v554
    %v620 = vunpack.c.h.b16 %v554
    %v621 = vunpack.c.l.b16 %v555
    %v622 = vunpack.c.h.b16 %v555
    %v623 = vunpack.c.l.b16 %v556
    %v624 = vunpack.c.h.b16 %v556
    %v625 = vunpack.c.l.b16 %v557
    %v626 = vunpack.c.h.b16 %v557
    %v627 = vunpack.c.l.b16 %v558
    %v628 = vunpack.c.h.b16 %v558
    %v629 = vunpack.c.l.b16 %v559
    %v630 = vunpack.c.h.b16 %v559
    %v631 = vunpack.c.l.b16 %v560
    %v632 = vunpack.c.h.b16 %v560
    %v633 = vunpack.c.l.b16 %v561
    %v634 = vunpack.c.h.b16 %v561
    %v635 = vunpack.c.l.b16 %v562
    %v636 = vunpack.c.h.b16 %v562
    %v637 = vunpack.c.l.b16 %v563
    %v638 = vunpack.c.h.b16 %v563
    %v639 = vunpack.c.l.b16 %v564
    %v640 = vunpack.c.h.b16 %v564
    %v641 = vunpack.c.l.b16 %v565
    %v642 = vunpack.c.h.b16 %v565
    %v643 = vunpack.c.l.b16 %v566
    %v644 = vunpack.c.h.b16 %v566
    %v645 = vunpack.c.l.b16 %v567
    %v646 = vunpack.c.h.b16 %v567
    %v647 = vunpack.c.l.b16 %v568
    %v648 = vunpack.c.h.b16 %v568
    %v649 = vunpack.c.l.b16 %v569
    %v650 = vunpack.c.h.b16 %v569
    %v651 = vunpack.c.l.b16 %v570
    %v652 = vunpack.c.h.b16 %v570
    %v653 = vunpack.c.l.b16 %v571
    %v654 = vunpack.c.h.b16 %v571
    %v655 = vunpack.c.l.b16 %v572
    %v656 = vunpack.c.h.b16 %v572
    %v657 = vunpack.c.l.b16 %v573
    %v658 = vunpack.c.h.b16 %v573
    %v659 = vunpack.c.l.b16 %v574
    %v660 = vunpack.c.h.b16 %v574
    %v661 = vunpack.c.l.b16 %v575
    %v662 = vunpack.c.h.b16 %v575
    %v663 = vunpack.c.l.b16 %v576
    %v664 = vunpack.c.h.b16 %v576
    %v665 = vunpack.c.l.b16 %v577
    %v666 = vunpack.c.h.b16 %v577
    %v667 = vunpack.c.l.b16 %v578
    %v668 = vunpack.c.h.b16 %v578
    %v669 = vunpack.c.l.b16 %v579
    %v670 = vunpack.c.h.b16 %v579
    %v671 = vunpack.c.l.b16 %v580
    %v672 = vunpack.c.h.b16 %v580
    %v673 = vunpack.c.l.b16 %v581
    %v674 = vunpack.c.h.b16 %v581
    %v675 = vunpack.c.l.b16 %v582
    %v676 = vunpack.c.h.b16 %v582
    %v677 = vunpack.c.l.b16 %v583
    %v678 = vunpack.c.h.b16 %v583
    %v679 = vunpack.c.l.b16 %v584
    %v680 = vunpack.c.h.b16 %v584
    %v681 = vpack.c.b16 %v621, %v617
    %v682 = vpack.c.b16 %v622, %v618
    %v683 = vpack.c.b16 %v623, %v619
    %v684 = vpack.c.b16 %v624, %v620
    %v685 = vpack.c.b16 %v629, %v625
    %v686 = vpack.c.b16 %v630, %v626
    %v687 = vpack.c.b16 %v631, %v627
    %v688 = vpack.c.b16 %v632, %v628
    %v689 = vpack.c.b16 %v637, %v633
    %v690 = vpack.c.b16 %v638, %v634
    %v691 = vpack.c.b16 %v639, %v635
    %v692 = vpack.c.b16 %v640, %v636
    %v693 = vpack.c.b16 %v645, %v641
    %v694 = vpack.c.b16 %v646, %v642
    %v695 = vpack.c.b16 %v647, %v643
    %v696 = vpack.c.b16 %v648, %v644
    %v697 = vpack.c.b16 %v653, %v649
    %v698 = vpack.c.b16 %v654, %v650
    %v699 = vpack.c.b16 %v655, %v651
    %v700 = vpack.c.b16 %v656, %v652
    %v701 = vpack.c.b16 %v661, %v657
    %v702 = vpack.c.b16 %v662, %v658
    %v703 = vpack.c.b16 %v663, %v659
    %v704 = vpack.c.b16 %v664, %v660
    %v705 = vpack.c.b16 %v669, %v665
    %v706 = vpack.c.b16 %v670, %v666
    %v707 = vpack.c.b16 %v671, %v667
    %v708 = vpack.c.b16 %v672, %v668
    %v709 = vpack.c.b16 %v677, %v673
    %v710 = vpack.c.b16 %v678, %v674
    %v711 = vpack.c.b16 %v679, %v675
    %v712 = vpack.c.b16 %v680, %v676
    %745 = vmatprep.subr.bf16.mxu0 %v682
    %746 = vmatpush1.bf16.msra.mxu0 %v681
    %747 = vmatprep.subr.bf16.mxu0 %v686
    %748 = vmatpush1.bf16.msra.mxu0 %v685
    %749 = vmatprep.subr.bf16.mxu0 %v690
    %750 = vmatpush1.bf16.msra.mxu0 %v689
    %751 = vmatprep.subr.bf16.mxu0 %v694
    %752 = vmatpush1.bf16.msra.mxu0 %v693
    %753 = vmatprep.subr.bf16.mxu0 %v698
    %754 = vmatpush1.bf16.msra.mxu0 %v697
    %755 = vmatprep.subr.bf16.mxu0 %v702
    %756 = vmatpush1.bf16.msra.mxu0 %v701
    %757 = vmatprep.subr.bf16.mxu0 %v706
    %758 = vmatpush1.bf16.msra.mxu0 %v705
    %759 = vmatprep.subr.bf16.mxu0 %v710
    %760 = vmatpush1.bf16.msra.mxu0 %v709
    %761 = vmatprep.subr.bf16.mxu0 0
    %762 = vmatpush1.bf16.msra.mxu0 0
    %763 = vmatprep.subr.bf16.mxu0 0
    %764 = vmatpush1.bf16.msra.mxu0 0
    %765 = vmatprep.subr.bf16.mxu0 0
    %766 = vmatpush1.bf16.msra.mxu0 0
    %767 = vmatprep.subr.bf16.mxu0 0
    %768 = vmatpush1.bf16.msra.mxu0 0
    %769 = vmatprep.subr.bf16.mxu0 0
    %770 = vmatpush1.bf16.msra.mxu0 0
    %771 = vmatprep.subr.bf16.mxu0 0
    %772 = vmatpush1.bf16.msra.mxu0 0
    %773 = vmatprep.subr.bf16.mxu0 0
    %774 = vmatpush1.bf16.msra.mxu0 0
    %775 = vmatprep.subr.bf16.mxu0 0
    %776 = vmatpush1.bf16.msra.mxu0 0
    %777 = vmatprep.mubr.bf16.mxu0 0
    %778 = vmatmul.mubr.bf16.gmra.mrb[0].mxu0 %v87
    %v779 = vpop.f32.mrb[0].mxu0
    %v780 = vadd.f32 0.0, %v779
    %v781 = vpop.f32.mrb[0].mxu0
    %v782 = vadd.f32 0.0, %v781
    %v783 = vpop.f32.mrb[0].mxu0
    %v784 = vadd.f32 0.0, %v783
    %v785 = vpop.f32.mrb[0].mxu0
    %v786 = vadd.f32 0.0, %v785
    %787 = vdwg.mxu0
    %788 = vmatprep.subr.bf16.mxu0 %v684
    %789 = vmatpush1.bf16.msra.mxu0 %v683
    %790 = vmatprep.subr.bf16.mxu0 %v688
    %791 = vmatpush1.bf16.msra.mxu0 %v687
    %792 = vmatprep.subr.bf16.mxu0 %v692
    %793 = vmatpush1.bf16.msra.mxu0 %v691
    %794 = vmatprep.subr.bf16.mxu0 %v696
    %795 = vmatpush1.bf16.msra.mxu0 %v695
    %796 = vmatprep.subr.bf16.mxu0 %v700
    %797 = vmatpush1.bf16.msra.mxu0 %v699
    %798 = vmatprep.subr.bf16.mxu0 %v704
    %799 = vmatpush1.bf16.msra.mxu0 %v703
    %800 = vmatprep.subr.bf16.mxu0 %v708
    %801 = vmatpush1.bf16.msra.mxu0 %v707
    %802 = vmatprep.subr.bf16.mxu0 %v712
    %803 = vmatpush1.bf16.msra.mxu0 %v711
    %804 = vmatprep.subr.bf16.mxu0 0
    %805 = vmatpush1.bf16.msra.mxu0 0
    %806 = vmatprep.subr.bf16.mxu0 0
    %807 = vmatpush1.bf16.msra.mxu0 0
    %808 = vmatprep.subr.bf16.mxu0 0
    %809 = vmatpush1.bf16.msra.mxu0 0
    %810 = vmatprep.subr.bf16.mxu0 0
    %811 = vmatpush1.bf16.msra.mxu0 0
    %812 = vmatprep.subr.bf16.mxu0 0
    %813 = vmatpush1.bf16.msra.mxu0 0
    %814 = vmatprep.subr.bf16.mxu0 0
    %815 = vmatpush1.bf16.msra.mxu0 0
    %816 = vmatprep.subr.bf16.mxu0 0
    %817 = vmatpush1.bf16.msra.mxu0 0
    %818 = vmatprep.subr.bf16.mxu0 0
    %819 = vmatpush1.bf16.msra.mxu0 0
    %820 = vmatprep.mubr.bf16.mxu0 0
    %821 = vmatmul.mubr.bf16.gmra.mrb[0].mxu0 %v87
    %v822 = vpop.f32.mrb[0].mxu0
    %v823 = vadd.f32 0.0, %v822
    %v824 = vpop.f32.mrb[0].mxu0
    %v825 = vadd.f32 0.0, %v824
    %v826 = vpop.f32.mrb[0].mxu0
    %v827 = vadd.f32 0.0, %v826
    %v828 = vpop.f32.mrb[0].mxu0
    %v829 = vadd.f32 0.0, %v828
    %830 = vdwg.mxu0
    %v831 = vxor.u32 %v780, 2147483648
    %v832 = vxor.u32 %v782, 2147483648
    %v833 = vxor.u32 %v784, 2147483648
    %v834 = vxor.u32 %v786, 2147483648
    %v835 = vmul.f32 %v831, 1.442695
    %v836 = vpow.pop %v835
    %v837 = vmul.f32 %v832, 1.442695
    %v838 = vpow.pop %v837
    %v839 = vmul.f32 %v833, 1.442695
    %v840 = vpow.pop %v839
    %v841 = vmul.f32 %v834, 1.442695
    %v842 = vpow.pop %v841
    %v843 = vadd.f32 %v836, 1.0
    %v844 = vadd.f32 %v838, 1.0
    %v845 = vadd.f32 %v840, 1.0
    %v846 = vadd.f32 %v842, 1.0
    %v847 = vrcp.pop %v843
    %v848 = vmul.f32 1.0, %v847
    %v849 = vrcp.pop %v844
    %v850 = vmul.f32 1.0, %v849
    %v851 = vrcp.pop %v845
    %v852 = vmul.f32 1.0, %v851
    %v853 = vrcp.pop %v846
    %v854 = vmul.f32 1.0, %v853
    %v855 = vmul.f32 %v780, %v848
    %v856 = vmul.f32 %v782, %v850
    %v857 = vmul.f32 %v784, %v852
    %v858 = vmul.f32 %v786, %v854
    %v859 = vmul.f32 %v855, %v823
    %v860 = vmul.f32 %v856, %v825
    %v861 = vmul.f32 %v857, %v827
    %v862 = vmul.f32 %v858, %v829
    %v863 = vpack.c.bf16 %v861, %v859
    %v864 = vpack.c.bf16 %v862, %v860
    %s865 = scalar_lea.vmem [#allocation5], 128
    %v866 = vld [vmem:[%s865] sm:$0xf]
    %v867 = vld [vmem:[%s865 + $0x4] sm:$0xf]
    %v868 = vld [vmem:[%s865 + $0x8] sm:$0xf]
    %v869 = vld [vmem:[%s865 + $0xc] sm:$0xf]
    %v870 = vld [vmem:[%s865 + $0x10] sm:$0xf]
    %v871 = vld [vmem:[%s865 + $0x14] sm:$0xf]
    %v872 = vld [vmem:[%s865 + $0x18] sm:$0xf]
    %v873 = vld [vmem:[%s865 + $0x1c] sm:$0xf]
    %v874 = vld [vmem:[%s865 + $0x20] sm:$0xf]
    %v875 = vld [vmem:[%s865 + $0x24] sm:$0xf]
    %v876 = vld [vmem:[%s865 + $0x28] sm:$0xf]
    %v877 = vld [vmem:[%s865 + $0x2c] sm:$0xf]
    %v878 = vld [vmem:[%s865 + $0x30] sm:$0xf]
    %v879 = vld [vmem:[%s865 + $0x34] sm:$0xf]
    %v880 = vld [vmem:[%s865 + $0x38] sm:$0xf]
    %v881 = vld [vmem:[%s865 + $0x3c] sm:$0xf]
    %v882 = vld [vmem:[%s865 + $0x40] sm:$0xf]
    %v883 = vld [vmem:[%s865 + $0x44] sm:$0xf]
    %v884 = vld [vmem:[%s865 + $0x48] sm:$0xf]
    %v885 = vld [vmem:[%s865 + $0x4c] sm:$0xf]
    %v886 = vld [vmem:[%s865 + $0x50] sm:$0xf]
    %v887 = vld [vmem:[%s865 + $0x54] sm:$0xf]
    %v888 = vld [vmem:[%s865 + $0x58] sm:$0xf]
    %v889 = vld [vmem:[%s865 + $0x5c] sm:$0xf]
    %v890 = vld [vmem:[%s865 + $0x60] sm:$0xf]
    %v891 = vld [vmem:[%s865 + $0x64] sm:$0xf]
    %v892 = vld [vmem:[%s865 + $0x68] sm:$0xf]
    %v893 = vld [vmem:[%s865 + $0x6c] sm:$0xf]
    %v894 = vld [vmem:[%s865 + $0x70] sm:$0xf]
    %v895 = vld [vmem:[%s865 + $0x74] sm:$0xf]
    %v896 = vld [vmem:[%s865 + $0x78] sm:$0xf]
    %v897 = vld [vmem:[%s865 + $0x7c] sm:$0xf]
    %v930 = vunpack.c.l.b16 %v866
    %v931 = vunpack.c.l.b16 %v867
    %v932 = vunpack.c.l.b16 %v868
    %v933 = vunpack.c.l.b16 %v869
    %v934 = vunpack.c.l.b16 %v870
    %v935 = vunpack.c.l.b16 %v871
    %v936 = vunpack.c.l.b16 %v872
    %v937 = vunpack.c.l.b16 %v873
    %v938 = vunpack.c.l.b16 %v874
    %v939 = vunpack.c.l.b16 %v875
    %v940 = vunpack.c.l.b16 %v876
    %v941 = vunpack.c.l.b16 %v877
    %v942 = vunpack.c.l.b16 %v878
    %v943 = vunpack.c.l.b16 %v879
    %v944 = vunpack.c.l.b16 %v880
    %v945 = vunpack.c.l.b16 %v881
    %v946 = vunpack.c.l.b16 %v882
    %v947 = vunpack.c.l.b16 %v883
    %v948 = vunpack.c.l.b16 %v884
    %v949 = vunpack.c.l.b16 %v885
    %v950 = vunpack.c.l.b16 %v886
    %v951 = vunpack.c.l.b16 %v887
    %v952 = vunpack.c.l.b16 %v888
    %v953 = vunpack.c.l.b16 %v889
    %v954 = vunpack.c.l.b16 %v890
    %v955 = vunpack.c.l.b16 %v891
    %v956 = vunpack.c.l.b16 %v892
    %v957 = vunpack.c.l.b16 %v893
    %v958 = vunpack.c.l.b16 %v894
    %v959 = vunpack.c.l.b16 %v895
    %v960 = vunpack.c.l.b16 %v896
    %v961 = vunpack.c.l.b16 %v897
    %v962 = vpack.c.b16 %v931, %v930
    %v963 = vpack.c.b16 %v933, %v932
    %v964 = vpack.c.b16 %v935, %v934
    %v965 = vpack.c.b16 %v937, %v936
    %v966 = vpack.c.b16 %v939, %v938
    %v967 = vpack.c.b16 %v941, %v940
    %v968 = vpack.c.b16 %v943, %v942
    %v969 = vpack.c.b16 %v945, %v944
    %v970 = vpack.c.b16 %v947, %v946
    %v971 = vpack.c.b16 %v949, %v948
    %v972 = vpack.c.b16 %v951, %v950
    %v973 = vpack.c.b16 %v953, %v952
    %v974 = vpack.c.b16 %v955, %v954
    %v975 = vpack.c.b16 %v957, %v956
    %v976 = vpack.c.b16 %v959, %v958
    %v977 = vpack.c.b16 %v961, %v960
    %994 = vmatprep.subr.bf16.mxu0 0
    %995 = vmatpush1.bf16.msra.mxu0 %v962
    %996 = vmatprep.subr.bf16.mxu0 0
    %997 = vmatpush1.bf16.msra.mxu0 %v963
    %998 = vmatprep.subr.bf16.mxu0 0
    %999 = vmatpush1.bf16.msra.mxu0 %v964
    %1000 = vmatprep.subr.bf16.mxu0 0
    %1001 = vmatpush1.bf16.msra.mxu0 %v965
    %1002 = vmatprep.subr.bf16.mxu0 0
    %1003 = vmatpush1.bf16.msra.mxu0 %v966
    %1004 = vmatprep.subr.bf16.mxu0 0
    %1005 = vmatpush1.bf16.msra.mxu0 %v967
    %1006 = vmatprep.subr.bf16.mxu0 0
    %1007 = vmatpush1.bf16.msra.mxu0 %v968
    %1008 = vmatprep.subr.bf16.mxu0 0
    %1009 = vmatpush1.bf16.msra.mxu0 %v969
    %1010 = vmatprep.subr.bf16.mxu0 0
    %1011 = vmatpush1.bf16.msra.mxu0 %v970
    %1012 = vmatprep.subr.bf16.mxu0 0
    %1013 = vmatpush1.bf16.msra.mxu0 %v971
    %1014 = vmatprep.subr.bf16.mxu0 0
    %1015 = vmatpush1.bf16.msra.mxu0 %v972
    %1016 = vmatprep.subr.bf16.mxu0 0
    %1017 = vmatpush1.bf16.msra.mxu0 %v973
    %1018 = vmatprep.subr.bf16.mxu0 0
    %1019 = vmatpush1.bf16.msra.mxu0 %v974
    %1020 = vmatprep.subr.bf16.mxu0 0
    %1021 = vmatpush1.bf16.msra.mxu0 %v975
    %1022 = vmatprep.subr.bf16.mxu0 0
    %1023 = vmatpush1.bf16.msra.mxu0 %v976
    %1024 = vmatprep.subr.bf16.mxu0 0
    %1025 = vmatpush1.bf16.msra.mxu0 %v977
    %1026 = vmatprep.mubr.bf16.mxu0 %v864
    %1027 = vmatmul.mubr.bf16.gmra.mrb[0].mxu0 %v863
    %v1028 = vpop.f32.mrb[0].mxu0
    %v1029 = vadd.f32 0.0, %v1028
    %v1030 = vpop.f32.mrb[0].mxu0
    %v1031 = vpop.f32.mrb[0].mxu0
    %v1032 = vadd.f32 0.0, %v1031
    %v1033 = vpop.f32.mrb[0].mxu0
    %1034 = vdwg.mxu0
    %1035 = vset.pattern.permute.xlu0 1
    %1036 = vperm.xlu0 %1035, %v49
    %v1037 = vpop.permute.xlu0 %1036
    %1039 = vset.pattern.permute.xlu0 1
    %1040 = vperm.xlu0 %1039, %v50
    %v1041 = vpop.permute.xlu0 %1040
    %v1043 = vmul.f32 %v1029, %v1037
    %v1044 = vmul.f32 %v1032, %v1041
    %v1045 = vadd.f32 %v550, %v1043
    %v1046 = vadd.f32 %v551, %v1044
    %s1047 = scalar_lea.vmem [#allocation2], 512
    %v1048 = vld [vmem:[%s1047] sm:$0xff]
    %v1049 = vld [vmem:[%s1047 + $0x8] sm:$0xff]
    %v1050 = vld [vmem:[%s1047 + $0x10] sm:$0xff]
    %v1051 = vld [vmem:[%s1047 + $0x18] sm:$0xff]
    %v1052 = vld [vmem:[%s1047 + $0x20] sm:$0xff]
    %v1053 = vld [vmem:[%s1047 + $0x28] sm:$0xff]
    %v1054 = vld [vmem:[%s1047 + $0x30] sm:$0xff]
    %v1055 = vld [vmem:[%s1047 + $0x38] sm:$0xff]
    %v1056 = vld [vmem:[%s1047 + $0x40] sm:$0xff]
    %v1057 = vld [vmem:[%s1047 + $0x48] sm:$0xff]
    %v1058 = vld [vmem:[%s1047 + $0x50] sm:$0xff]
    %v1059 = vld [vmem:[%s1047 + $0x58] sm:$0xff]
    %v1060 = vld [vmem:[%s1047 + $0x60] sm:$0xff]
    %v1061 = vld [vmem:[%s1047 + $0x68] sm:$0xff]
    %v1062 = vld [vmem:[%s1047 + $0x70] sm:$0xff]
    %v1063 = vld [vmem:[%s1047 + $0x78] sm:$0xff]
    %v1064 = vld [vmem:[%s1047 + $0x80] sm:$0xff]
    %v1065 = vld [vmem:[%s1047 + $0x88] sm:$0xff]
    %v1066 = vld [vmem:[%s1047 + $0x90] sm:$0xff]
    %v1067 = vld [vmem:[%s1047 + $0x98] sm:$0xff]
    %v1068 = vld [vmem:[%s1047 + $0xa0] sm:$0xff]
    %v1069 = vld [vmem:[%s1047 + $0xa8] sm:$0xff]
    %v1070 = vld [vmem:[%s1047 + $0xb0] sm:$0xff]
    %v1071 = vld [vmem:[%s1047 + $0xb8] sm:$0xff]
    %v1072 = vld [vmem:[%s1047 + $0xc0] sm:$0xff]
    %v1073 = vld [vmem:[%s1047 + $0xc8] sm:$0xff]
    %v1074 = vld [vmem:[%s1047 + $0xd0] sm:$0xff]
    %v1075 = vld [vmem:[%s1047 + $0xd8] sm:$0xff]
    %v1076 = vld [vmem:[%s1047 + $0xe0] sm:$0xff]
    %v1077 = vld [vmem:[%s1047 + $0xe8] sm:$0xff]
    %v1078 = vld [vmem:[%s1047 + $0xf0] sm:$0xff]
    %v1079 = vld [vmem:[%s1047 + $0xf8] sm:$0xff]
    %v1112 = vunpack.c.l.b16 %v1048
    %v1113 = vunpack.c.h.b16 %v1048
    %v1114 = vunpack.c.l.b16 %v1049
    %v1115 = vunpack.c.h.b16 %v1049
    %v1116 = vunpack.c.l.b16 %v1050
    %v1117 = vunpack.c.h.b16 %v1050
    %v1118 = vunpack.c.l.b16 %v1051
    %v1119 = vunpack.c.h.b16 %v1051
    %v1120 = vunpack.c.l.b16 %v1052
    %v1121 = vunpack.c.h.b16 %v1052
    %v1122 = vunpack.c.l.b16 %v1053
    %v1123 = vunpack.c.h.b16 %v1053
    %v1124 = vunpack.c.l.b16 %v1054
    %v1125 = vunpack.c.h.b16 %v1054
    %v1126 = vunpack.c.l.b16 %v1055
    %v1127 = vunpack.c.h.b16 %v1055
    %v1128 = vunpack.c.l.b16 %v1056
    %v1129 = vunpack.c.h.b16 %v1056
    %v1130 = vunpack.c.l.b16 %v1057
    %v1131 = vunpack.c.h.b16 %v1057
    %v1132 = vunpack.c.l.b16 %v1058
    %v1133 = vunpack.c.h.b16 %v1058
    %v1134 = vunpack.c.l.b16 %v1059
    %v1135 = vunpack.c.h.b16 %v1059
    %v1136 = vunpack.c.l.b16 %v1060
    %v1137 = vunpack.c.h.b16 %v1060
    %v1138 = vunpack.c.l.b16 %v1061
    %v1139 = vunpack.c.h.b16 %v1061
    %v1140 = vunpack.c.l.b16 %v1062
    %v1141 = vunpack.c.h.b16 %v1062
    %v1142 = vunpack.c.l.b16 %v1063
    %v1143 = vunpack.c.h.b16 %v1063
    %v1144 = vunpack.c.l.b16 %v1064
    %v1145 = vunpack.c.h.b16 %v1064
    %v1146 = vunpack.c.l.b16 %v1065
    %v1147 = vunpack.c.h.b16 %v1065
    %v1148 = vunpack.c.l.b16 %v1066
    %v1149 = vunpack.c.h.b16 %v1066
    %v1150 = vunpack.c.l.b16 %v1067
    %v1151 = vunpack.c.h.b16 %v1067
    %v1152 = vunpack.c.l.b16 %v1068
    %v1153 = vunpack.c.h.b16 %v1068
    %v1154 = vunpack.c.l.b16 %v1069
    %v1155 = vunpack.c.h.b16 %v1069
    %v1156 = vunpack.c.l.b16 %v1070
    %v1157 = vunpack.c.h.b16 %v1070
    %v1158 = vunpack.c.l.b16 %v1071
    %v1159 = vunpack.c.h.b16 %v1071
    %v1160 = vunpack.c.l.b16 %v1072
    %v1161 = vunpack.c.h.b16 %v1072
    %v1162 = vunpack.c.l.b16 %v1073
    %v1163 = vunpack.c.h.b16 %v1073
    %v1164 = vunpack.c.l.b16 %v1074
    %v1165 = vunpack.c.h.b16 %v1074
    %v1166 = vunpack.c.l.b16 %v1075
    %v1167 = vunpack.c.h.b16 %v1075
    %v1168 = vunpack.c.l.b16 %v1076
    %v1169 = vunpack.c.h.b16 %v1076
    %v1170 = vunpack.c.l.b16 %v1077
    %v1171 = vunpack.c.h.b16 %v1077
    %v1172 = vunpack.c.l.b16 %v1078
    %v1173 = vunpack.c.h.b16 %v1078
    %v1174 = vunpack.c.l.b16 %v1079
    %v1175 = vunpack.c.h.b16 %v1079
    %v1176 = vpack.c.b16 %v1116, %v1112
    %v1177 = vpack.c.b16 %v1117, %v1113
    %v1178 = vpack.c.b16 %v1118, %v1114
    %v1179 = vpack.c.b16 %v1119, %v1115
    %v1180 = vpack.c.b16 %v1124, %v1120
    %v1181 = vpack.c.b16 %v1125, %v1121
    %v1182 = vpack.c.b16 %v1126, %v1122
    %v1183 = vpack.c.b16 %v1127, %v1123
    %v1184 = vpack.c.b16 %v1132, %v1128
    %v1185 = vpack.c.b16 %v1133, %v1129
    %v1186 = vpack.c.b16 %v1134, %v1130
    %v1187 = vpack.c.b16 %v1135, %v1131
    %v1188 = vpack.c.b16 %v1140, %v1136
    %v1189 = vpack.c.b16 %v1141, %v1137
    %v1190 = vpack.c.b16 %v1142, %v1138
    %v1191 = vpack.c.b16 %v1143, %v1139
    %v1192 = vpack.c.b16 %v1148, %v1144
    %v1193 = vpack.c.b16 %v1149, %v1145
    %v1194 = vpack.c.b16 %v1150, %v1146
    %v1195 = vpack.c.b16 %v1151, %v1147
    %v1196 = vpack.c.b16 %v1156, %v1152
    %v1197 = vpack.c.b16 %v1157, %v1153
    %v1198 = vpack.c.b16 %v1158, %v1154
    %v1199 = vpack.c.b16 %v1159, %v1155
    %v1200 = vpack.c.b16 %v1164, %v1160
    %v1201 = vpack.c.b16 %v1165, %v1161
    %v1202 = vpack.c.b16 %v1166, %v1162
    %v1203 = vpack.c.b16 %v1167, %v1163
    %v1204 = vpack.c.b16 %v1172, %v1168
    %v1205 = vpack.c.b16 %v1173, %v1169
    %v1206 = vpack.c.b16 %v1174, %v1170
    %v1207 = vpack.c.b16 %v1175, %v1171
    %1240 = vmatprep.subr.bf16.mxu0 %v1177
    %1241 = vmatpush1.bf16.msra.mxu0 %v1176
    %1242 = vmatprep.subr.bf16.mxu0 %v1181
    %1243 = vmatpush1.bf16.msra.mxu0 %v1180
    %1244 = vmatprep.subr.bf16.mxu0 %v1185
    %1245 = vmatpush1.bf16.msra.mxu0 %v1184
    %1246 = vmatprep.subr.bf16.mxu0 %v1189
    %1247 = vmatpush1.bf16.msra.mxu0 %v1188
    %1248 = vmatprep.subr.bf16.mxu0 %v1193
    %1249 = vmatpush1.bf16.msra.mxu0 %v1192
    %1250 = vmatprep.subr.bf16.mxu0 %v1197
    %1251 = vmatpush1.bf16.msra.mxu0 %v1196
    %1252 = vmatprep.subr.bf16.mxu0 %v1201
    %1253 = vmatpush1.bf16.msra.mxu0 %v1200
    %1254 = vmatprep.subr.bf16.mxu0 %v1205
    %1255 = vmatpush1.bf16.msra.mxu0 %v1204
    %1256 = vmatprep.subr.bf16.mxu0 0
    %1257 = vmatpush1.bf16.msra.mxu0 0
    %1258 = vmatprep.subr.bf16.mxu0 0
    %1259 = vmatpush1.bf16.msra.mxu0 0
    %1260 = vmatprep.subr.bf16.mxu0 0
    %1261 = vmatpush1.bf16.msra.mxu0 0
    %1262 = vmatprep.subr.bf16.mxu0 0
    %1263 = vmatpush1.bf16.msra.mxu0 0
    %1264 = vmatprep.subr.bf16.mxu0 0
    %1265 = vmatpush1.bf16.msra.mxu0 0
    %1266 = vmatprep.subr.bf16.mxu0 0
    %1267 = vmatpush1.bf16.msra.mxu0 0
    %1268 = vmatprep.subr.bf16.mxu0 0
    %1269 = vmatpush1.bf16.msra.mxu0 0
    %1270 = vmatprep.subr.bf16.mxu0 0
    %1271 = vmatpush1.bf16.msra.mxu0 0
    %1272 = vmatprep.mubr.bf16.mxu0 0
    %1273 = vmatmul.mubr.bf16.gmra.mrb[0].mxu0 %v87
    %v1274 = vpop.f32.mrb[0].mxu0
    %v1275 = vadd.f32 0.0, %v1274
    %v1276 = vpop.f32.mrb[0].mxu0
    %v1277 = vadd.f32 0.0, %v1276
    %v1278 = vpop.f32.mrb[0].mxu0
    %v1279 = vadd.f32 0.0, %v1278
    %v1280 = vpop.f32.mrb[0].mxu0
    %v1281 = vadd.f32 0.0, %v1280
    %1282 = vdwg.mxu0
    %1283 = vmatprep.subr.bf16.mxu0 %v1179
    %1284 = vmatpush1.bf16.msra.mxu0 %v1178
    %1285 = vmatprep.subr.bf16.mxu0 %v1183
    %1286 = vmatpush1.bf16.msra.mxu0 %v1182
    %1287 = vmatprep.subr.bf16.mxu0 %v1187
    %1288 = vmatpush1.bf16.msra.mxu0 %v1186
    %1289 = vmatprep.subr.bf16.mxu0 %v1191
    %1290 = vmatpush1.bf16.msra.mxu0 %v1190
    %1291 = vmatprep.subr.bf16.mxu0 %v1195
    %1292 = vmatpush1.bf16.msra.mxu0 %v1194
    %1293 = vmatprep.subr.bf16.mxu0 %v1199
    %1294 = vmatpush1.bf16.msra.mxu0 %v1198
    %1295 = vmatprep.subr.bf16.mxu0 %v1203
    %1296 = vmatpush1.bf16.msra.mxu0 %v1202
    %1297 = vmatprep.subr.bf16.mxu0 %v1207
    %1298 = vmatpush1.bf16.msra.mxu0 %v1206
    %1299 = vmatprep.subr.bf16.mxu0 0
    %1300 = vmatpush1.bf16.msra.mxu0 0
    %1301 = vmatprep.subr.bf16.mxu0 0
    %1302 = vmatpush1.bf16.msra.mxu0 0
    %1303 = vmatprep.subr.bf16.mxu0 0
    %1304 = vmatpush1.bf16.msra.mxu0 0
    %1305 = vmatprep.subr.bf16.mxu0 0
    %1306 = vmatpush1.bf16.msra.mxu0 0
    %1307 = vmatprep.subr.bf16.mxu0 0
    %1308 = vmatpush1.bf16.msra.mxu0 0
    %1309 = vmatprep.subr.bf16.mxu0 0
    %1310 = vmatpush1.bf16.msra.mxu0 0
    %1311 = vmatprep.subr.bf16.mxu0 0
    %1312 = vmatpush1.bf16.msra.mxu0 0
    %1313 = vmatprep.subr.bf16.mxu0 0
    %1314 = vmatpush1.bf16.msra.mxu0 0
    %1315 = vmatprep.mubr.bf16.mxu0 0
    %1316 = vmatmul.mubr.bf16.gmra.mrb[0].mxu0 %v87
    %v1317 = vpop.f32.mrb[0].mxu0
    %v1318 = vadd.f32 0.0, %v1317
    %v1319 = vpop.f32.mrb[0].mxu0
    %v1320 = vadd.f32 0.0, %v1319
    %v1321 = vpop.f32.mrb[0].mxu0
    %v1322 = vadd.f32 0.0, %v1321
    %v1323 = vpop.f32.mrb[0].mxu0
    %v1324 = vadd.f32 0.0, %v1323
    %1325 = vdwg.mxu0
    %v1326 = vxor.u32 %v1275, 2147483648
    %v1327 = vxor.u32 %v1277, 2147483648
    %v1328 = vxor.u32 %v1279, 2147483648
    %v1329 = vxor.u32 %v1281, 2147483648
    %v1330 = vmul.f32 %v1326, 1.442695
    %v1331 = vpow.pop %v1330
    %v1332 = vmul.f32 %v1327, 1.442695
    %v1333 = vpow.pop %v1332
    %v1334 = vmul.f32 %v1328, 1.442695
    %v1335 = vpow.pop %v1334
    %v1336 = vmul.f32 %v1329, 1.442695
    %v1337 = vpow.pop %v1336
    %v1338 = vadd.f32 %v1331, 1.0
    %v1339 = vadd.f32 %v1333, 1.0
    %v1340 = vadd.f32 %v1335, 1.0
    %v1341 = vadd.f32 %v1337, 1.0
    %v1342 = vrcp.pop %v1338
    %v1343 = vmul.f32 1.0, %v1342
    %v1344 = vrcp.pop %v1339
    %v1345 = vmul.f32 1.0, %v1344
    %v1346 = vrcp.pop %v1340
    %v1347 = vmul.f32 1.0, %v1346
    %v1348 = vrcp.pop %v1341
    %v1349 = vmul.f32 1.0, %v1348
    %v1350 = vmul.f32 %v1275, %v1343
    %v1351 = vmul.f32 %v1277, %v1345
    %v1352 = vmul.f32 %v1279, %v1347
    %v1353 = vmul.f32 %v1281, %v1349
    %v1354 = vmul.f32 %v1350, %v1318
    %v1355 = vmul.f32 %v1351, %v1320
    %v1356 = vmul.f32 %v1352, %v1322
    %v1357 = vmul.f32 %v1353, %v1324
    %v1358 = vpack.c.bf16 %v1356, %v1354
    %v1359 = vpack.c.bf16 %v1357, %v1355
    %s1360 = scalar_lea.vmem [#allocation5], 256
    %v1361 = vld [vmem:[%s1360] sm:$0xf]
    %v1362 = vld [vmem:[%s1360 + $0x4] sm:$0xf]
    %v1363 = vld [vmem:[%s1360 + $0x8] sm:$0xf]
    %v1364 = vld [vmem:[%s1360 + $0xc] sm:$0xf]
    %v1365 = vld [vmem:[%s1360 + $0x10] sm:$0xf]
    %v1366 = vld [vmem:[%s1360 + $0x14] sm:$0xf]
    %v1367 = vld [vmem:[%s1360 + $0x18] sm:$0xf]
    %v1368 = vld [vmem:[%s1360 + $0x1c] sm:$0xf]
    %v1369 = vld [vmem:[%s1360 + $0x20] sm:$0xf]
    %v1370 = vld [vmem:[%s1360 + $0x24] sm:$0xf]
    %v1371 = vld [vmem:[%s1360 + $0x28] sm:$0xf]
    %v1372 = vld [vmem:[%s1360 + $0x2c] sm:$0xf]
    %v1373 = vld [vmem:[%s1360 + $0x30] sm:$0xf]
    %v1374 = vld [vmem:[%s1360 + $0x34] sm:$0xf]
    %v1375 = vld [vmem:[%s1360 + $0x38] sm:$0xf]
    %v1376 = vld [vmem:[%s1360 + $0x3c] sm:$0xf]
    %v1377 = vld [vmem:[%s1360 + $0x40] sm:$0xf]
    %v1378 = vld [vmem:[%s1360 + $0x44] sm:$0xf]
    %v1379 = vld [vmem:[%s1360 + $0x48] sm:$0xf]
    %v1380 = vld [vmem:[%s1360 + $0x4c] sm:$0xf]
    %v1381 = vld [vmem:[%s1360 + $0x50] sm:$0xf]
    %v1382 = vld [vmem:[%s1360 + $0x54] sm:$0xf]
    %v1383 = vld [vmem:[%s1360 + $0x58] sm:$0xf]
    %v1384 = vld [vmem:[%s1360 + $0x5c] sm:$0xf]
    %v1385 = vld [vmem:[%s1360 + $0x60] sm:$0xf]
    %v1386 = vld [vmem:[%s1360 + $0x64] sm:$0xf]
    %v1387 = vld [vmem:[%s1360 + $0x68] sm:$0xf]
    %v1388 = vld [vmem:[%s1360 + $0x6c] sm:$0xf]
    %v1389 = vld [vmem:[%s1360 + $0x70] sm:$0xf]
    %v1390 = vld [vmem:[%s1360 + $0x74] sm:$0xf]
    %v1391 = vld [vmem:[%s1360 + $0x78] sm:$0xf]
    %v1392 = vld [vmem:[%s1360 + $0x7c] sm:$0xf]
    %v1425 = vunpack.c.l.b16 %v1361
    %v1426 = vunpack.c.l.b16 %v1362
    %v1427 = vunpack.c.l.b16 %v1363
    %v1428 = vunpack.c.l.b16 %v1364
    %v1429 = vunpack.c.l.b16 %v1365
    %v1430 = vunpack.c.l.b16 %v1366
    %v1431 = vunpack.c.l.b16 %v1367
    %v1432 = vunpack.c.l.b16 %v1368
    %v1433 = vunpack.c.l.b16 %v1369
    %v1434 = vunpack.c.l.b16 %v1370
    %v1435 = vunpack.c.l.b16 %v1371
    %v1436 = vunpack.c.l.b16 %v1372
    %v1437 = vunpack.c.l.b16 %v1373
    %v1438 = vunpack.c.l.b16 %v1374
    %v1439 = vunpack.c.l.b16 %v1375
    %v1440 = vunpack.c.l.b16 %v1376
    %v1441 = vunpack.c.l.b16 %v1377
    %v1442 = vunpack.c.l.b16 %v1378
    %v1443 = vunpack.c.l.b16 %v1379
    %v1444 = vunpack.c.l.b16 %v1380
    %v1445 = vunpack.c.l.b16 %v1381
    %v1446 = vunpack.c.l.b16 %v1382
    %v1447 = vunpack.c.l.b16 %v1383
    %v1448 = vunpack.c.l.b16 %v1384
    %v1449 = vunpack.c.l.b16 %v1385
    %v1450 = vunpack.c.l.b16 %v1386
    %v1451 = vunpack.c.l.b16 %v1387
    %v1452 = vunpack.c.l.b16 %v1388
    %v1453 = vunpack.c.l.b16 %v1389
    %v1454 = vunpack.c.l.b16 %v1390
    %v1455 = vunpack.c.l.b16 %v1391
    %v1456 = vunpack.c.l.b16 %v1392
    %v1457 = vpack.c.b16 %v1426, %v1425
    %v1458 = vpack.c.b16 %v1428, %v1427
    %v1459 = vpack.c.b16 %v1430, %v1429
    %v1460 = vpack.c.b16 %v1432, %v1431
    %v1461 = vpack.c.b16 %v1434, %v1433
    %v1462 = vpack.c.b16 %v1436, %v1435
    %v1463 = vpack.c.b16 %v1438, %v1437
    %v1464 = vpack.c.b16 %v1440, %v1439
    %v1465 = vpack.c.b16 %v1442, %v1441
    %v1466 = vpack.c.b16 %v1444, %v1443
    %v1467 = vpack.c.b16 %v1446, %v1445
    %v1468 = vpack.c.b16 %v1448, %v1447
    %v1469 = vpack.c.b16 %v1450, %v1449
    %v1470 = vpack.c.b16 %v1452, %v1451
    %v1471 = vpack.c.b16 %v1454, %v1453
    %v1472 = vpack.c.b16 %v1456, %v1455
    %1489 = vmatprep.subr.bf16.mxu0 0
    %1490 = vmatpush1.bf16.msra.mxu0 %v1457
    %1491 = vmatprep.subr.bf16.mxu0 0
    %1492 = vmatpush1.bf16.msra.mxu0 %v1458
    %1493 = vmatprep.subr.bf16.mxu0 0
    %1494 = vmatpush1.bf16.msra.mxu0 %v1459
    %1495 = vmatprep.subr.bf16.mxu0 0
    %1496 = vmatpush1.bf16.msra.mxu0 %v1460
    %1497 = vmatprep.subr.bf16.mxu0 0
    %1498 = vmatpush1.bf16.msra.mxu0 %v1461
    %1499 = vmatprep.subr.bf16.mxu0 0
    %1500 = vmatpush1.bf16.msra.mxu0 %v1462
    %1501 = vmatprep.subr.bf16.mxu0 0
    %1502 = vmatpush1.bf16.msra.mxu0 %v1463
    %1503 = vmatprep.subr.bf16.mxu0 0
    %1504 = vmatpush1.bf16.msra.mxu0 %v1464
    %1505 = vmatprep.subr.bf16.mxu0 0
    %1506 = vmatpush1.bf16.msra.mxu0 %v1465
    %1507 = vmatprep.subr.bf16.mxu0 0
    %1508 = vmatpush1.bf16.msra.mxu0 %v1466
    %1509 = vmatprep.subr.bf16.mxu0 0
    %1510 = vmatpush1.bf16.msra.mxu0 %v1467
    %1511 = vmatprep.subr.bf16.mxu0 0
    %1512 = vmatpush1.bf16.msra.mxu0 %v1468
    %1513 = vmatprep.subr.bf16.mxu0 0
    %1514 = vmatpush1.bf16.msra.mxu0 %v1469
    %1515 = vmatprep.subr.bf16.mxu0 0
    %1516 = vmatpush1.bf16.msra.mxu0 %v1470
    %1517 = vmatprep.subr.bf16.mxu0 0
    %1518 = vmatpush1.bf16.msra.mxu0 %v1471
    %1519 = vmatprep.subr.bf16.mxu0 0
    %1520 = vmatpush1.bf16.msra.mxu0 %v1472
    %1521 = vmatprep.mubr.bf16.mxu0 %v1359
    %1522 = vmatmul.mubr.bf16.gmra.mrb[0].mxu0 %v1358
    %v1523 = vpop.f32.mrb[0].mxu0
    %v1524 = vadd.f32 0.0, %v1523
    %v1525 = vpop.f32.mrb[0].mxu0
    %v1526 = vpop.f32.mrb[0].mxu0
    %v1527 = vadd.f32 0.0, %v1526
    %v1528 = vpop.f32.mrb[0].mxu0
    %1529 = vdwg.mxu0
    %1530 = vset.pattern.permute.xlu0 2
    %1531 = vperm.xlu0 %1530, %v49
    %v1532 = vpop.permute.xlu0 %1531
    %1534 = vset.pattern.permute.xlu0 2
    %1535 = vperm.xlu0 %1534, %v50
    %v1536 = vpop.permute.xlu0 %1535
    %v1538 = vmul.f32 %v1524, %v1532
    %v1539 = vmul.f32 %v1527, %v1536
    %v1540 = vadd.f32 %v1045, %v1538
    %v1541 = vadd.f32 %v1046, %v1539
    %s1542 = scalar_lea.vmem [#allocation2], 768
    %v1543 = vld [vmem:[%s1542] sm:$0xff]
    %v1544 = vld [vmem:[%s1542 + $0x8] sm:$0xff]
    %v1545 = vld [vmem:[%s1542 + $0x10] sm:$0xff]
    %v1546 = vld [vmem:[%s1542 + $0x18] sm:$0xff]
    %v1547 = vld [vmem:[%s1542 + $0x20] sm:$0xff]
    %v1548 = vld [vmem:[%s1542 + $0x28] sm:$0xff]
    %v1549 = vld [vmem:[%s1542 + $0x30] sm:$0xff]
    %v1550 = vld [vmem:[%s1542 + $0x38] sm:$0xff]
    %v1551 = vld [vmem:[%s1542 + $0x40] sm:$0xff]
    %v1552 = vld [vmem:[%s1542 + $0x48] sm:$0xff]
    %v1553 = vld [vmem:[%s1542 + $0x50] sm:$0xff]
    %v1554 = vld [vmem:[%s1542 + $0x58] sm:$0xff]
    %v1555 = vld [vmem:[%s1542 + $0x60] sm:$0xff]
    %v1556 = vld [vmem:[%s1542 + $0x68] sm:$0xff]
    %v1557 = vld [vmem:[%s1542 + $0x70] sm:$0xff]
    %v1558 = vld [vmem:[%s1542 + $0x78] sm:$0xff]
    %v1559 = vld [vmem:[%s1542 + $0x80] sm:$0xff]
    %v1560 = vld [vmem:[%s1542 + $0x88] sm:$0xff]
    %v1561 = vld [vmem:[%s1542 + $0x90] sm:$0xff]
    %v1562 = vld [vmem:[%s1542 + $0x98] sm:$0xff]
    %v1563 = vld [vmem:[%s1542 + $0xa0] sm:$0xff]
    %v1564 = vld [vmem:[%s1542 + $0xa8] sm:$0xff]
    %v1565 = vld [vmem:[%s1542 + $0xb0] sm:$0xff]
    %v1566 = vld [vmem:[%s1542 + $0xb8] sm:$0xff]
    %v1567 = vld [vmem:[%s1542 + $0xc0] sm:$0xff]
    %v1568 = vld [vmem:[%s1542 + $0xc8] sm:$0xff]
    %v1569 = vld [vmem:[%s1542 + $0xd0] sm:$0xff]
    %v1570 = vld [vmem:[%s1542 + $0xd8] sm:$0xff]
    %v1571 = vld [vmem:[%s1542 + $0xe0] sm:$0xff]
    %v1572 = vld [vmem:[%s1542 + $0xe8] sm:$0xff]
    %v1573 = vld [vmem:[%s1542 + $0xf0] sm:$0xff]
    %v1574 = vld [vmem:[%s1542 + $0xf8] sm:$0xff]
    %v1607 = vunpack.c.l.b16 %v1543
    %v1608 = vunpack.c.h.b16 %v1543
    %v1609 = vunpack.c.l.b16 %v1544
    %v1610 = vunpack.c.h.b16 %v1544
    %v1611 = vunpack.c.l.b16 %v1545
    %v1612 = vunpack.c.h.b16 %v1545
    %v1613 = vunpack.c.l.b16 %v1546
    %v1614 = vunpack.c.h.b16 %v1546
    %v1615 = vunpack.c.l.b16 %v1547
    %v1616 = vunpack.c.h.b16 %v1547
    %v1617 = vunpack.c.l.b16 %v1548
    %v1618 = vunpack.c.h.b16 %v1548
    %v1619 = vunpack.c.l.b16 %v1549
    %v1620 = vunpack.c.h.b16 %v1549
    %v1621 = vunpack.c.l.b16 %v1550
    %v1622 = vunpack.c.h.b16 %v1550
    %v1623 = vunpack.c.l.b16 %v1551
    %v1624 = vunpack.c.h.b16 %v1551
    %v1625 = vunpack.c.l.b16 %v1552
    %v1626 = vunpack.c.h.b16 %v1552
    %v1627 = vunpack.c.l.b16 %v1553
    %v1628 = vunpack.c.h.b16 %v1553
    %v1629 = vunpack.c.l.b16 %v1554
    %v1630 = vunpack.c.h.b16 %v1554
    %v1631 = vunpack.c.l.b16 %v1555
    %v1632 = vunpack.c.h.b16 %v1555
    %v1633 = vunpack.c.l.b16 %v1556
    %v1634 = vunpack.c.h.b16 %v1556
    %v1635 = vunpack.c.l.b16 %v1557
    %v1636 = vunpack.c.h.b16 %v1557
    %v1637 = vunpack.c.l.b16 %v1558
    %v1638 = vunpack.c.h.b16 %v1558
    %v1639 = vunpack.c.l.b16 %v1559
    %v1640 = vunpack.c.h.b16 %v1559
    %v1641 = vunpack.c.l.b16 %v1560
    %v1642 = vunpack.c.h.b16 %v1560
    %v1643 = vunpack.c.l.b16 %v1561
    %v1644 = vunpack.c.h.b16 %v1561
    %v1645 = vunpack.c.l.b16 %v1562
    %v1646 = vunpack.c.h.b16 %v1562
    %v1647 = vunpack.c.l.b16 %v1563
    %v1648 = vunpack.c.h.b16 %v1563
    %v1649 = vunpack.c.l.b16 %v1564
    %v1650 = vunpack.c.h.b16 %v1564
    %v1651 = vunpack.c.l.b16 %v1565
    %v1652 = vunpack.c.h.b16 %v1565
    %v1653 = vunpack.c.l.b16 %v1566
    %v1654 = vunpack.c.h.b16 %v1566
    %v1655 = vunpack.c.l.b16 %v1567
    %v1656 = vunpack.c.h.b16 %v1567
    %v1657 = vunpack.c.l.b16 %v1568
    %v1658 = vunpack.c.h.b16 %v1568
    %v1659 = vunpack.c.l.b16 %v1569
    %v1660 = vunpack.c.h.b16 %v1569
    %v1661 = vunpack.c.l.b16 %v1570
    %v1662 = vunpack.c.h.b16 %v1570
    %v1663 = vunpack.c.l.b16 %v1571
    %v1664 = vunpack.c.h.b16 %v1571
    %v1665 = vunpack.c.l.b16 %v1572
    %v1666 = vunpack.c.h.b16 %v1572
    %v1667 = vunpack.c.l.b16 %v1573
    %v1668 = vunpack.c.h.b16 %v1573
    %v1669 = vunpack.c.l.b16 %v1574
    %v1670 = vunpack.c.h.b16 %v1574
    %v1671 = vpack.c.b16 %v1611, %v1607
    %v1672 = vpack.c.b16 %v1612, %v1608
    %v1673 = vpack.c.b16 %v1613, %v1609
    %v1674 = vpack.c.b16 %v1614, %v1610
    %v1675 = vpack.c.b16 %v1619, %v1615
    %v1676 = vpack.c.b16 %v1620, %v1616
    %v1677 = vpack.c.b16 %v1621, %v1617
    %v1678 = vpack.c.b16 %v1622, %v1618
    %v1679 = vpack.c.b16 %v1627, %v1623
    %v1680 = vpack.c.b16 %v1628, %v1624
    %v1681 = vpack.c.b16 %v1629, %v1625
    %v1682 = vpack.c.b16 %v1630, %v1626
    %v1683 = vpack.c.b16 %v1635, %v1631
    %v1684 = vpack.c.b16 %v1636, %v1632
    %v1685 = vpack.c.b16 %v1637, %v1633
    %v1686 = vpack.c.b16 %v1638, %v1634
    %v1687 = vpack.c.b16 %v1643, %v1639
    %v1688 = vpack.c.b16 %v1644, %v1640
    %v1689 = vpack.c.b16 %v1645, %v1641
    %v1690 = vpack.c.b16 %v1646, %v1642
    %v1691 = vpack.c.b16 %v1651, %v1647
    %v1692 = vpack.c.b16 %v1652, %v1648
    %v1693 = vpack.c.b16 %v1653, %v1649
    %v1694 = vpack.c.b16 %v1654, %v1650
    %v1695 = vpack.c.b16 %v1659, %v1655
    %v1696 = vpack.c.b16 %v1660, %v1656
    %v1697 = vpack.c.b16 %v1661, %v1657
    %v1698 = vpack.c.b16 %v1662, %v1658
    %v1699 = vpack.c.b16 %v1667, %v1663
    %v1700 = vpack.c.b16 %v1668, %v1664
    %v1701 = vpack.c.b16 %v1669, %v1665
    %v1702 = vpack.c.b16 %v1670, %v1666
    %1735 = vmatprep.subr.bf16.mxu0 %v1672
    %1736 = vmatpush1.bf16.msra.mxu0 %v1671
    %1737 = vmatprep.subr.bf16.mxu0 %v1676
    %1738 = vmatpush1.bf16.msra.mxu0 %v1675
    %1739 = vmatprep.subr.bf16.mxu0 %v1680
    %1740 = vmatpush1.bf16.msra.mxu0 %v1679
    %1741 = vmatprep.subr.bf16.mxu0 %v1684
    %1742 = vmatpush1.bf16.msra.mxu0 %v1683
    %1743 = vmatprep.subr.bf16.mxu0 %v1688
    %1744 = vmatpush1.bf16.msra.mxu0 %v1687
    %1745 = vmatprep.subr.bf16.mxu0 %v1692
    %1746 = vmatpush1.bf16.msra.mxu0 %v1691
    %1747 = vmatprep.subr.bf16.mxu0 %v1696
    %1748 = vmatpush1.bf16.msra.mxu0 %v1695
    %1749 = vmatprep.subr.bf16.mxu0 %v1700
    %1750 = vmatpush1.bf16.msra.mxu0 %v1699
    %1751 = vmatprep.subr.bf16.mxu0 0
    %1752 = vmatpush1.bf16.msra.mxu0 0
    %1753 = vmatprep.subr.bf16.mxu0 0
    %1754 = vmatpush1.bf16.msra.mxu0 0
    %1755 = vmatprep.subr.bf16.mxu0 0
    %1756 = vmatpush1.bf16.msra.mxu0 0
    %1757 = vmatprep.subr.bf16.mxu0 0
    %1758 = vmatpush1.bf16.msra.mxu0 0
    %1759 = vmatprep.subr.bf16.mxu0 0
    %1760 = vmatpush1.bf16.msra.mxu0 0
    %1761 = vmatprep.subr.bf16.mxu0 0
    %1762 = vmatpush1.bf16.msra.mxu0 0
    %1763 = vmatprep.subr.bf16.mxu0 0
    %1764 = vmatpush1.bf16.msra.mxu0 0
    %1765 = vmatprep.subr.bf16.mxu0 0
    %1766 = vmatpush1.bf16.msra.mxu0 0
    %1767 = vmatprep.mubr.bf16.mxu0 0
    %1768 = vmatmul.mubr.bf16.gmra.mrb[0].mxu0 %v87
    %v1769 = vpop.f32.mrb[0].mxu0
    %v1770 = vadd.f32 0.0, %v1769
    %v1771 = vpop.f32.mrb[0].mxu0
    %v1772 = vadd.f32 0.0, %v1771
    %v1773 = vpop.f32.mrb[0].mxu0
    %v1774 = vadd.f32 0.0, %v1773
    %v1775 = vpop.f32.mrb[0].mxu0
    %v1776 = vadd.f32 0.0, %v1775
    %1777 = vdwg.mxu0
    %1778 = vmatprep.subr.bf16.mxu0 %v1674
    %1779 = vmatpush1.bf16.msra.mxu0 %v1673
    %1780 = vmatprep.subr.bf16.mxu0 %v1678
    %1781 = vmatpush1.bf16.msra.mxu0 %v1677
    %1782 = vmatprep.subr.bf16.mxu0 %v1682
    %1783 = vmatpush1.bf16.msra.mxu0 %v1681
    %1784 = vmatprep.subr.bf16.mxu0 %v1686
    %1785 = vmatpush1.bf16.msra.mxu0 %v1685
    %1786 = vmatprep.subr.bf16.mxu0 %v1690
    %1787 = vmatpush1.bf16.msra.mxu0 %v1689
    %1788 = vmatprep.subr.bf16.mxu0 %v1694
    %1789 = vmatpush1.bf16.msra.mxu0 %v1693
    %1790 = vmatprep.subr.bf16.mxu0 %v1698
    %1791 = vmatpush1.bf16.msra.mxu0 %v1697
    %1792 = vmatprep.subr.bf16.mxu0 %v1702
    %1793 = vmatpush1.bf16.msra.mxu0 %v1701
    %1794 = vmatprep.subr.bf16.mxu0 0
    %1795 = vmatpush1.bf16.msra.mxu0 0
    %1796 = vmatprep.subr.bf16.mxu0 0
    %1797 = vmatpush1.bf16.msra.mxu0 0
    %1798 = vmatprep.subr.bf16.mxu0 0
    %1799 = vmatpush1.bf16.msra.mxu0 0
    %1800 = vmatprep.subr.bf16.mxu0 0
    %1801 = vmatpush1.bf16.msra.mxu0 0
    %1802 = vmatprep.subr.bf16.mxu0 0
    %1803 = vmatpush1.bf16.msra.mxu0 0
    %1804 = vmatprep.subr.bf16.mxu0 0
    %1805 = vmatpush1.bf16.msra.mxu0 0
    %1806 = vmatprep.subr.bf16.mxu0 0
    %1807 = vmatpush1.bf16.msra.mxu0 0
    %1808 = vmatprep.subr.bf16.mxu0 0
    %1809 = vmatpush1.bf16.msra.mxu0 0
    %1810 = vmatprep.mubr.bf16.mxu0 0
    %1811 = vmatmul.mubr.bf16.gmra.mrb[0].mxu0 %v87
    %v1812 = vpop.f32.mrb[0].mxu0
    %v1813 = vadd.f32 0.0, %v1812
    %v1814 = vpop.f32.mrb[0].mxu0
    %v1815 = vadd.f32 0.0, %v1814
    %v1816 = vpop.f32.mrb[0].mxu0
    %v1817 = vadd.f32 0.0, %v1816
    %v1818 = vpop.f32.mrb[0].mxu0
    %v1819 = vadd.f32 0.0, %v1818
    %1820 = vdwg.mxu0
    %v1821 = vxor.u32 %v1770, 2147483648
    %v1822 = vxor.u32 %v1772, 2147483648
    %v1823 = vxor.u32 %v1774, 2147483648
    %v1824 = vxor.u32 %v1776, 2147483648
    %v1825 = vmul.f32 %v1821, 1.442695
    %v1826 = vpow.pop %v1825
    %v1827 = vmul.f32 %v1822, 1.442695
    %v1828 = vpow.pop %v1827
    %v1829 = vmul.f32 %v1823, 1.442695
    %v1830 = vpow.pop %v1829
    %v1831 = vmul.f32 %v1824, 1.442695
    %v1832 = vpow.pop %v1831
    %v1833 = vadd.f32 %v1826, 1.0
    %v1834 = vadd.f32 %v1828, 1.0
    %v1835 = vadd.f32 %v1830, 1.0
    %v1836 = vadd.f32 %v1832, 1.0
    %v1837 = vrcp.pop %v1833
    %v1838 = vmul.f32 1.0, %v1837
    %v1839 = vrcp.pop %v1834
    %v1840 = vmul.f32 1.0, %v1839
    %v1841 = vrcp.pop %v1835
    %v1842 = vmul.f32 1.0, %v1841
    %v1843 = vrcp.pop %v1836
    %v1844 = vmul.f32 1.0, %v1843
    %v1845 = vmul.f32 %v1770, %v1838
    %v1846 = vmul.f32 %v1772, %v1840
    %v1847 = vmul.f32 %v1774, %v1842
    %v1848 = vmul.f32 %v1776, %v1844
    %v1849 = vmul.f32 %v1845, %v1813
    %v1850 = vmul.f32 %v1846, %v1815
    %v1851 = vmul.f32 %v1847, %v1817
    %v1852 = vmul.f32 %v1848, %v1819
    %v1853 = vpack.c.bf16 %v1851, %v1849
    %v1854 = vpack.c.bf16 %v1852, %v1850
    %s1855 = scalar_lea.vmem [#allocation5], 384
    %v1856 = vld [vmem:[%s1855] sm:$0xf]
    %v1857 = vld [vmem:[%s1855 + $0x4] sm:$0xf]
    %v1858 = vld [vmem:[%s1855 + $0x8] sm:$0xf]
    %v1859 = vld [vmem:[%s1855 + $0xc] sm:$0xf]
    %v1860 = vld [vmem:[%s1855 + $0x10] sm:$0xf]
    %v1861 = vld [vmem:[%s1855 + $0x14] sm:$0xf]
    %v1862 = vld [vmem:[%s1855 + $0x18] sm:$0xf]
    %v1863 = vld [vmem:[%s1855 + $0x1c] sm:$0xf]
    %v1864 = vld [vmem:[%s1855 + $0x20] sm:$0xf]
    %v1865 = vld [vmem:[%s1855 + $0x24] sm:$0xf]
    %v1866 = vld [vmem:[%s1855 + $0x28] sm:$0xf]
    %v1867 = vld [vmem:[%s1855 + $0x2c] sm:$0xf]
    %v1868 = vld [vmem:[%s1855 + $0x30] sm:$0xf]
    %v1869 = vld [vmem:[%s1855 + $0x34] sm:$0xf]
    %v1870 = vld [vmem:[%s1855 + $0x38] sm:$0xf]
    %v1871 = vld [vmem:[%s1855 + $0x3c] sm:$0xf]
    %v1872 = vld [vmem:[%s1855 + $0x40] sm:$0xf]
    %v1873 = vld [vmem:[%s1855 + $0x44] sm:$0xf]
    %v1874 = vld [vmem:[%s1855 + $0x48] sm:$0xf]
    %v1875 = vld [vmem:[%s1855 + $0x4c] sm:$0xf]
    %v1876 = vld [vmem:[%s1855 + $0x50] sm:$0xf]
    %v1877 = vld [vmem:[%s1855 + $0x54] sm:$0xf]
    %v1878 = vld [vmem:[%s1855 + $0x58] sm:$0xf]
    %v1879 = vld [vmem:[%s1855 + $0x5c] sm:$0xf]
    %v1880 = vld [vmem:[%s1855 + $0x60] sm:$0xf]
    %v1881 = vld [vmem:[%s1855 + $0x64] sm:$0xf]
    %v1882 = vld [vmem:[%s1855 + $0x68] sm:$0xf]
    %v1883 = vld [vmem:[%s1855 + $0x6c] sm:$0xf]
    %v1884 = vld [vmem:[%s1855 + $0x70] sm:$0xf]
    %v1885 = vld [vmem:[%s1855 + $0x74] sm:$0xf]
    %v1886 = vld [vmem:[%s1855 + $0x78] sm:$0xf]
    %v1887 = vld [vmem:[%s1855 + $0x7c] sm:$0xf]
    %v1920 = vunpack.c.l.b16 %v1856
    %v1921 = vunpack.c.l.b16 %v1857
    %v1922 = vunpack.c.l.b16 %v1858
    %v1923 = vunpack.c.l.b16 %v1859
    %v1924 = vunpack.c.l.b16 %v1860
    %v1925 = vunpack.c.l.b16 %v1861
    %v1926 = vunpack.c.l.b16 %v1862
    %v1927 = vunpack.c.l.b16 %v1863
    %v1928 = vunpack.c.l.b16 %v1864
    %v1929 = vunpack.c.l.b16 %v1865
    %v1930 = vunpack.c.l.b16 %v1866
    %v1931 = vunpack.c.l.b16 %v1867
    %v1932 = vunpack.c.l.b16 %v1868
    %v1933 = vunpack.c.l.b16 %v1869
    %v1934 = vunpack.c.l.b16 %v1870
    %v1935 = vunpack.c.l.b16 %v1871
    %v1936 = vunpack.c.l.b16 %v1872
    %v1937 = vunpack.c.l.b16 %v1873
    %v1938 = vunpack.c.l.b16 %v1874
    %v1939 = vunpack.c.l.b16 %v1875
    %v1940 = vunpack.c.l.b16 %v1876
    %v1941 = vunpack.c.l.b16 %v1877
    %v1942 = vunpack.c.l.b16 %v1878
    %v1943 = vunpack.c.l.b16 %v1879
    %v1944 = vunpack.c.l.b16 %v1880
    %v1945 = vunpack.c.l.b16 %v1881
    %v1946 = vunpack.c.l.b16 %v1882
    %v1947 = vunpack.c.l.b16 %v1883
    %v1948 = vunpack.c.l.b16 %v1884
    %v1949 = vunpack.c.l.b16 %v1885
    %v1950 = vunpack.c.l.b16 %v1886
    %v1951 = vunpack.c.l.b16 %v1887
    %v1952 = vpack.c.b16 %v1921, %v1920
    %v1953 = vpack.c.b16 %v1923, %v1922
    %v1954 = vpack.c.b16 %v1925, %v1924
    %v1955 = vpack.c.b16 %v1927, %v1926
    %v1956 = vpack.c.b16 %v1929, %v1928
    %v1957 = vpack.c.b16 %v1931, %v1930
    %v1958 = vpack.c.b16 %v1933, %v1932
    %v1959 = vpack.c.b16 %v1935, %v1934
    %v1960 = vpack.c.b16 %v1937, %v1936
    %v1961 = vpack.c.b16 %v1939, %v1938
    %v1962 = vpack.c.b16 %v1941, %v1940
    %v1963 = vpack.c.b16 %v1943, %v1942
    %v1964 = vpack.c.b16 %v1945, %v1944
    %v1965 = vpack.c.b16 %v1947, %v1946
    %v1966 = vpack.c.b16 %v1949, %v1948
    %v1967 = vpack.c.b16 %v1951, %v1950
    %1984 = vmatprep.subr.bf16.mxu0 0
    %1985 = vmatpush1.bf16.msra.mxu0 %v1952
    %1986 = vmatprep.subr.bf16.mxu0 0
    %1987 = vmatpush1.bf16.msra.mxu0 %v1953
    %1988 = vmatprep.subr.bf16.mxu0 0
    %1989 = vmatpush1.bf16.msra.mxu0 %v1954
    %1990 = vmatprep.subr.bf16.mxu0 0
    %1991 = vmatpush1.bf16.msra.mxu0 %v1955
    %1992 = vmatprep.subr.bf16.mxu0 0
    %1993 = vmatpush1.bf16.msra.mxu0 %v1956
    %1994 = vmatprep.subr.bf16.mxu0 0
    %1995 = vmatpush1.bf16.msra.mxu0 %v1957
    %1996 = vmatprep.subr.bf16.mxu0 0
    %1997 = vmatpush1.bf16.msra.mxu0 %v1958
    %1998 = vmatprep.subr.bf16.mxu0 0
    %1999 = vmatpush1.bf16.msra.mxu0 %v1959
    %2000 = vmatprep.subr.bf16.mxu0 0
    %2001 = vmatpush1.bf16.msra.mxu0 %v1960
    %2002 = vmatprep.subr.bf16.mxu0 0
    %2003 = vmatpush1.bf16.msra.mxu0 %v1961
    %2004 = vmatprep.subr.bf16.mxu0 0
    %2005 = vmatpush1.bf16.msra.mxu0 %v1962
    %2006 = vmatprep.subr.bf16.mxu0 0
    %2007 = vmatpush1.bf16.msra.mxu0 %v1963
    %2008 = vmatprep.subr.bf16.mxu0 0
    %2009 = vmatpush1.bf16.msra.mxu0 %v1964
    %2010 = vmatprep.subr.bf16.mxu0 0
    %2011 = vmatpush1.bf16.msra.mxu0 %v1965
    %2012 = vmatprep.subr.bf16.mxu0 0
    %2013 = vmatpush1.bf16.msra.mxu0 %v1966
    %2014 = vmatprep.subr.bf16.mxu0 0
    %2015 = vmatpush1.bf16.msra.mxu0 %v1967
    %2016 = vmatprep.mubr.bf16.mxu0 %v1854
    %2017 = vmatmul.mubr.bf16.gmra.mrb[0].mxu0 %v1853
    %v2018 = vpop.f32.mrb[0].mxu0
    %v2019 = vadd.f32 0.0, %v2018
    %v2020 = vpop.f32.mrb[0].mxu0
    %v2021 = vpop.f32.mrb[0].mxu0
    %v2022 = vadd.f32 0.0, %v2021
    %v2023 = vpop.f32.mrb[0].mxu0
    %2024 = vdwg.mxu0
    %2025 = vset.pattern.permute.xlu0 3
    %2026 = vperm.xlu0 %2025, %v49
    %v2027 = vpop.permute.xlu0 %2026
    %2029 = vset.pattern.permute.xlu0 3
    %2030 = vperm.xlu0 %2029, %v50
    %v2031 = vpop.permute.xlu0 %2030
    %v2033 = vmul.f32 %v2019, %v2027
    %v2034 = vmul.f32 %v2022, %v2031
    %v2035 = vadd.f32 %v1540, %v2033
    %v2036 = vadd.f32 %v1541, %v2034
    %2037 = vst [vmem:[#allocation7] sm:$0xff] %v2035
    %2038 = vst [vmem:[#allocation7 + $0x8] sm:$0xff] %v2036
    // Predicated region
    $region26: #{tpu_custom_call.1} parent=1 // pred_check
      _
    $region27: #{tpu_custom_call.1} parent=1 // pred_check_branch
      %2040 = sbr.rel (0) target = $region29
    $region28: #{tpu_custom_call.1} parent=1 // pred_region
      %s2042 = ssub.s32 256, 256
      %2043 = vsyncadd [#allocation4], %s2042
      %s2044 = sshll.u32 [#allocation7], 4
      %s2045 = int_to_ptr.vmem [resolvable:$true] %s2044
      %2050 = dma.vmem_to_hbm [thread:$0]  %s2045, 256, %s4, [#allocation4], 128, 128, 8
    $region29: #{tpu_custom_call.1} parent=1 // pred_fallthru
      _
    // Predicated region
    $region30: #{tpu_custom_call.1} parent=1 // pred_check
      _
    $region31: #{tpu_custom_call.1} parent=1 // pred_check_branch
      %2052 = sbr.rel (0) target = $region33
    $region32: #{tpu_custom_call.1} parent=1 // pred_region
      %2053 = dma.done [#allocation4], 256
    $region33: #{tpu_custom_call.1} parent=1 // pred_fallthru
      _
    %2054 = vsyncpa [#allocation3], 1
    %2055 = vsyncpa [#allocation6], 1
    %2056 = vsyncpa [#allocation4], 1

</llo_original>
